<compile_context>
chip_gen: v7x
topology: tpu7x:2x2x1
jax: 0.10.0
libtpu: 0.0.40
codegen_flags: <defaults>
</compile_context>

<pallas_src>
import jax
import jax.numpy as jnp
from jax import lax
from jax.experimental import pallas as pl
from jax.experimental.pallas import tpu as pltpu

LANE = 128
BN_EPS = 1e-5
BF16 = jnp.bfloat16
VMEM = pltpu.MemorySpace.VMEM


# ------------------------------ small helpers ------------------------------

def _ceil_to(n, m):
    return ((n + m - 1) // m) * m


def _pad2(x, rows, cols):
    return jnp.pad(x, ((0, rows - x.shape[0]), (0, cols - x.shape[1])))


def _oh_cols(idx, depth, padded_cols):
    # one-hot with *real* depth, zero-padded to a lane-dense column count
    oh = jax.nn.one_hot(idx, depth, dtype=jnp.float32)
    return jnp.pad(oh, ((0, 0), (0, padded_cols - depth)))


def _vmem_limit_bytes(est):
    return int(min(max(int(est), 32 << 20), 64 << 20))


# --------------------------- in-kernel helpers ---------------------------

def _mm(a, b):
    # MXU matmul: bf16 operands, f32 accumulation.
    return jnp.dot(a.astype(BF16), b.astype(BF16),
                   preferred_element_type=jnp.float32)


def _bn_masked(x, mask, inv_n, gamma, beta, relu):
    # BatchNorm1d (batch statistics) over the *real* rows only; f32 on the VPU.
    mean = jnp.sum(x * mask, axis=0, keepdims=True) * inv_n
    d = (x - mean) * mask
    var = jnp.sum(d * d, axis=0, keepdims=True) * inv_n
    y = (x - mean) * lax.rsqrt(var + BN_EPS) * gamma + beta
    return jnp.maximum(y, 0.0) if relu else y


# ------------------------- fused layer-stack kernel -------------------------

def _fused_layers_kernel(ax_ref, fx_ref, eattr_ref, goh_ref, soh_ref, adjf_ref,
                         inc_f2a_ref, inc_a2f_ref, arow_ref, frow_ref,
                         wa_ref, wf_ref, encb_ref,
                         we_ref, w1_ref, w2_ref, wsq_ref, v2_ref, v1_ref,
                         atom_o, frag_o, atom_s, frag_s):
    l = pl.program_id(0)
    HP = atom_s.shape[1]
    H2P = v2_ref.shape[1]

    # --- encoders run once, into the VMEM-resident carry --------------------
    @pl.when(l == 0)
    def _():
        encb = encb_ref[...]
        atom_s[...] = _mm(ax_ref[...], wa_ref[...]) + encb[0:1, :]
        frag_s[...] = _mm(fx_ref[...], wf_ref[...]) + encb[1:2, :]

    atom = atom_s[...]
    frag = frag_s[...]

    arow = arow_ref[...]
    frow = frow_ref[...]
    a_inv_cnt = arow[:, 0:1]          # 1/deg for frag->atom scatter-mean
    a_mask = arow[:, 1:2]             # 1 for real atom rows
    inv_na = arow[0:1, 2:3]           # 1/num_atoms (f32, host-provided)
    f_inv_cnt = frow[:, 0:1]
    f_mask = frow[:, 1:2]
    inv_nf = frow[0:1, 2:3]

    v1 = v1_ref[...]                  # [16, HP]  stacked biases / BN vectors
    v2 = v2_ref[...]                  # [8, H2P]
    w1 = w1_ref[...]                  # [2*HP, H2P]  atom_nn1 | frag_nn1
    w2 = w2_ref[...]                  # [2*H2P, HP]  atom_nn2 | frag_nn2
    wsq = wsq_ref[...]                # [2*HP, HP]   frag2atom | atom2frag

    # --- atom branch: folded bond_enc∘edge_lin, then GINEConv ---------------
    e = _mm(eattr_ref[...], we_ref[...]) + v1[0:1, :]            # [E, HP]
    x_src = _mm(goh_ref[...], atom)                              # gather x_j
    msg = jnp.maximum(x_src + e, 0.0)                            # relu(x_j + e)
    aggr = _mm(soh_ref[...], msg)                                # scatter-sum
    h = atom + aggr                                              # (1+eps0)*x, eps0=0
    h = _mm(h, w1[:HP, :]) + v2[0:1, :]
    h = _bn_masked(h, a_mask, inv_na, v2[1:2, :], v2[2:3, :], relu=True)
    h = _mm(h, w2[:H2P, :]) + v1[1:2, :]
    atom_new = _bn_masked(h, a_mask, inv_na, v1[2:3, :], v1[3:4, :], relu=True)

    # --- fragment branch: GINConv over fragments_edge_index -----------------
    fh = frag + _mm(adjf_ref[...], frag)                         # eps0 = 0
    fh = _mm(fh, w1[HP:, :]) + v2[3:4, :]
    fh = _bn_masked(fh, f_mask, inv_nf, v2[4:5, :], v2[5:6, :], relu=True)
    fh = _mm(fh, w2[H2P:, :]) + v1[4:5, :]
    frag_new = _bn_masked(fh, f_mask, inv_nf, v1[5:6, :], v1[6:7, :], relu=True)

    # --- frag -> atom InterMessage (Linear commuted ahead of the mean) ------
    t = _mm(frag_new, wsq[:HP, :])                               # [F, HP]
    m = _mm(inc_f2a_ref[...], t) * a_inv_cnt                     # scatter-mean
    atom_new = atom_new + jnp.maximum(m + v1[7:8, :], 0.0)

    # --- atom -> frag InterMessage (uses updated atom features) -------------
    m = _mm(inc_a2f_ref[...], atom_new) * f_inv_cnt              # [F, HP]
    frag_new = frag_new + jnp.maximum(_mm(m, wsq[HP:, :]) + v1[8:9, :], 0.0)

    atom_s[...] = atom_new
    frag_s[...] = frag_new

    @pl.when(l == pl.num_programs(0) - 1)
    def _():
        atom_o[...] = atom_s[...].astype(atom_o.dtype)
        frag_o[...] = frag_s[...].astype(frag_o.dtype)


def run_layers(g, p):
    Np, DAP = g["ax"].shape
    Fp, DFP = g["fx"].shape
    Ep, DEP = g["eattr"].shape
    L, _, HP = p["v1_s"].shape
    H2P = p["v2_s"].shape[2]

    def c2(shape):     # constant across the layer grid -> DMA'd once, resident
        return pl.BlockSpec(shape, lambda l: (0, 0))

    def s3(shape):     # per-layer stacked weight block
        return pl.BlockSpec((None,) + shape, lambda l: (l, 0, 0))

    in_specs = [
        c2((Np, DAP)), c2((Fp, DFP)), c2((Ep, DEP)),
        c2((Ep, Np)), c2((Np, Ep)), c2((Fp, Fp)),
        c2((Np, Fp)), c2((Fp, Np)), c2((Np, 8)), c2((Fp, 8)),
        c2((DAP, HP)), c2((DFP, HP)), c2((8, HP)),
        s3((DEP, HP)), s3((2 * HP, H2P)), s3((2 * H2P, HP)),
        s3((2 * HP, HP)), s3((8, H2P)), s3((16, HP)),
    ]
    out_specs = (pl.BlockSpec((Np, HP), lambda l: (0, 0)),
                 pl.BlockSpec((Fp, HP), lambda l: (0, 0)))
    out_shape = (jax.ShapeDtypeStruct((Np, HP), BF16),
                 jax.ShapeDtypeStruct((Fp, HP), BF16))
    scratch = [pltpu.VMEM((Np, HP), jnp.float32),
               pltpu.VMEM((Fp, HP), jnp.float32)]

    args = (g["ax"], g["fx"], g["eattr"], g["goh"], g["soh"], g["adjf"],
            g["inc_f2a"], g["inc_a2f"], g["arow"], g["frow"],
            p["wa"], p["wf"], p["enc_b"],
            p["we_s"], p["w1_s"], p["w2_s"], p["wsq_s"], p["v2_s"], p["v1_s"])

    const_bytes = sum(int(a.nbytes) for a in args[:13])
    layer_bytes = sum(int(a.nbytes) // L for a in args[13:])
    out_bytes = (Np + Fp) * HP * 2
    scratch_bytes = (Np + Fp) * HP * 4
    est = 2 * (const_bytes + layer_bytes + out_bytes) + scratch_bytes + (4 << 20)

    return pl.pallas_call(
        _fused_layers_kernel,
        out_shape=out_shape,
        grid_spec=pltpu.PrefetchScalarGridSpec(
            num_scalar_prefetch=0, grid=(L,),
            in_specs=in_specs, out_specs=out_specs, scratch_shapes=scratch),
        compiler_params=pltpu.CompilerParams(
            dimension_semantics=("arbitrary",),
            vmem_limit_bytes=_vmem_limit_bytes(est)),
    )(*args)


# ------------------------------ readout kernel ------------------------------

def _readout_kernel(atom_ref, frag_ref, pa_ref, pf_ref, brow_ref,
                    wh_ref, hb_ref, wo2_ref, bo2_ref, out_ref):
    HP = atom_ref.shape[1]
    w = wh_ref[...]                    # [5*HP, HP]: aO1|aO2|fO1|fO2|out1
    hb = hb_ref[...]                   # [8, HP]
    brow = brow_ref[...]               # [Bp, 8]: col0=1/|atoms(g)|, col1=1/|frags(g)|

    # atom_out / frag_out MLPs (2 layers, last_relu=True, no BN)
    a = jnp.maximum(_mm(atom_ref[...], w[0:HP, :]) + hb[0:1, :], 0.0)
    a = jnp.maximum(_mm(a, w[HP:2 * HP, :]) + hb[1:2, :], 0.0)
    f = jnp.maximum(_mm(frag_ref[...], w[2 * HP:3 * HP, :]) + hb[2:3, :], 0.0)
    f = jnp.maximum(_mm(f, w[3 * HP:4 * HP, :]) + hb[3:4, :], 0.0)

    # mean graph pooling: 0/1 incidence matmuls + f32 reciprocal-count scaling
    pooled = (_mm(pa_ref[...], a) * brow[:, 0:1]
              + _mm(pf_ref[...], f) * brow[:, 1:2])

    # final readout MLP (last layer no ReLU)
    h = jnp.maximum(_mm(pooled, w[4 * HP:5 * HP, :]) + hb[4:5, :], 0.0)
    out_ref[...] = _mm(h, wo2_ref[...]) + bo2_ref[...]


def run_readout(atom, frag, g, p):
    Bp = g["brow"].shape[0]
    OUTP = p["wo2"].shape[1]
    args = (atom, frag, g["pa"], g["pf"], g["brow"],
            p["wh"], p["hb"], p["wo2"], p["bo2"])
    est = 2 * sum(int(a.nbytes) for a in args) + Bp * OUTP * 4 + (4 << 20)
    return pl.pallas_call(
        _readout_kernel,
        out_shape=jax.ShapeDtypeStruct((Bp, OUTP), jnp.float32),
        in_specs=[pl.BlockSpec(memory_space=VMEM)] * len(args),
        out_specs=pl.BlockSpec(memory_space=VMEM),
        compiler_params=pltpu.CompilerParams(
            vmem_limit_bytes=_vmem_limit_bytes(est)),
    )(*args)


# --------------------- static graph-matrix precompute ---------------------
# (per graph batch; hoisted out of the forward path)

def prepare_graph(data, num_atoms, num_frags, batch_size):
    x = data["x"]
    fragments = data["fragments"]
    edge_attr = data["edge_attr"]
    edge_index = data["edge_index"]
    frag_edge_index = data["fragments_edge_index"]
    batch = data["batch"]
    frag_batch = data["fragments_batch"]

    num_edges = edge_attr.shape[0]
    Np = _ceil_to(num_atoms, LANE)
    Ep = _ceil_to(num_edges, LANE)
    Fp = _ceil_to(num_frags, LANE)
    Bp = _ceil_to(batch_size, 8)
    DAP = _ceil_to(x.shape[1], LANE)
    DFP = _ceil_to(fragments.shape[1], LANE)
    DEP = _ceil_to(edge_attr.shape[1], LANE)

    f32 = jnp.float32
    e_src, e_dst = edge_index[0], edge_index[1]
    f_row, f_col = frag_edge_index[0], frag_edge_index[1]   # row: atoms, col: frags

    # GINEConv gather/scatter one-hots (0/1 -> exact in bf16), lane-dense padded
    goh = _pad2(_oh_cols(e_src, num_atoms, Np), Ep, Np)               # [Ep, Np]
    soh = _pad2(_oh_cols(e_dst, num_atoms, Np).T, Np, Ep)             # [Np, Ep]

    # fragment GINConv adjacency — literal PyTorch semantics (f_row indexes
    # fragment rows; edges with f_row >= num_frags are dropped).
    oh_col = _oh_cols(f_col, num_frags, Fp)                           # [Ef, Fp]
    oh_row_f = _oh_cols(f_row, num_frags, Fp)                         # [Ef, Fp]
    adjf = oh_col.T @ oh_row_f                                        # [Fp, Fp]

    # InterMessage 0/1 incidence matrices (scatter-mean counts exact in bf16)
    oh_row_a = _oh_cols(f_row, num_atoms, Np)                         # [Ef, Np]
    inc_f2a = oh_row_a.T @ oh_col                                     # [Np, Fp]
    inc_a2f = oh_col.T @ oh_row_a                                     # [Fp, Np]

    amask = (jnp.arange(Np) < num_atoms).astype(f32)
    fmask = (jnp.arange(Fp) < num_frags).astype(f32)
    a_inv = 1.0 / jnp.maximum(inc_f2a.sum(axis=1), 1.0)
    f_inv = 1.0 / jnp.maximum(inc_a2f.sum(axis=1), 1.0)
    arow = (jnp.zeros((Np, 8), f32)
            .at[:, 0].set(a_inv).at[:, 1].set(amask)
            .at[:, 2].set(1.0 / float(num_atoms)))
    frow = (jnp.zeros((Fp, 8), f32)
            .at[:, 0].set(f_inv).at[:, 1].set(fmask)
            .at[:, 2].set(1.0 / float(num_frags)))

    # mean graph-pooling: 0/1 incidence + per-graph reciprocal counts
    pa = _pad2(_oh_cols(batch, batch_size, batch_size).T, Bp, Np)     # [Bp, Np]
    pf = _pad2(_oh_cols(frag_batch, batch_size, batch_size).T, Bp, Fp)
    b_inv_a = 1.0 / jnp.maximum(pa.sum(axis=1), 1.0)
    b_inv_f = 1.0 / jnp.maximum(pf.sum(axis=1), 1.0)
    brow = jnp.zeros((Bp, 8), f32).at[:, 0].set(b_inv_a).at[:, 1].set(b_inv_f)

    return dict(
        ax=_pad2(x, Np, DAP).astype(BF16),
        fx=_pad2(fragments, Fp, DFP).astype(BF16),
        eattr=_pad2(edge_attr, Ep, DEP).astype(BF16),
        goh=goh.astype(BF16), soh=soh.astype(BF16), adjf=adjf.astype(BF16),
        inc_f2a=inc_f2a.astype(BF16), inc_a2f=inc_a2f.astype(BF16),
        arow=arow, frow=frow,
        pa=pa.astype(BF16), pf=pf.astype(BF16), brow=brow,
    )


# ------------------------------ parameters ------------------------------

def init_params(key, in_ch, in_ch_sub, in_ch_edge, hidden, out_ch, num_layers):
    keys = iter(jax.random.split(key, 256))

    def lin(din, dout):
        w = jax.random.normal(next(keys), (din, dout), jnp.float32) / jnp.sqrt(
            jnp.float32(din))
        b = jnp.zeros((1, dout), jnp.float32)
        return (w, b)

    def bn(d):
        return (jnp.ones((1, d), jnp.float32), jnp.zeros((1, d), jnp.float32))

    L = num_layers
    return dict(
        atom_enc=lin(in_ch, hidden),
        frag_enc=lin(in_ch_sub, hidden),
        bond_enc=[lin(in_ch_edge, hidden) for _ in range(L)],
        gine_edge_lin=[lin(hidden, hidden) for _ in range(L)],
        atom_nn1=[lin(hidden, 2 * hidden) for _ in range(L)],
        atom_nn_bn=[bn(2 * hidden) for _ in range(L)],
        atom_nn2=[lin(2 * hidden, hidden) for _ in range(L)],
        atom_bn=[bn(hidden) for _ in range(L)],
        frag_nn1=[lin(hidden, 2 * hidden) for _ in range(L)],
        frag_nn_bn=[bn(2 * hidden) for _ in range(L)],
        frag_nn2=[lin(2 * hidden, hidden) for _ in range(L)],
        frag_bn=[bn(hidden) for _ in range(L)],
        frag2atom=[lin(hidden, hidden) for _ in range(L)],
        atom2frag=[lin(hidden, hidden) for _ in range(L)],
        frag_out=(lin(hidden, hidden), lin(hidden, hidden)),
        atom_out=(lin(hidden, hidden), lin(hidden, hidden)),
        out=(lin(hidden, hidden), lin(hidden, out_ch)),
    )


def prepare_params(params, num_layers):
    """Fold bond_enc∘edge_lin, pad to 128 lanes, stack per-layer weights [L,...]."""
    hidden = params["atom_enc"][0].shape[1]
    in_ch = params["atom_enc"][0].shape[0]
    in_ch_sub = params["frag_enc"][0].shape[0]
    in_ch_edge = params["bond_enc"][0][0].shape[0]
    out_ch = params["out"][1][0].shape[1]

    HP = _ceil_to(hidden, LANE)
    H2P = _ceil_to(2 * hidden, LANE)
    DAP = _ceil_to(in_ch, LANE)
    DFP = _ceil_to(in_ch_sub, LANE)
    DEP = _ceil_to(in_ch_edge, LANE)
    OUTP = _ceil_to(out_ch, LANE)
    f32 = jnp.float32

    enc_b = jnp.concatenate([_pad2(params["atom_enc"][1], 1, HP),
                             _pad2(params["frag_enc"][1], 1, HP),
                             jnp.zeros((6, HP), f32)], axis=0)

    we_l, w1_l, w2_l, wsq_l, v2_l, v1_l = [], [], [], [], [], []
    for l in range(num_layers):
        wb, bb = params["bond_enc"][l]
        we_, be_ = params["gine_edge_lin"][l]
        w_fold = wb @ we_                 # (x@Wb+bb)@We+be == x@(Wb@We)+(bb@We+be)
        b_fold = bb @ we_ + be_
        we_l.append(_pad2(w_fold, DEP, HP))
        w1_l.append(jnp.concatenate(
            [_pad2(params["atom_nn1"][l][0], HP, H2P),
             _pad2(params["frag_nn1"][l][0], HP, H2P)], axis=0))
        w2_l.append(jnp.concatenate(
            [_pad2(params["atom_nn2"][l][0], H2P, HP),
             _pad2(params["frag_nn2"][l][0], H2P, HP)], axis=0))
        wsq_l.append(jnp.concatenate(
            [_pad2(params["frag2atom"][l][0], HP, HP),
             _pad2(params["atom2frag"][l][0], HP, HP)], axis=0))
        v2_l.append(jnp.concatenate([
            _pad2(params["atom_nn1"][l][1], 1, H2P),
            _pad2(params["atom_nn_bn"][l][0], 1, H2P),
            _pad2(params["atom_nn_bn"][l][1], 1, H2P),
            _pad2(params["frag_nn1"][l][1], 1, H2P),
            _pad2(params["frag_nn_bn"][l][0], 1, H2P),
            _pad2(params["frag_nn_bn"][l][1], 1, H2P),
            jnp.zeros((2, H2P), f32)], axis=0))
        v1_l.append(jnp.concatenate([
            _pad2(b_fold, 1, HP),
            _pad2(params["atom_nn2"][l][1], 1, HP),
            _pad2(params["atom_bn"][l][0], 1, HP),
            _pad2(params["atom_bn"][l][1], 1, HP),
            _pad2(params["frag_nn2"][l][1], 1, HP),
            _pad2(params["frag_bn"][l][0], 1, HP),
            _pad2(params["frag_bn"][l][1], 1, HP),
            _pad2(params["frag2atom"][l][1], 1, HP),
            _pad2(params["atom2frag"][l][1], 1, HP),
            jnp.zeros((7, HP), f32)], axis=0))

    (ao1, ao2) = params["atom_out"]
    (fo1, fo2) = params["frag_out"]
    (o1, o2) = params["out"]
    wh = jnp.concatenate([_pad2(ao1[0], HP, HP), _pad2(ao2[0], HP, HP),
                          _pad2(fo1[0], HP, HP), _pad2(fo2[0], HP, HP),
                          _pad2(o1[0], HP, HP)], axis=0)
    hb = jnp.concatenate([_pad2(ao1[1], 1, HP), _pad2(ao2[1], 1, HP),
                          _pad2(fo1[1], 1, HP), _pad2(fo2[1], 1, HP),
                          _pad2(o1[1], 1, HP), jnp.zeros((3, HP), f32)], axis=0)

    return dict(
        wa=_pad2(params["atom_enc"][0], DAP, HP).astype(BF16),
        wf=_pad2(params["frag_enc"][0], DFP, HP).astype(BF16),
        enc_b=enc_b,
        we_s=jnp.stack(we_l).astype(BF16),
        w1_s=jnp.stack(w1_l).astype(BF16),
        w2_s=jnp.stack(w2_l).astype(BF16),
        wsq_s=jnp.stack(wsq_l).astype(BF16),
        v2_s=jnp.stack(v2_l),
        v1_s=jnp.stack(v1_l),
        wh=wh.astype(BF16),
        hb=hb,
        wo2=_pad2(o2[0], HP, OUTP).astype(BF16),
        bo2=_pad2(o2[1], 1, OUTP),
    )


# ------------------------------ forward pass ------------------------------

def frag_gnn_small_forward(prep, graph, batch_size, out_ch):
    atom, frag = run_layers(graph, prep)       # encoders + all L layers fused
    out = run_readout(atom, frag, graph, prep)  # heads + pooling + final MLP
    return out[:batch_size, :out_ch]


# ----------------------------------- main -----------------------------------

if __name__ == "__main__":
    in_ch, in_ch_sub, in_ch_edge = 8, 6, 4
    hidden, out_ch, num_layers = 32, 3, 2
    num_atoms, num_frags = 16, 16          # equal so fragments_edge_index rows
    num_edges, num_frag_edges = 32, 24     # index both tensors validly
    batch_size = 2                         # static (no device->host sync)

    key = jax.random.PRNGKey(0)
    k = jax.random.split(key, 8)
    x = jax.random.normal(k[0], (num_atoms, in_ch), jnp.float32)
    fragments = jax.random.normal(k[1], (num_frags, in_ch_sub), jnp.float32)
    edge_attr = jax.random.normal(k[2], (num_edges, in_ch_edge), jnp.float32)
    edge_index = jax.random.randint(k[3], (2, num_edges), 0, num_atoms,
                                    dtype=jnp.int32)
    fragments_edge_index = jnp.stack([
        jax.random.randint(k[4], (num_frag_edges,), 0, num_atoms, dtype=jnp.int32),
        jax.random.randint(k[5], (num_frag_edges,), 0, num_frags, dtype=jnp.int32),
    ])
    batch = jnp.concatenate([
        jnp.zeros(num_atoms // 2, jnp.int32),
        jnp.ones(num_atoms - num_atoms // 2, jnp.int32),
    ])
    fragments_batch = jnp.concatenate([
        jnp.zeros(num_frags // 2, jnp.int32),
        jnp.ones(num_frags - num_frags // 2, jnp.int32),
    ])

    data = dict(
        x=x, fragments=fragments, edge_attr=edge_attr, edge_index=edge_index,
        fragments_edge_index=fragments_edge_index, batch=batch,
        fragments_batch=fragments_batch,
    )
    params = init_params(jax.random.PRNGKey(1), in_ch, in_ch_sub, in_ch_edge,
                         hidden, out_ch, num_layers)

    # Hoisted out of the forward path: weights once per model, graph matrices
    # once per graph batch.
    prep = prepare_params(params, num_layers)
    graph = prepare_graph(data, num_atoms, num_frags, batch_size)

    out = frag_gnn_small_forward(prep, graph, batch_size, out_ch)
    out = jax.block_until_ready(out)
    assert out.shape == (batch_size, out_ch), out.shape
    assert bool(jnp.all(jnp.isfinite(out)))
    print("KERNEL_OK")
</pallas_src>

<mosaic_0001>
module attributes {stable_mosaic.version = 11 : i64} {
  func.func @_fused_layers_kernel(%arg0: i32, %arg1: memref<128x128xbf16, #tpu.memory_space<vmem>>, %arg2: memref<128x128xbf16, #tpu.memory_space<vmem>>, %arg3: memref<128x128xbf16, #tpu.memory_space<vmem>>, %arg4: memref<128x128xbf16, #tpu.memory_space<vmem>>, %arg5: memref<128x128xbf16, #tpu.memory_space<vmem>>, %arg6: memref<128x128xbf16, #tpu.memory_space<vmem>>, %arg7: memref<128x128xbf16, #tpu.memory_space<vmem>>, %arg8: memref<128x128xbf16, #tpu.memory_space<vmem>>, %arg9: memref<128x8xf32, #tpu.memory_space<vmem>>, %arg10: memref<128x8xf32, #tpu.memory_space<vmem>>, %arg11: memref<128x128xbf16, #tpu.memory_space<vmem>>, %arg12: memref<128x128xbf16, #tpu.memory_space<vmem>>, %arg13: memref<8x128xf32, #tpu.memory_space<vmem>>, %arg14: memref<1x128x128xbf16, #tpu.memory_space<vmem>>, %arg15: memref<1x256x128xbf16, #tpu.memory_space<vmem>>, %arg16: memref<1x256x128xbf16, #tpu.memory_space<vmem>>, %arg17: memref<1x256x128xbf16, #tpu.memory_space<vmem>>, %arg18: memref<1x8x128xf32, #tpu.memory_space<vmem>>, %arg19: memref<1x16x128xf32, #tpu.memory_space<vmem>>, %arg20: memref<128x128xbf16, #tpu.memory_space<vmem>>, %arg21: memref<128x128xbf16, #tpu.memory_space<vmem>>, %arg22: memref<128x128xf32, #tpu.memory_space<vmem>>, %arg23: memref<128x128xf32, #tpu.memory_space<vmem>>) attributes {dimension_semantics = [#tpu.dimension_semantics<arbitrary>], iteration_bounds = array<i64: 2>, scalar_prefetch = 0 : i64, scratch_operands = 2 : i64, tpu.core_type = #tpu.core_type<tc>, window_params = [{pipeline_mode = #tpu.pipeline_mode<synchronous>, transform_indices = @transform_0, window_bounds = array<i64: 128, 128>}, {pipeline_mode = #tpu.pipeline_mode<synchronous>, transform_indices = @transform_1, window_bounds = array<i64: 128, 128>}, {pipeline_mode = #tpu.pipeline_mode<synchronous>, transform_indices = @transform_2, window_bounds = array<i64: 128, 128>}, {pipeline_mode = #tpu.pipeline_mode<synchronous>, transform_indices = @transform_3, window_bounds = array<i64: 128, 128>}, {pipeline_mode = #tpu.pipeline_mode<synchronous>, transform_indices = @transform_4, window_bounds = array<i64: 128, 128>}, {pipeline_mode = #tpu.pipeline_mode<synchronous>, transform_indices = @transform_5, window_bounds = array<i64: 128, 128>}, {pipeline_mode = #tpu.pipeline_mode<synchronous>, transform_indices = @transform_6, window_bounds = array<i64: 128, 128>}, {pipeline_mode = #tpu.pipeline_mode<synchronous>, transform_indices = @transform_7, window_bounds = array<i64: 128, 128>}, {pipeline_mode = #tpu.pipeline_mode<synchronous>, transform_indices = @transform_8, window_bounds = array<i64: 128, 8>}, {pipeline_mode = #tpu.pipeline_mode<synchronous>, transform_indices = @transform_9, window_bounds = array<i64: 128, 8>}, {pipeline_mode = #tpu.pipeline_mode<synchronous>, transform_indices = @transform_10, window_bounds = array<i64: 128, 128>}, {pipeline_mode = #tpu.pipeline_mode<synchronous>, transform_indices = @transform_11, window_bounds = array<i64: 128, 128>}, {pipeline_mode = #tpu.pipeline_mode<synchronous>, transform_indices = @transform_12, window_bounds = array<i64: 8, 128>}, {transform_indices = @transform_13, window_bounds = array<i64: 1, 128, 128>}, {transform_indices = @transform_14, window_bounds = array<i64: 1, 256, 128>}, {transform_indices = @transform_15, window_bounds = array<i64: 1, 256, 128>}, {transform_indices = @transform_16, window_bounds = array<i64: 1, 256, 128>}, {transform_indices = @transform_17, window_bounds = array<i64: 1, 8, 128>}, {transform_indices = @transform_18, window_bounds = array<i64: 1, 16, 128>}, {pipeline_mode = #tpu.pipeline_mode<synchronous>, transform_indices = @transform_19, window_bounds = array<i64: 128, 128>}, {pipeline_mode = #tpu.pipeline_mode<synchronous>, transform_indices = @transform_20, window_bounds = array<i64: 128, 128>}]} {
    %c0_i32 = arith.constant 0 : i32
    %0 = arith.cmpi eq, %arg0, %c0_i32 : i32
    %1 = arith.extui %0 : i1 to i32
    %c0_i32_0 = arith.constant 0 : i32
    %2 = arith.cmpi ne, %1, %c0_i32_0 : i32
    scf.if %2 {
      %c0_73 = arith.constant 0 : index
      %c0_74 = arith.constant 0 : index
      %221 = vector.load %arg13[%c0_73, %c0_74] : memref<8x128xf32, #tpu.memory_space<vmem>>, vector<8x128xf32>
      %c0_75 = arith.constant 0 : index
      %c0_76 = arith.constant 0 : index
      %222 = vector.load %arg1[%c0_75, %c0_76] : memref<128x128xbf16, #tpu.memory_space<vmem>>, vector<128x128xbf16>
      %c0_77 = arith.constant 0 : index
      %c0_78 = arith.constant 0 : index
      %223 = vector.load %arg11[%c0_77, %c0_78] : memref<128x128xbf16, #tpu.memory_space<vmem>>, vector<128x128xbf16>
      %cst_79 = arith.constant dense<0.000000e+00> : vector<128x128xf32>
      %224 = tpu.matmul %222, %223, %cst_79 {dimension_numbers = #tpu.dot_dimension_numbers<[1], [0], [0], [1], [0, 0, 1, 1], [], []>} : vector<128x128xbf16>, vector<128x128xbf16>, vector<128x128xf32> -> vector<128x128xf32>
      %225 = vector.extract_strided_slice %221 {offsets = [0, 0], sizes = [1, 128], strides = [1, 1]} : vector<8x128xf32> to vector<1x128xf32>
      %226 = vector.broadcast %225 : vector<1x128xf32> to vector<128x128xf32>
      %227 = arith.addf %224, %226 : vector<128x128xf32>
      %c0_80 = arith.constant 0 : index
      %c0_81 = arith.constant 0 : index
      %228 = vector.load %arg22[%c0_80, %c0_81] : memref<128x128xf32, #tpu.memory_space<vmem>>, vector<128x128xf32>
      tpu.vector_store %arg22[%c0_80, %c0_81], %227 {strides = array<i32>} : memref<128x128xf32, #tpu.memory_space<vmem>>, vector<128x128xf32>,
      %c0_82 = arith.constant 0 : index
      %c0_83 = arith.constant 0 : index
      %229 = vector.load %arg2[%c0_82, %c0_83] : memref<128x128xbf16, #tpu.memory_space<vmem>>, vector<128x128xbf16>
      %c0_84 = arith.constant 0 : index
      %c0_85 = arith.constant 0 : index
      %230 = vector.load %arg12[%c0_84, %c0_85] : memref<128x128xbf16, #tpu.memory_space<vmem>>, vector<128x128xbf16>
      %cst_86 = arith.constant dense<0.000000e+00> : vector<128x128xf32>
      %231 = tpu.matmul %229, %230, %cst_86 {dimension_numbers = #tpu.dot_dimension_numbers<[1], [0], [0], [1], [0, 0, 1, 1], [], []>} : vector<128x128xbf16>, vector<128x128xbf16>, vector<128x128xf32> -> vector<128x128xf32>
      %232 = vector.extract_strided_slice %221 {offsets = [1, 0], sizes = [1, 128], strides = [1, 1]} : vector<8x128xf32> to vector<1x128xf32>
      %233 = vector.broadcast %232 : vector<1x128xf32> to vector<128x128xf32>
      %234 = arith.addf %231, %233 : vector<128x128xf32>
      %c0_87 = arith.constant 0 : index
      %c0_88 = arith.constant 0 : index
      %235 = vector.load %arg23[%c0_87, %c0_88] : memref<128x128xf32, #tpu.memory_space<vmem>>, vector<128x128xf32>
      tpu.vector_store %arg23[%c0_87, %c0_88], %234 {strides = array<i32>} : memref<128x128xf32, #tpu.memory_space<vmem>>, vector<128x128xf32>,
    } else {
    }
    %c0 = arith.constant 0 : index
    %c0_1 = arith.constant 0 : index
    %3 = vector.load %arg22[%c0, %c0_1] : memref<128x128xf32, #tpu.memory_space<vmem>>, vector<128x128xf32>
    %c0_2 = arith.constant 0 : index
    %c0_3 = arith.constant 0 : index
    %4 = vector.load %arg23[%c0_2, %c0_3] : memref<128x128xf32, #tpu.memory_space<vmem>>, vector<128x128xf32>
    %c0_4 = arith.constant 0 : index
    %c0_5 = arith.constant 0 : index
    %5 = vector.load %arg9[%c0_4, %c0_5] : memref<128x8xf32, #tpu.memory_space<vmem>>, vector<128x8xf32>
    %c0_6 = arith.constant 0 : index
    %c0_7 = arith.constant 0 : index
    %6 = vector.load %arg10[%c0_6, %c0_7] : memref<128x8xf32, #tpu.memory_space<vmem>>, vector<128x8xf32>
    %7 = vector.extract_strided_slice %5 {offsets = [0, 0], sizes = [128, 1], strides = [1, 1]} : vector<128x8xf32> to vector<128x1xf32>
    %8 = vector.extract_strided_slice %5 {offsets = [0, 1], sizes = [128, 1], strides = [1, 1]} : vector<128x8xf32> to vector<128x1xf32>
    %9 = vector.extract_strided_slice %5 {offsets = [0, 2], sizes = [1, 1], strides = [1, 1]} : vector<128x8xf32> to vector<1x1xf32>
    %10 = vector.extract_strided_slice %6 {offsets = [0, 0], sizes = [128, 1], strides = [1, 1]} : vector<128x8xf32> to vector<128x1xf32>
    %11 = vector.extract_strided_slice %6 {offsets = [0, 1], sizes = [128, 1], strides = [1, 1]} : vector<128x8xf32> to vector<128x1xf32>
    %12 = vector.extract_strided_slice %6 {offsets = [0, 2], sizes = [1, 1], strides = [1, 1]} : vector<128x8xf32> to vector<1x1xf32>
    %c0_8 = arith.constant 0 : index
    %c0_9 = arith.constant 0 : index
    %c0_10 = arith.constant 0 : index
    %13 = vector.load %arg19[%c0_8, %c0_9, %c0_10] : memref<1x16x128xf32, #tpu.memory_space<vmem>>, vector<1x16x128xf32>
    %14 = vector.shape_cast %13 : vector<1x16x128xf32> to vector<16x128xf32>
    %c0_11 = arith.constant 0 : index
    %c0_12 = arith.constant 0 : index
    %c0_13 = arith.constant 0 : index
    %15 = vector.load %arg18[%c0_11, %c0_12, %c0_13] : memref<1x8x128xf32, #tpu.memory_space<vmem>>, vector<1x8x128xf32>
    %16 = vector.shape_cast %15 : vector<1x8x128xf32> to vector<8x128xf32>
    %c0_14 = arith.constant 0 : index
    %c0_15 = arith.constant 0 : index
    %c0_16 = arith.constant 0 : index
    %17 = vector.load %arg15[%c0_14, %c0_15, %c0_16] : memref<1x256x128xbf16, #tpu.memory_space<vmem>>, vector<1x256x128xbf16>
    %18 = vector.shape_cast %17 : vector<1x256x128xbf16> to vector<256x128xbf16>
    %c0_17 = arith.constant 0 : index
    %c0_18 = arith.constant 0 : index
    %c0_19 = arith.constant 0 : index
    %19 = vector.load %arg16[%c0_17, %c0_18, %c0_19] : memref<1x256x128xbf16, #tpu.memory_space<vmem>>, vector<1x256x128xbf16>
    %20 = vector.shape_cast %19 : vector<1x256x128xbf16> to vector<256x128xbf16>
    %c0_20 = arith.constant 0 : index
    %c0_21 = arith.constant 0 : index
    %c0_22 = arith.constant 0 : index
    %21 = vector.load %arg17[%c0_20, %c0_21, %c0_22] : memref<1x256x128xbf16, #tpu.memory_space<vmem>>, vector<1x256x128xbf16>
    %22 = vector.shape_cast %21 : vector<1x256x128xbf16> to vector<256x128xbf16>
    %c0_23 = arith.constant 0 : index
    %c0_24 = arith.constant 0 : index
    %23 = vector.load %arg3[%c0_23, %c0_24] : memref<128x128xbf16, #tpu.memory_space<vmem>>, vector<128x128xbf16>
    %c0_25 = arith.constant 0 : index
    %c0_26 = arith.constant 0 : index
    %c0_27 = arith.constant 0 : index
    %24 = vector.load %arg14[%c0_25, %c0_26, %c0_27] : memref<1x128x128xbf16, #tpu.memory_space<vmem>>, vector<1x128x128xbf16>
    %25 = vector.shape_cast %24 : vector<1x128x128xbf16> to vector<128x128xbf16>
    %cst = arith.constant dense<0.000000e+00> : vector<128x128xf32>
    %26 = tpu.matmul %23, %25, %cst {dimension_numbers = #tpu.dot_dimension_numbers<[1], [0], [0], [1], [0, 0, 1, 1], [], []>} : vector<128x128xbf16>, vector<128x128xbf16>, vector<128x128xf32> -> vector<128x128xf32>
    %27 = vector.extract_strided_slice %14 {offsets = [0, 0], sizes = [1, 128], strides = [1, 1]} : vector<16x128xf32> to vector<1x128xf32>
    %28 = vector.broadcast %27 : vector<1x128xf32> to vector<128x128xf32>
    %29 = arith.addf %26, %28 : vector<128x128xf32>
    %c0_28 = arith.constant 0 : index
    %c0_29 = arith.constant 0 : index
    %30 = vector.load %arg4[%c0_28, %c0_29] : memref<128x128xbf16, #tpu.memory_space<vmem>>, vector<128x128xbf16>
    %31 = arith.truncf %3 : vector<128x128xf32> to vector<128x128xbf16>
    %cst_30 = arith.constant dense<0.000000e+00> : vector<128x128xf32>
    %32 = tpu.matmul %30, %31, %cst_30 {dimension_numbers = #tpu.dot_dimension_numbers<[1], [0], [0], [1], [0, 0, 1, 1], [], []>} : vector<128x128xbf16>, vector<128x128xbf16>, vector<128x128xf32> -> vector<128x128xf32>
    %33 = arith.addf %32, %29 : vector<128x128xf32>
    %cst_31 = arith.constant 0.000000e+00 : f32
    %34 = vector.broadcast %cst_31 : f32 to vector<128x128xf32>
    %35 = arith.maximumf %33, %34 : vector<128x128xf32>
    %c0_32 = arith.constant 0 : index
    %c0_33 = arith.constant 0 : index
    %36 = vector.load %arg5[%c0_32, %c0_33] : memref<128x128xbf16, #tpu.memory_space<vmem>>, vector<128x128xbf16>
    %37 = arith.truncf %35 : vector<128x128xf32> to vector<128x128xbf16>
    %cst_34 = arith.constant dense<0.000000e+00> : vector<128x128xf32>
    %38 = tpu.matmul %36, %37, %cst_34 {dimension_numbers = #tpu.dot_dimension_numbers<[1], [0], [0], [1], [0, 0, 1, 1], [], []>} : vector<128x128xbf16>, vector<128x128xbf16>, vector<128x128xf32> -> vector<128x128xf32>
    %39 = arith.addf %3, %38 : vector<128x128xf32>
    %40 = vector.extract_strided_slice %18 {offsets = [0, 0], sizes = [128, 128], strides = [1, 1]} : vector<256x128xbf16> to vector<128x128xbf16>
    %41 = arith.truncf %39 : vector<128x128xf32> to vector<128x128xbf16>
    %cst_35 = arith.constant dense<0.000000e+00> : vector<128x128xf32>
    %42 = tpu.matmul %41, %40, %cst_35 {dimension_numbers = #tpu.dot_dimension_numbers<[1], [0], [0], [1], [0, 0, 1, 1], [], []>} : vector<128x128xbf16>, vector<128x128xbf16>, vector<128x128xf32> -> vector<128x128xf32>
    %43 = vector.extract_strided_slice %16 {offsets = [0, 0], sizes = [1, 128], strides = [1, 1]} : vector<8x128xf32> to vector<1x128xf32>
    %44 = vector.broadcast %43 : vector<1x128xf32> to vector<128x128xf32>
    %45 = arith.addf %42, %44 : vector<128x128xf32>
    %46 = vector.extract_strided_slice %16 {offsets = [1, 0], sizes = [1, 128], strides = [1, 1]} : vector<8x128xf32> to vector<1x128xf32>
    %47 = vector.extract_strided_slice %16 {offsets = [2, 0], sizes = [1, 128], strides = [1, 1]} : vector<8x128xf32> to vector<1x128xf32>
    %48 = vector.broadcast %8 : vector<128x1xf32> to vector<128x128xf32>
    %49 = arith.mulf %45, %48 : vector<128x128xf32>
    %cst_36 = arith.constant dense<0.000000e+00> : vector<128xf32>
    %50 = vector.multi_reduction <add>, %49, %cst_36 [0] : vector<128x128xf32> to vector<128xf32>
    %51 = vector.shape_cast %50 : vector<128xf32> to vector<1x128xf32>
    %52 = vector.broadcast %9 : vector<1x1xf32> to vector<1x128xf32>
    %53 = arith.mulf %51, %52 : vector<1x128xf32>
    %54 = vector.broadcast %53 : vector<1x128xf32> to vector<128x128xf32>
    %55 = arith.subf %45, %54 : vector<128x128xf32>
    %56 = vector.broadcast %8 : vector<128x1xf32> to vector<128x128xf32>
    %57 = arith.mulf %55, %56 : vector<128x128xf32>
    %58 = arith.mulf %57, %57 : vector<128x128xf32>
    %cst_37 = arith.constant dense<0.000000e+00> : vector<128xf32>
    %59 = vector.multi_reduction <add>, %58, %cst_37 [0] : vector<128x128xf32> to vector<128xf32>
    %60 = vector.shape_cast %59 : vector<128xf32> to vector<1x128xf32>
    %61 = vector.broadcast %9 : vector<1x1xf32> to vector<1x128xf32>
    %62 = arith.mulf %60, %61 : vector<1x128xf32>
    %63 = vector.broadcast %53 : vector<1x128xf32> to vector<128x128xf32>
    %64 = arith.subf %45, %63 : vector<128x128xf32>
    %cst_38 = arith.constant 9.99999974E-6 : f32
    %65 = vector.broadcast %cst_38 : f32 to vector<1x128xf32>
    %66 = arith.addf %62, %65 : vector<1x128xf32>
    %67 = math.rsqrt %66 : vector<1x128xf32>
    %68 = vector.broadcast %67 : vector<1x128xf32> to vector<128x128xf32>
    %69 = arith.mulf %64, %68 : vector<128x128xf32>
    %70 = vector.broadcast %46 : vector<1x128xf32> to vector<128x128xf32>
    %71 = arith.mulf %69, %70 : vector<128x128xf32>
    %72 = vector.broadcast %47 : vector<1x128xf32> to vector<128x128xf32>
    %73 = arith.addf %71, %72 : vector<128x128xf32>
    %cst_39 = arith.constant 0.000000e+00 : f32
    %74 = vector.broadcast %cst_39 : f32 to vector<128x128xf32>
    %75 = arith.maximumf %73, %74 : vector<128x128xf32>
    %76 = vector.extract_strided_slice %20 {offsets = [0, 0], sizes = [128, 128], strides = [1, 1]} : vector<256x128xbf16> to vector<128x128xbf16>
    %77 = arith.truncf %75 : vector<128x128xf32> to vector<128x128xbf16>
    %cst_40 = arith.constant dense<0.000000e+00> : vector<128x128xf32>
    %78 = tpu.matmul %77, %76, %cst_40 {dimension_numbers = #tpu.dot_dimension_numbers<[1], [0], [0], [1], [0, 0, 1, 1], [], []>} : vector<128x128xbf16>, vector<128x128xbf16>, vector<128x128xf32> -> vector<128x128xf32>
    %79 = vector.extract_strided_slice %14 {offsets = [1, 0], sizes = [1, 128], strides = [1, 1]} : vector<16x128xf32> to vector<1x128xf32>
    %80 = vector.broadcast %79 : vector<1x128xf32> to vector<128x128xf32>
    %81 = arith.addf %78, %80 : vector<128x128xf32>
    %82 = vector.extract_strided_slice %14 {offsets = [2, 0], sizes = [1, 128], strides = [1, 1]} : vector<16x128xf32> to vector<1x128xf32>
    %83 = vector.extract_strided_slice %14 {offsets = [3, 0], sizes = [1, 128], strides = [1, 1]} : vector<16x128xf32> to vector<1x128xf32>
    %84 = vector.broadcast %8 : vector<128x1xf32> to vector<128x128xf32>
    %85 = arith.mulf %81, %84 : vector<128x128xf32>
    %cst_41 = arith.constant dense<0.000000e+00> : vector<128xf32>
    %86 = vector.multi_reduction <add>, %85, %cst_41 [0] : vector<128x128xf32> to vector<128xf32>
    %87 = vector.shape_cast %86 : vector<128xf32> to vector<1x128xf32>
    %88 = vector.broadcast %9 : vector<1x1xf32> to vector<1x128xf32>
    %89 = arith.mulf %87, %88 : vector<1x128xf32>
    %90 = vector.broadcast %89 : vector<1x128xf32> to vector<128x128xf32>
    %91 = arith.subf %81, %90 : vector<128x128xf32>
    %92 = vector.broadcast %8 : vector<128x1xf32> to vector<128x128xf32>
    %93 = arith.mulf %91, %92 : vector<128x128xf32>
    %94 = arith.mulf %93, %93 : vector<128x128xf32>
    %cst_42 = arith.constant dense<0.000000e+00> : vector<128xf32>
    %95 = vector.multi_reduction <add>, %94, %cst_42 [0] : vector<128x128xf32> to vector<128xf32>
    %96 = vector.shape_cast %95 : vector<128xf32> to vector<1x128xf32>
    %97 = vector.broadcast %9 : vector<1x1xf32> to vector<1x128xf32>
    %98 = arith.mulf %96, %97 : vector<1x128xf32>
    %99 = vector.broadcast %89 : vector<1x128xf32> to vector<128x128xf32>
    %100 = arith.subf %81, %99 : vector<128x128xf32>
    %cst_43 = arith.constant 9.99999974E-6 : f32
    %101 = vector.broadcast %cst_43 : f32 to vector<1x128xf32>
    %102 = arith.addf %98, %101 : vector<1x128xf32>
    %103 = math.rsqrt %102 : vector<1x128xf32>
    %104 = vector.broadcast %103 : vector<1x128xf32> to vector<128x128xf32>
    %105 = arith.mulf %100, %104 : vector<128x128xf32>
    %106 = vector.broadcast %82 : vector<1x128xf32> to vector<128x128xf32>
    %107 = arith.mulf %105, %106 : vector<128x128xf32>
    %108 = vector.broadcast %83 : vector<1x128xf32> to vector<128x128xf32>
    %109 = arith.addf %107, %108 : vector<128x128xf32>
    %cst_44 = arith.constant 0.000000e+00 : f32
    %110 = vector.broadcast %cst_44 : f32 to vector<128x128xf32>
    %111 = arith.maximumf %109, %110 : vector<128x128xf32>
    %c0_45 = arith.constant 0 : index
    %c0_46 = arith.constant 0 : index
    %112 = vector.load %arg6[%c0_45, %c0_46] : memref<128x128xbf16, #tpu.memory_space<vmem>>, vector<128x128xbf16>
    %113 = arith.truncf %4 : vector<128x128xf32> to vector<128x128xbf16>
    %cst_47 = arith.constant dense<0.000000e+00> : vector<128x128xf32>
    %114 = tpu.matmul %112, %113, %cst_47 {dimension_numbers = #tpu.dot_dimension_numbers<[1], [0], [0], [1], [0, 0, 1, 1], [], []>} : vector<128x128xbf16>, vector<128x128xbf16>, vector<128x128xf32> -> vector<128x128xf32>
    %115 = arith.addf %4, %114 : vector<128x128xf32>
    %116 = vector.extract_strided_slice %18 {offsets = [128, 0], sizes = [128, 128], strides = [1, 1]} : vector<256x128xbf16> to vector<128x128xbf16>
    %117 = arith.truncf %115 : vector<128x128xf32> to vector<128x128xbf16>
    %cst_48 = arith.constant dense<0.000000e+00> : vector<128x128xf32>
    %118 = tpu.matmul %117, %116, %cst_48 {dimension_numbers = #tpu.dot_dimension_numbers<[1], [0], [0], [1], [0, 0, 1, 1], [], []>} : vector<128x128xbf16>, vector<128x128xbf16>, vector<128x128xf32> -> vector<128x128xf32>
    %119 = vector.extract_strided_slice %16 {offsets = [3, 0], sizes = [1, 128], strides = [1, 1]} : vector<8x128xf32> to vector<1x128xf32>
    %120 = vector.broadcast %119 : vector<1x128xf32> to vector<128x128xf32>
    %121 = arith.addf %118, %120 : vector<128x128xf32>
    %122 = vector.extract_strided_slice %16 {offsets = [4, 0], sizes = [1, 128], strides = [1, 1]} : vector<8x128xf32> to vector<1x128xf32>
    %123 = vector.extract_strided_slice %16 {offsets = [5, 0], sizes = [1, 128], strides = [1, 1]} : vector<8x128xf32> to vector<1x128xf32>
    %124 = vector.broadcast %11 : vector<128x1xf32> to vector<128x128xf32>
    %125 = arith.mulf %121, %124 : vector<128x128xf32>
    %cst_49 = arith.constant dense<0.000000e+00> : vector<128xf32>
    %126 = vector.multi_reduction <add>, %125, %cst_49 [0] : vector<128x128xf32> to vector<128xf32>
    %127 = vector.shape_cast %126 : vector<128xf32> to vector<1x128xf32>
    %128 = vector.broadcast %12 : vector<1x1xf32> to vector<1x128xf32>
    %129 = arith.mulf %127, %128 : vector<1x128xf32>
    %130 = vector.broadcast %129 : vector<1x128xf32> to vector<128x128xf32>
    %131 = arith.subf %121, %130 : vector<128x128xf32>
    %132 = vector.broadcast %11 : vector<128x1xf32> to vector<128x128xf32>
    %133 = arith.mulf %131, %132 : vector<128x128xf32>
    %134 = arith.mulf %133, %133 : vector<128x128xf32>
    %cst_50 = arith.constant dense<0.000000e+00> : vector<128xf32>
    %135 = vector.multi_reduction <add>, %134, %cst_50 [0] : vector<128x128xf32> to vector<128xf32>
    %136 = vector.shape_cast %135 : vector<128xf32> to vector<1x128xf32>
    %137 = vector.broadcast %12 : vector<1x1xf32> to vector<1x128xf32>
    %138 = arith.mulf %136, %137 : vector<1x128xf32>
    %139 = vector.broadcast %129 : vector<1x128xf32> to vector<128x128xf32>
    %140 = arith.subf %121, %139 : vector<128x128xf32>
    %cst_51 = arith.constant 9.99999974E-6 : f32
    %141 = vector.broadcast %cst_51 : f32 to vector<1x128xf32>
    %142 = arith.addf %138, %141 : vector<1x128xf32>
    %143 = math.rsqrt %142 : vector<1x128xf32>
    %144 = vector.broadcast %143 : vector<1x128xf32> to vector<128x128xf32>
    %145 = arith.mulf %140, %144 : vector<128x128xf32>
    %146 = vector.broadcast %122 : vector<1x128xf32> to vector<128x128xf32>
    %147 = arith.mulf %145, %146 : vector<128x128xf32>
    %148 = vector.broadcast %123 : vector<1x128xf32> to vector<128x128xf32>
    %149 = arith.addf %147, %148 : vector<128x128xf32>
    %cst_52 = arith.constant 0.000000e+00 : f32
    %150 = vector.broadcast %cst_52 : f32 to vector<128x128xf32>
    %151 = arith.maximumf %149, %150 : vector<128x128xf32>
    %152 = vector.extract_strided_slice %20 {offsets = [128, 0], sizes = [128, 128], strides = [1, 1]} : vector<256x128xbf16> to vector<128x128xbf16>
    %153 = arith.truncf %151 : vector<128x128xf32> to vector<128x128xbf16>
    %cst_53 = arith.constant dense<0.000000e+00> : vector<128x128xf32>
    %154 = tpu.matmul %153, %152, %cst_53 {dimension_numbers = #tpu.dot_dimension_numbers<[1], [0], [0], [1], [0, 0, 1, 1], [], []>} : vector<128x128xbf16>, vector<128x128xbf16>, vector<128x128xf32> -> vector<128x128xf32>
    %155 = vector.extract_strided_slice %14 {offsets = [4, 0], sizes = [1, 128], strides = [1, 1]} : vector<16x128xf32> to vector<1x128xf32>
    %156 = vector.broadcast %155 : vector<1x128xf32> to vector<128x128xf32>
    %157 = arith.addf %154, %156 : vector<128x128xf32>
    %158 = vector.extract_strided_slice %14 {offsets = [5, 0], sizes = [1, 128], strides = [1, 1]} : vector<16x128xf32> to vector<1x128xf32>
    %159 = vector.extract_strided_slice %14 {offsets = [6, 0], sizes = [1, 128], strides = [1, 1]} : vector<16x128xf32> to vector<1x128xf32>
    %160 = vector.broadcast %11 : vector<128x1xf32> to vector<128x128xf32>
    %161 = arith.mulf %157, %160 : vector<128x128xf32>
    %cst_54 = arith.constant dense<0.000000e+00> : vector<128xf32>
    %162 = vector.multi_reduction <add>, %161, %cst_54 [0] : vector<128x128xf32> to vector<128xf32>
    %163 = vector.shape_cast %162 : vector<128xf32> to vector<1x128xf32>
    %164 = vector.broadcast %12 : vector<1x1xf32> to vector<1x128xf32>
    %165 = arith.mulf %163, %164 : vector<1x128xf32>
    %166 = vector.broadcast %165 : vector<1x128xf32> to vector<128x128xf32>
    %167 = arith.subf %157, %166 : vector<128x128xf32>
    %168 = vector.broadcast %11 : vector<128x1xf32> to vector<128x128xf32>
    %169 = arith.mulf %167, %168 : vector<128x128xf32>
    %170 = arith.mulf %169, %169 : vector<128x128xf32>
    %cst_55 = arith.constant dense<0.000000e+00> : vector<128xf32>
    %171 = vector.multi_reduction <add>, %170, %cst_55 [0] : vector<128x128xf32> to vector<128xf32>
    %172 = vector.shape_cast %171 : vector<128xf32> to vector<1x128xf32>
    %173 = vector.broadcast %12 : vector<1x1xf32> to vector<1x128xf32>
    %174 = arith.mulf %172, %173 : vector<1x128xf32>
    %175 = vector.broadcast %165 : vector<1x128xf32> to vector<128x128xf32>
    %176 = arith.subf %157, %175 : vector<128x128xf32>
    %cst_56 = arith.constant 9.99999974E-6 : f32
    %177 = vector.broadcast %cst_56 : f32 to vector<1x128xf32>
    %178 = arith.addf %174, %177 : vector<1x128xf32>
    %179 = math.rsqrt %178 : vector<1x128xf32>
    %180 = vector.broadcast %179 : vector<1x128xf32> to vector<128x128xf32>
    %181 = arith.mulf %176, %180 : vector<128x128xf32>
    %182 = vector.broadcast %158 : vector<1x128xf32> to vector<128x128xf32>
    %183 = arith.mulf %181, %182 : vector<128x128xf32>
    %184 = vector.broadcast %159 : vector<1x128xf32> to vector<128x128xf32>
    %185 = arith.addf %183, %184 : vector<128x128xf32>
    %cst_57 = arith.constant 0.000000e+00 : f32
    %186 = vector.broadcast %cst_57 : f32 to vector<128x128xf32>
    %187 = arith.maximumf %185, %186 : vector<128x128xf32>
    %188 = vector.extract_strided_slice %22 {offsets = [0, 0], sizes = [128, 128], strides = [1, 1]} : vector<256x128xbf16> to vector<128x128xbf16>
    %189 = arith.truncf %187 : vector<128x128xf32> to vector<128x128xbf16>
    %cst_58 = arith.constant dense<0.000000e+00> : vector<128x128xf32>
    %190 = tpu.matmul %189, %188, %cst_58 {dimension_numbers = #tpu.dot_dimension_numbers<[1], [0], [0], [1], [0, 0, 1, 1], [], []>} : vector<128x128xbf16>, vector<128x128xbf16>, vector<128x128xf32> -> vector<128x128xf32>
    %c0_59 = arith.constant 0 : index
    %c0_60 = arith.constant 0 : index
    %191 = vector.load %arg7[%c0_59, %c0_60] : memref<128x128xbf16, #tpu.memory_space<vmem>>, vector<128x128xbf16>
    %192 = arith.truncf %190 : vector<128x128xf32> to vector<128x128xbf16>
    %cst_61 = arith.constant dense<0.000000e+00> : vector<128x128xf32>
    %193 = tpu.matmul %191, %192, %cst_61 {dimension_numbers = #tpu.dot_dimension_numbers<[1], [0], [0], [1], [0, 0, 1, 1], [], []>} : vector<128x128xbf16>, vector<128x128xbf16>, vector<128x128xf32> -> vector<128x128xf32>
    %194 = vector.broadcast %7 : vector<128x1xf32> to vector<128x128xf32>
    %195 = arith.mulf %193, %194 : vector<128x128xf32>
    %196 = vector.extract_strided_slice %14 {offsets = [7, 0], sizes = [1, 128], strides = [1, 1]} : vector<16x128xf32> to vector<1x128xf32>
    %197 = vector.broadcast %196 : vector<1x128xf32> to vector<128x128xf32>
    %198 = arith.addf %195, %197 : vector<128x128xf32>
    %cst_62 = arith.constant 0.000000e+00 : f32
    %199 = vector.broadcast %cst_62 : f32 to vector<128x128xf32>
    %200 = arith.maximumf %198, %199 : vector<128x128xf32>
    %201 = arith.addf %111, %200 : vector<128x128xf32>
    %c0_63 = arith.constant 0 : index
    %c0_64 = arith.constant 0 : index
    %202 = vector.load %arg8[%c0_63, %c0_64] : memref<128x128xbf16, #tpu.memory_space<vmem>>, vector<128x128xbf16>
    %203 = arith.truncf %201 : vector<128x128xf32> to vector<128x128xbf16>
    %cst_65 = arith.constant dense<0.000000e+00> : vector<128x128xf32>
    %204 = tpu.matmul %202, %203, %cst_65 {dimension_numbers = #tpu.dot_dimension_numbers<[1], [0], [0], [1], [0, 0, 1, 1], [], []>} : vector<128x128xbf16>, vector<128x128xbf16>, vector<128x128xf32> -> vector<128x128xf32>
    %205 = vector.broadcast %10 : vector<128x1xf32> to vector<128x128xf32>
    %206 = arith.mulf %204, %205 : vector<128x128xf32>
    %207 = vector.extract_strided_slice %22 {offsets = [128, 0], sizes = [128, 128], strides = [1, 1]} : vector<256x128xbf16> to vector<128x128xbf16>
    %208 = arith.truncf %206 : vector<128x128xf32> to vector<128x128xbf16>
    %cst_66 = arith.constant dense<0.000000e+00> : vector<128x128xf32>
    %209 = tpu.matmul %208, %207, %cst_66 {dimension_numbers = #tpu.dot_dimension_numbers<[1], [0], [0], [1], [0, 0, 1, 1], [], []>} : vector<128x128xbf16>, vector<128x128xbf16>, vector<128x128xf32> -> vector<128x128xf32>
    %210 = vector.extract_strided_slice %14 {offsets = [8, 0], sizes = [1, 128], strides = [1, 1]} : vector<16x128xf32> to vector<1x128xf32>
    %211 = vector.broadcast %210 : vector<1x128xf32> to vector<128x128xf32>
    %212 = arith.addf %209, %211 : vector<128x128xf32>
    %cst_67 = arith.constant 0.000000e+00 : f32
    %213 = vector.broadcast %cst_67 : f32 to vector<128x128xf32>
    %214 = arith.maximumf %212, %213 : vector<128x128xf32>
    %215 = arith.addf %187, %214 : vector<128x128xf32>
    %c0_68 = arith.constant 0 : index
    %c0_69 = arith.constant 0 : index
    %216 = vector.load %arg22[%c0_68, %c0_69] : memref<128x128xf32, #tpu.memory_space<vmem>>, vector<128x128xf32>
    tpu.vector_store %arg22[%c0_68, %c0_69], %201 {strides = array<i32>} : memref<128x128xf32, #tpu.memory_space<vmem>>, vector<128x128xf32>,
    %c0_70 = arith.constant 0 : index
    %c0_71 = arith.constant 0 : index
    %217 = vector.load %arg23[%c0_70, %c0_71] : memref<128x128xf32, #tpu.memory_space<vmem>>, vector<128x128xf32>
    tpu.vector_store %arg23[%c0_70, %c0_71], %215 {strides = array<i32>} : memref<128x128xf32, #tpu.memory_space<vmem>>, vector<128x128xf32>,
    %c1_i32 = arith.constant 1 : i32
    %218 = arith.cmpi eq, %arg0, %c1_i32 : i32
    %219 = arith.extui %218 : i1 to i32
    %c0_i32_72 = arith.constant 0 : i32
    %220 = arith.cmpi ne, %219, %c0_i32_72 : i32
    scf.if %220 {
      %c0_73 = arith.constant 0 : index
      %c0_74 = arith.constant 0 : index
      %221 = vector.load %arg22[%c0_73, %c0_74] : memref<128x128xf32, #tpu.memory_space<vmem>>, vector<128x128xf32>
      %222 = arith.truncf %221 : vector<128x128xf32> to vector<128x128xbf16>
      %c0_75 = arith.constant 0 : index
      %c0_76 = arith.constant 0 : index
      %223 = vector.load %arg20[%c0_75, %c0_76] : memref<128x128xbf16, #tpu.memory_space<vmem>>, vector<128x128xbf16>
      tpu.vector_store %arg20[%c0_75, %c0_76], %222 {strides = array<i32>} : memref<128x128xbf16, #tpu.memory_space<vmem>>, vector<128x128xbf16>,
      %c0_77 = arith.constant 0 : index
      %c0_78 = arith.constant 0 : index
      %224 = vector.load %arg23[%c0_77, %c0_78] : memref<128x128xf32, #tpu.memory_space<vmem>>, vector<128x128xf32>
      %225 = arith.truncf %224 : vector<128x128xf32> to vector<128x128xbf16>
      %c0_79 = arith.constant 0 : index
      %c0_80 = arith.constant 0 : index
      %226 = vector.load %arg21[%c0_79, %c0_80] : memref<128x128xbf16, #tpu.memory_space<vmem>>, vector<128x128xbf16>
      tpu.vector_store %arg21[%c0_79, %c0_80], %225 {strides = array<i32>} : memref<128x128xbf16, #tpu.memory_space<vmem>>, vector<128x128xbf16>,
    } else {
    }
    return
  }
  func.func @transform_0(%arg0: i32) -> (i32, i32) {
    %c0_i32 = arith.constant 0 : i32
    %c0_i32_0 = arith.constant 0 : i32
    %c0_i32_1 = arith.constant 0 : i32
    return %c0_i32, %c0_i32_0 : i32, i32
  }
  func.func @transform_1(%arg0: i32) -> (i32, i32) {
    %c0_i32 = arith.constant 0 : i32
    %c0_i32_0 = arith.constant 0 : i32
    %c0_i32_1 = arith.constant 0 : i32
    return %c0_i32, %c0_i32_0 : i32, i32
  }
  func.func @transform_2(%arg0: i32) -> (i32, i32) {
    %c0_i32 = arith.constant 0 : i32
    %c0_i32_0 = arith.constant 0 : i32
    %c0_i32_1 = arith.constant 0 : i32
    return %c0_i32, %c0_i32_0 : i32, i32
  }
  func.func @transform_3(%arg0: i32) -> (i32, i32) {
    %c0_i32 = arith.constant 0 : i32
    %c0_i32_0 = arith.constant 0 : i32
    %c0_i32_1 = arith.constant 0 : i32
    return %c0_i32, %c0_i32_0 : i32, i32
  }
  func.func @transform_4(%arg0: i32) -> (i32, i32) {
    %c0_i32 = arith.constant 0 : i32
    %c0_i32_0 = arith.constant 0 : i32
    %c0_i32_1 = arith.constant 0 : i32
    return %c0_i32, %c0_i32_0 : i32, i32
  }
  func.func @transform_5(%arg0: i32) -> (i32, i32) {
    %c0_i32 = arith.constant 0 : i32
    %c0_i32_0 = arith.constant 0 : i32
    %c0_i32_1 = arith.constant 0 : i32
    return %c0_i32, %c0_i32_0 : i32, i32
  }
  func.func @transform_6(%arg0: i32) -> (i32, i32) {
    %c0_i32 = arith.constant 0 : i32
    %c0_i32_0 = arith.constant 0 : i32
    %c0_i32_1 = arith.constant 0 : i32
    return %c0_i32, %c0_i32_0 : i32, i32
  }
  func.func @transform_7(%arg0: i32) -> (i32, i32) {
    %c0_i32 = arith.constant 0 : i32
    %c0_i32_0 = arith.constant 0 : i32
    %c0_i32_1 = arith.constant 0 : i32
    return %c0_i32, %c0_i32_0 : i32, i32
  }
  func.func @transform_8(%arg0: i32) -> (i32, i32) {
    %c0_i32 = arith.constant 0 : i32
    %c0_i32_0 = arith.constant 0 : i32
    %c0_i32_1 = arith.constant 0 : i32
    return %c0_i32, %c0_i32_0 : i32, i32
  }
  func.func @transform_9(%arg0: i32) -> (i32, i32) {
    %c0_i32 = arith.constant 0 : i32
    %c0_i32_0 = arith.constant 0 : i32
    %c0_i32_1 = arith.constant 0 : i32
    return %c0_i32, %c0_i32_0 : i32, i32
  }
  func.func @transform_10(%arg0: i32) -> (i32, i32) {
    %c0_i32 = arith.constant 0 : i32
    %c0_i32_0 = arith.constant 0 : i32
    %c0_i32_1 = arith.constant 0 : i32
    return %c0_i32, %c0_i32_0 : i32, i32
  }
  func.func @transform_11(%arg0: i32) -> (i32, i32) {
    %c0_i32 = arith.constant 0 : i32
    %c0_i32_0 = arith.constant 0 : i32
    %c0_i32_1 = arith.constant 0 : i32
    return %c0_i32, %c0_i32_0 : i32, i32
  }
  func.func @transform_12(%arg0: i32) -> (i32, i32) {
    %c0_i32 = arith.constant 0 : i32
    %c0_i32_0 = arith.constant 0 : i32
    %c0_i32_1 = arith.constant 0 : i32
    return %c0_i32, %c0_i32_0 : i32, i32
  }
  func.func @transform_13(%arg0: i32) -> (i32, i32, i32) {
    %c0_i32 = arith.constant 0 : i32
    %c0_i32_0 = arith.constant 0 : i32
    %c0_i32_1 = arith.constant 0 : i32
    return %arg0, %c0_i32, %c0_i32_0 : i32, i32, i32
  }
  func.func @transform_14(%arg0: i32) -> (i32, i32, i32) {
    %c0_i32 = arith.constant 0 : i32
    %c0_i32_0 = arith.constant 0 : i32
    %c0_i32_1 = arith.constant 0 : i32
    return %arg0, %c0_i32, %c0_i32_0 : i32, i32, i32
  }
  func.func @transform_15(%arg0: i32) -> (i32, i32, i32) {
    %c0_i32 = arith.constant 0 : i32
    %c0_i32_0 = arith.constant 0 : i32
    %c0_i32_1 = arith.constant 0 : i32
    return %arg0, %c0_i32, %c0_i32_0 : i32, i32, i32
  }
  func.func @transform_16(%arg0: i32) -> (i32, i32, i32) {
    %c0_i32 = arith.constant 0 : i32
    %c0_i32_0 = arith.constant 0 : i32
    %c0_i32_1 = arith.constant 0 : i32
    return %arg0, %c0_i32, %c0_i32_0 : i32, i32, i32
  }
  func.func @transform_17(%arg0: i32) -> (i32, i32, i32) {
    %c0_i32 = arith.constant 0 : i32
    %c0_i32_0 = arith.constant 0 : i32
    %c0_i32_1 = arith.constant 0 : i32
    return %arg0, %c0_i32, %c0_i32_0 : i32, i32, i32
  }
  func.func @transform_18(%arg0: i32) -> (i32, i32, i32) {
    %c0_i32 = arith.constant 0 : i32
    %c0_i32_0 = arith.constant 0 : i32
    %c0_i32_1 = arith.constant 0 : i32
    return %arg0, %c0_i32, %c0_i32_0 : i32, i32, i32
  }
  func.func @transform_19(%arg0: i32) -> (i32, i32) {
    %c0_i32 = arith.constant 0 : i32
    %c0_i32_0 = arith.constant 0 : i32
    %c0_i32_1 = arith.constant 0 : i32
    return %c0_i32, %c0_i32_0 : i32, i32
  }
  func.func @transform_20(%arg0: i32) -> (i32, i32) {
    %c0_i32 = arith.constant 0 : i32
    %c0_i32_0 = arith.constant 0 : i32
    %c0_i32_1 = arith.constant 0 : i32
    return %c0_i32, %c0_i32_0 : i32, i32
  }
}

</mosaic_0001>

<llo_original>
// kernel: tpu_custom_call.1
$region0: #{tpu_custom_call.1}
  #allocation0 [shape = 'u32[]', space=smem, size = 0x4, offset = 0x4, fixed_abs, tag = 'smem constant byte address 0x4 - core index']
  #allocation1 [shape = 'u32[144,128]{1,0:T(1,128)}', space=vmem, size = 0x12000, scoped, tag = 'internal scratch']
  #allocation2 [shape = 'f32[128,128]{1,0:T(8,128)}', space=vmem, size = 0x10000, scoped, tag = 'scratch operand']
  #allocation3 [shape = 'f32[128,128]{1,0:T(8,128)}', space=vmem, size = 0x10000, scoped, tag = 'scratch operand']
  %s0 = inlined_call_operand.vmem [shape: bf16[128,128], index: 0, kind: input, shape index: {}]
  %s1 = inlined_call_operand.hbm [shape: bf16[128,128], index: 1, kind: input, shape index: {}]
  %s2 = inlined_call_operand.hbm [shape: bf16[128,128], index: 2, kind: input, shape index: {}]
  %s3 = inlined_call_operand.hbm [shape: bf16[128,128], index: 3, kind: input, shape index: {}]
  %s4 = inlined_call_operand.hbm [shape: bf16[128,128], index: 4, kind: input, shape index: {}]
  %s5 = inlined_call_operand.hbm [shape: bf16[128,128], index: 5, kind: input, shape index: {}]
  %s6 = inlined_call_operand.hbm [shape: bf16[128,128], index: 6, kind: input, shape index: {}]
  %s7 = inlined_call_operand.hbm [shape: bf16[128,128], index: 7, kind: input, shape index: {}]
  %s8 = inlined_call_operand.vmem [shape: f32[128,8], index: 8, kind: input, shape index: {}]
  %s9 = inlined_call_operand.vmem [shape: f32[128,8], index: 9, kind: input, shape index: {}]
  %s10 = inlined_call_operand.hbm [shape: bf16[128,128], index: 10, kind: input, shape index: {}]
  %s11 = inlined_call_operand.hbm [shape: bf16[128,128], index: 11, kind: input, shape index: {}]
  %s12 = inlined_call_operand.hbm [shape: f32[8,128], index: 12, kind: input, shape index: {}]
  %s13 = inlined_call_operand.hbm [shape: bf16[2,128,128], index: 13, kind: input, shape index: {}]
  %s14 = inlined_call_operand.vmem [shape: bf16[2,256,128], index: 14, kind: input, shape index: {}]
  %s15 = inlined_call_operand.hbm [shape: bf16[2,256,128], index: 15, kind: input, shape index: {}]
  %s16 = inlined_call_operand.hbm [shape: bf16[2,256,128], index: 16, kind: input, shape index: {}]
  %s17 = inlined_call_operand.vmem [shape: f32[2,8,128], index: 17, kind: input, shape index: {}]
  %s18 = inlined_call_operand.hbm [shape: f32[2,16,128], index: 18, kind: input, shape index: {}]
  %s19 = inlined_call_operand.hbm [shape: bf16[128,128], index: 19, kind: output, shape index: {0}]
  %s20 = inlined_call_operand.hbm [shape: bf16[128,128], index: 20, kind: output, shape index: {1}]
  %21 = xla_tuple %s19, %s20
  %s22 = sld [smem:[#allocation0]]
  $region181: #{tpu_custom_call.1} parent=0
    _
  %s24 = ssub.s32 1, %s22
  %s25 = scalar_select 0, %s24, %s22
  $region1: #{tpu_custom_call.1} parent=0
    #allocation4 [shape = 'u8[32768]{0}', space=vmem, size = 0x8000, scoped, tag = 'input window, operand 1, single buffered']
    #allocation5 [shape = 's32[2]{0}', space=sflag, size = 0x8, scoped, tag = 'scoped memory for tpu_custom_call.1']
    #allocation6 [shape = 's32[2]{0}', space=sflag, size = 0x8, scoped, tag = 'scoped memory for tpu_custom_call.1']
    #allocation7 [shape = 'u8[32768]{0}', space=vmem, size = 0x8000, scoped, tag = 'input window, operand 2, single buffered']
    #allocation8 [shape = 's32[1]{0}', space=sflag, size = 0x4, scoped, tag = 'scoped memory for tpu_custom_call.1']
    #allocation9 [shape = 'u8[32768]{0}', space=vmem, size = 0x8000, scoped, tag = 'input window, operand 3, single buffered']
    #allocation10 [shape = 'u8[32768]{0}', space=vmem, size = 0x8000, scoped, tag = 'input window, operand 4, single buffered']
    #allocation11 [shape = 's32[1]{0}', space=sflag, size = 0x4, scoped, tag = 'scoped memory for tpu_custom_call.1']
    #allocation12 [shape = 'u8[32768]{0}', space=vmem, size = 0x8000, scoped, tag = 'input window, operand 5, single buffered']
    #allocation13 [shape = 'u8[32768]{0}', space=vmem, size = 0x8000, scoped, tag = 'input window, operand 6, single buffered']
    #allocation14 [shape = 's32[1]{0}', space=sflag, size = 0x4, scoped, tag = 'scoped memory for tpu_custom_call.1']
    #allocation15 [shape = 'u8[32768]{0}', space=vmem, size = 0x8000, scoped, tag = 'input window, operand 7, single buffered']
    #allocation16 [shape = 'u8[32768]{0}', space=vmem, size = 0x8000, scoped, tag = 'input window, operand 10, single buffered']
    #allocation17 [shape = 's32[1]{0}', space=sflag, size = 0x4, scoped, tag = 'scoped memory for tpu_custom_call.1']
    #allocation18 [shape = 'u8[32768]{0}', space=vmem, size = 0x8000, scoped, tag = 'input window, operand 11, single buffered']
    #allocation19 [shape = 'u8[4096]{0}', space=vmem, size = 0x1000, scoped, tag = 'input window, operand 12, single buffered']
    #allocation20 [shape = 's32[1]{0}', space=sflag, size = 0x4, scoped, tag = 'scoped memory for tpu_custom_call.1']
    #allocation21 [shape = 'u8[65536]{0}', space=vmem, size = 0x10000, scoped, tag = 'input window, operand 13']
    #allocation22 [shape = 'u8[131072]{0}', space=vmem, size = 0x20000, scoped, tag = 'input window, operand 15']
    #allocation23 [shape = 'u8[131072]{0}', space=vmem, size = 0x20000, scoped, tag = 'input window, operand 16']
    #allocation24 [shape = 'u8[16384]{0}', space=vmem, size = 0x4000, scoped, tag = 'input window, operand 18']
    #allocation25 [shape = 'u8[32768]{0}', space=vmem, size = 0x8000, scoped, tag = 'output window, operand 0, single buffered']
    #allocation26 [shape = 'u8[32768]{0}', space=vmem, size = 0x8000, scoped, tag = 'output window, operand 1, single buffered']
    #allocation27 [shape = 's32[1]{0}', space=sflag, size = 0x4, scoped, tag = 'scoped memory for tpu_custom_call.1']
    %26 = vsyncpa [#allocation5], 0
    %27 = vsyncpa [#allocation8], 0
    %28 = vsyncpa [#allocation11], 0
    %29 = vsyncpa [#allocation14], 0
    %30 = vsyncpa [#allocation17], 0
    %31 = vsyncpa [#allocation20], 0
    %32 = vsyncpa [#allocation6], 0
    %33 = vsyncpa [#allocation27], 0
    loop: start=0, step=1, limit=4
    $region2: #{tpu_custom_call.1} parent=1 // loop_pre_header
      _
    $region3: #{tpu_custom_call.1} parent=1 // loop_header
      %s35 = sphi 0, %s39
      %p36 = scmp.ge.s32.totalorder %s35, 4
      %s43 = sphi 0, %s43
      %s45 = sphi 0, %s43
      %s46 = sphi 0, %s45
      %s60 = sphi 0, %s46
      %s64 = sphi 0, %s64
      %s66 = sphi 0, %s64
      %s67 = sphi 0, %s66
      %s81 = sphi 0, %s67
      %s85 = sphi 0, %s85
      %s87 = sphi 0, %s85
      %s88 = sphi 0, %s87
      %s102 = sphi 0, %s88
      %s106 = sphi 0, %s106
      %s108 = sphi 0, %s106
      %s109 = sphi 0, %s108
      %s123 = sphi 0, %s109
      %s127 = sphi 0, %s127
      %s129 = sphi 0, %s127
      %s130 = sphi 0, %s129
      %s144 = sphi 0, %s130
      %s148 = sphi 0, %s148
      %s150 = sphi 0, %s148
      %s151 = sphi 0, %s150
      %s165 = sphi 0, %s151
      %s169 = sphi 0, %s169
      %s171 = sphi 0, %s169
      %s172 = sphi 0, %s171
      %s186 = sphi 0, %s172
      %s190 = sphi 0, %s190
      %s192 = sphi 0, %s190
      %s193 = sphi 0, %s192
      %s207 = sphi 0, %s193
      %s211 = sphi 0, %s211
      %s213 = sphi 0, %s211
      %s214 = sphi 0, %s213
      %s228 = sphi 0, %s214
      %s232 = sphi 0, %s232
      %s234 = sphi 0, %s232
      %s235 = sphi 0, %s234
      %s249 = sphi 0, %s235
      %s253 = sphi 0, %s253
      %s255 = sphi 0, %s253
      %s256 = sphi 0, %s255
      %s270 = sphi 0, %s256
      %s274 = sphi 0, %s274
      %s276 = sphi 0, %s274
      %s277 = sphi 0, %s276
      %s291 = sphi 0, %s277
      %s295 = sphi 0, %s295
      %s297 = sphi 0, %s295
      %s298 = sphi 0, %s297
      %s312 = sphi 0, %s298
      %s318 = sphi 0, %s320
      %s321 = sphi 0, %s318
      %s322 = sphi 0, %s321
      %s338 = sphi 0, %s322
      %s344 = sphi 0, %s346
      %s347 = sphi 0, %s344
      %s348 = sphi 0, %s347
      %s364 = sphi 0, %s348
      %s370 = sphi 0, %s372
      %s373 = sphi 0, %s370
      %s374 = sphi 0, %s373
      %s390 = sphi 0, %s374
      %s396 = sphi 0, %s398
      %s399 = sphi 0, %s396
      %s400 = sphi 0, %s399
      %s416 = sphi 0, %s400
      %s422 = sphi 0, %s424
      %s425 = sphi 0, %s422
      %s426 = sphi 0, %s425
      %s442 = sphi 0, %s426
      %s448 = sphi 0, %s450
      %s451 = sphi 0, %s448
      %s452 = sphi 0, %s451
      %s468 = sphi 0, %s452
      %s472 = sphi 0, %s472
      %s474 = sphi 0, %s472
      %s475 = sphi 0, %s474
      %s489 = sphi 0, %s475
      %s493 = sphi 0, %s493
      %s495 = sphi 0, %s493
      %s496 = sphi 0, %s495
      %s510 = sphi 0, %s496
    $region4: #{tpu_custom_call.1} parent=1 // loop_header_branch
      %38 = sbr.rel (%p36) target = $region8
    $region5: #{tpu_custom_call.1} parent=1 // loop_body
      %s40 = ssub.s32 %s35, 1
      %s41 = ssub.s32 %s35, 2
      %s42 = sadd.s32 %s35, 1
      %s44 = sadd.s32 %s43, 1
      %p47 = scmp.eq.s32.totalorder %s35, 1
      %p48 = scmp.ne.s32.totalorder %s43, %s45
      %p49 = scmp.eq.s32.totalorder %s35, 0
      %p50 = por %p48, %p49
      %p51 = scmp.ne.s32.totalorder %s43, %s45
      %p52 = scmp.eq.s32.totalorder %s40, 1
      %p53 = por %p51, %p52
      %p54 = scmp.ne.s32.totalorder %s45, %s46
      %p55 = scmp.eq.s32.totalorder %s40, 0
      %p56 = por %p54, %p55
      %p57 = scmp.ne.s32.totalorder %s45, %s46
      %p58 = scmp.eq.s32.totalorder %s41, 1
      %p59 = por %p57, %p58
      %p61 = scmp.ne.s32.totalorder %s46, %s60
      %p62 = scmp.eq.s32.totalorder %s41, 0
      %p63 = por %p61, %p62
      %s65 = sadd.s32 %s64, 1
      %p68 = scmp.eq.s32.totalorder %s35, 1
      %p69 = scmp.ne.s32.totalorder %s64, %s66
      %p70 = scmp.eq.s32.totalorder %s35, 0
      %p71 = por %p69, %p70
      %p72 = scmp.ne.s32.totalorder %s64, %s66
      %p73 = scmp.eq.s32.totalorder %s40, 1
      %p74 = por %p72, %p73
      %p75 = scmp.ne.s32.totalorder %s66, %s67
      %p76 = scmp.eq.s32.totalorder %s40, 0
      %p77 = por %p75, %p76
      %p78 = scmp.ne.s32.totalorder %s66, %s67
      %p79 = scmp.eq.s32.totalorder %s41, 1
      %p80 = por %p78, %p79
      %p82 = scmp.ne.s32.totalorder %s67, %s81
      %p83 = scmp.eq.s32.totalorder %s41, 0
      %p84 = por %p82, %p83
      %s86 = sadd.s32 %s85, 1
      %p89 = scmp.eq.s32.totalorder %s35, 1
      %p90 = scmp.ne.s32.totalorder %s85, %s87
      %p91 = scmp.eq.s32.totalorder %s35, 0
      %p92 = por %p90, %p91
      %p93 = scmp.ne.s32.totalorder %s85, %s87
      %p94 = scmp.eq.s32.totalorder %s40, 1
      %p95 = por %p93, %p94
      %p96 = scmp.ne.s32.totalorder %s87, %s88
      %p97 = scmp.eq.s32.totalorder %s40, 0
      %p98 = por %p96, %p97
      %p99 = scmp.ne.s32.totalorder %s87, %s88
      %p100 = scmp.eq.s32.totalorder %s41, 1
      %p101 = por %p99, %p100
      %p103 = scmp.ne.s32.totalorder %s88, %s102
      %p104 = scmp.eq.s32.totalorder %s41, 0
      %p105 = por %p103, %p104
      %s107 = sadd.s32 %s106, 1
      %p110 = scmp.eq.s32.totalorder %s35, 1
      %p111 = scmp.ne.s32.totalorder %s106, %s108
      %p112 = scmp.eq.s32.totalorder %s35, 0
      %p113 = por %p111, %p112
      %p114 = scmp.ne.s32.totalorder %s106, %s108
      %p115 = scmp.eq.s32.totalorder %s40, 1
      %p116 = por %p114, %p115
      %p117 = scmp.ne.s32.totalorder %s108, %s109
      %p118 = scmp.eq.s32.totalorder %s40, 0
      %p119 = por %p117, %p118
      %p120 = scmp.ne.s32.totalorder %s108, %s109
      %p121 = scmp.eq.s32.totalorder %s41, 1
      %p122 = por %p120, %p121
      %p124 = scmp.ne.s32.totalorder %s109, %s123
      %p125 = scmp.eq.s32.totalorder %s41, 0
      %p126 = por %p124, %p125
      %s128 = sadd.s32 %s127, 1
      %p131 = scmp.eq.s32.totalorder %s35, 1
      %p132 = scmp.ne.s32.totalorder %s127, %s129
      %p133 = scmp.eq.s32.totalorder %s35, 0
      %p134 = por %p132, %p133
      %p135 = scmp.ne.s32.totalorder %s127, %s129
      %p136 = scmp.eq.s32.totalorder %s40, 1
      %p137 = por %p135, %p136
      %p138 = scmp.ne.s32.totalorder %s129, %s130
      %p139 = scmp.eq.s32.totalorder %s40, 0
      %p140 = por %p138, %p139
      %p141 = scmp.ne.s32.totalorder %s129, %s130
      %p142 = scmp.eq.s32.totalorder %s41, 1
      %p143 = por %p141, %p142
      %p145 = scmp.ne.s32.totalorder %s130, %s144
      %p146 = scmp.eq.s32.totalorder %s41, 0
      %p147 = por %p145, %p146
      %s149 = sadd.s32 %s148, 1
      %p152 = scmp.eq.s32.totalorder %s35, 1
      %p153 = scmp.ne.s32.totalorder %s148, %s150
      %p154 = scmp.eq.s32.totalorder %s35, 0
      %p155 = por %p153, %p154
      %p156 = scmp.ne.s32.totalorder %s148, %s150
      %p157 = scmp.eq.s32.totalorder %s40, 1
      %p158 = por %p156, %p157
      %p159 = scmp.ne.s32.totalorder %s150, %s151
      %p160 = scmp.eq.s32.totalorder %s40, 0
      %p161 = por %p159, %p160
      %p162 = scmp.ne.s32.totalorder %s150, %s151
      %p163 = scmp.eq.s32.totalorder %s41, 1
      %p164 = por %p162, %p163
      %p166 = scmp.ne.s32.totalorder %s151, %s165
      %p167 = scmp.eq.s32.totalorder %s41, 0
      %p168 = por %p166, %p167
      %s170 = sadd.s32 %s169, 1
      %p173 = scmp.eq.s32.totalorder %s35, 1
      %p174 = scmp.ne.s32.totalorder %s169, %s171
      %p175 = scmp.eq.s32.totalorder %s35, 0
      %p176 = por %p174, %p175
      %p177 = scmp.ne.s32.totalorder %s169, %s171
      %p178 = scmp.eq.s32.totalorder %s40, 1
      %p179 = por %p177, %p178
      %p180 = scmp.ne.s32.totalorder %s171, %s172
      %p181 = scmp.eq.s32.totalorder %s40, 0
      %p182 = por %p180, %p181
      %p183 = scmp.ne.s32.totalorder %s171, %s172
      %p184 = scmp.eq.s32.totalorder %s41, 1
      %p185 = por %p183, %p184
      %p187 = scmp.ne.s32.totalorder %s172, %s186
      %p188 = scmp.eq.s32.totalorder %s41, 0
      %p189 = por %p187, %p188
      %s191 = sadd.s32 %s190, 1
      %p194 = scmp.eq.s32.totalorder %s35, 1
      %p195 = scmp.ne.s32.totalorder %s190, %s192
      %p196 = scmp.eq.s32.totalorder %s35, 0
      %p197 = por %p195, %p196
      %p198 = scmp.ne.s32.totalorder %s190, %s192
      %p199 = scmp.eq.s32.totalorder %s40, 1
      %p200 = por %p198, %p199
      %p201 = scmp.ne.s32.totalorder %s192, %s193
      %p202 = scmp.eq.s32.totalorder %s40, 0
      %p203 = por %p201, %p202
      %p204 = scmp.ne.s32.totalorder %s192, %s193
      %p205 = scmp.eq.s32.totalorder %s41, 1
      %p206 = por %p204, %p205
      %p208 = scmp.ne.s32.totalorder %s193, %s207
      %p209 = scmp.eq.s32.totalorder %s41, 0
      %p210 = por %p208, %p209
      %s212 = sadd.s32 %s211, 1
      %p215 = scmp.eq.s32.totalorder %s35, 1
      %p216 = scmp.ne.s32.totalorder %s211, %s213
      %p217 = scmp.eq.s32.totalorder %s35, 0
      %p218 = por %p216, %p217
      %p219 = scmp.ne.s32.totalorder %s211, %s213
      %p220 = scmp.eq.s32.totalorder %s40, 1
      %p221 = por %p219, %p220
      %p222 = scmp.ne.s32.totalorder %s213, %s214
      %p223 = scmp.eq.s32.totalorder %s40, 0
      %p224 = por %p222, %p223
      %p225 = scmp.ne.s32.totalorder %s213, %s214
      %p226 = scmp.eq.s32.totalorder %s41, 1
      %p227 = por %p225, %p226
      %p229 = scmp.ne.s32.totalorder %s214, %s228
      %p230 = scmp.eq.s32.totalorder %s41, 0
      %p231 = por %p229, %p230
      %s233 = sadd.s32 %s232, 1
      %p236 = scmp.eq.s32.totalorder %s35, 1
      %p237 = scmp.ne.s32.totalorder %s232, %s234
      %p238 = scmp.eq.s32.totalorder %s35, 0
      %p239 = por %p237, %p238
      %p240 = scmp.ne.s32.totalorder %s232, %s234
      %p241 = scmp.eq.s32.totalorder %s40, 1
      %p242 = por %p240, %p241
      %p243 = scmp.ne.s32.totalorder %s234, %s235
      %p244 = scmp.eq.s32.totalorder %s40, 0
      %p245 = por %p243, %p244
      %p246 = scmp.ne.s32.totalorder %s234, %s235
      %p247 = scmp.eq.s32.totalorder %s41, 1
      %p248 = por %p246, %p247
      %p250 = scmp.ne.s32.totalorder %s235, %s249
      %p251 = scmp.eq.s32.totalorder %s41, 0
      %p252 = por %p250, %p251
      %s254 = sadd.s32 %s253, 1
      %p257 = scmp.eq.s32.totalorder %s35, 1
      %p258 = scmp.ne.s32.totalorder %s253, %s255
      %p259 = scmp.eq.s32.totalorder %s35, 0
      %p260 = por %p258, %p259
      %p261 = scmp.ne.s32.totalorder %s253, %s255
      %p262 = scmp.eq.s32.totalorder %s40, 1
      %p263 = por %p261, %p262
      %p264 = scmp.ne.s32.totalorder %s255, %s256
      %p265 = scmp.eq.s32.totalorder %s40, 0
      %p266 = por %p264, %p265
      %p267 = scmp.ne.s32.totalorder %s255, %s256
      %p268 = scmp.eq.s32.totalorder %s41, 1
      %p269 = por %p267, %p268
      %p271 = scmp.ne.s32.totalorder %s256, %s270
      %p272 = scmp.eq.s32.totalorder %s41, 0
      %p273 = por %p271, %p272
      %s275 = sadd.s32 %s274, 1
      %p278 = scmp.eq.s32.totalorder %s35, 1
      %p279 = scmp.ne.s32.totalorder %s274, %s276
      %p280 = scmp.eq.s32.totalorder %s35, 0
      %p281 = por %p279, %p280
      %p282 = scmp.ne.s32.totalorder %s274, %s276
      %p283 = scmp.eq.s32.totalorder %s40, 1
      %p284 = por %p282, %p283
      %p285 = scmp.ne.s32.totalorder %s276, %s277
      %p286 = scmp.eq.s32.totalorder %s40, 0
      %p287 = por %p285, %p286
      %p288 = scmp.ne.s32.totalorder %s276, %s277
      %p289 = scmp.eq.s32.totalorder %s41, 1
      %p290 = por %p288, %p289
      %p292 = scmp.ne.s32.totalorder %s277, %s291
      %p293 = scmp.eq.s32.totalorder %s41, 0
      %p294 = por %p292, %p293
      %s296 = sadd.s32 %s295, 1
      %p299 = scmp.eq.s32.totalorder %s35, 1
      %p300 = scmp.ne.s32.totalorder %s295, %s297
      %p301 = scmp.eq.s32.totalorder %s35, 0
      %p302 = por %p300, %p301
      %p303 = scmp.ne.s32.totalorder %s295, %s297
      %p304 = scmp.eq.s32.totalorder %s40, 1
      %p305 = por %p303, %p304
      %p306 = scmp.ne.s32.totalorder %s297, %s298
      %p307 = scmp.eq.s32.totalorder %s40, 0
      %p308 = por %p306, %p307
      %p309 = scmp.ne.s32.totalorder %s297, %s298
      %p310 = scmp.eq.s32.totalorder %s41, 1
      %p311 = por %p309, %p310
      %p313 = scmp.ne.s32.totalorder %s298, %s312
      %p314 = scmp.eq.s32.totalorder %s41, 0
      %p315 = por %p313, %p314
      %s316 = ssub.s32 %s35, %s42
      %p317 = scmp.eq.s32.totalorder %s316, 0
      %s319 = sadd.s32 %s318, 1
      %s320 = scalar_select %p317, %s318, %s319
      %p323 = pneg %p317
      %p324 = scmp.eq.s32.totalorder %s35, 1
      %p325 = por %p323, %p324
      %p326 = scmp.ne.s32.totalorder %s318, %s321
      %p327 = scmp.eq.s32.totalorder %s35, 0
      %p328 = por %p326, %p327
      %p329 = scmp.ne.s32.totalorder %s318, %s321
      %p330 = scmp.eq.s32.totalorder %s40, 1
      %p331 = por %p329, %p330
      %p332 = scmp.ne.s32.totalorder %s321, %s322
      %p333 = scmp.eq.s32.totalorder %s40, 0
      %p334 = por %p332, %p333
      %p335 = scmp.ne.s32.totalorder %s321, %s322
      %p336 = scmp.eq.s32.totalorder %s41, 1
      %p337 = por %p335, %p336
      %p339 = scmp.ne.s32.totalorder %s322, %s338
      %p340 = scmp.eq.s32.totalorder %s41, 0
      %p341 = por %p339, %p340
      %s342 = ssub.s32 %s35, %s42
      %p343 = scmp.eq.s32.totalorder %s342, 0
      %s345 = sadd.s32 %s344, 1
      %s346 = scalar_select %p343, %s344, %s345
      %p349 = pneg %p343
      %p350 = scmp.eq.s32.totalorder %s35, 1
      %p351 = por %p349, %p350
      %p352 = scmp.ne.s32.totalorder %s344, %s347
      %p353 = scmp.eq.s32.totalorder %s35, 0
      %p354 = por %p352, %p353
      %p355 = scmp.ne.s32.totalorder %s344, %s347
      %p356 = scmp.eq.s32.totalorder %s40, 1
      %p357 = por %p355, %p356
      %p358 = scmp.ne.s32.totalorder %s347, %s348
      %p359 = scmp.eq.s32.totalorder %s40, 0
      %p360 = por %p358, %p359
      %p361 = scmp.ne.s32.totalorder %s347, %s348
      %p362 = scmp.eq.s32.totalorder %s41, 1
      %p363 = por %p361, %p362
      %p365 = scmp.ne.s32.totalorder %s348, %s364
      %p366 = scmp.eq.s32.totalorder %s41, 0
      %p367 = por %p365, %p366
      %s368 = ssub.s32 %s35, %s42
      %p369 = scmp.eq.s32.totalorder %s368, 0
      %s371 = sadd.s32 %s370, 1
      %s372 = scalar_select %p369, %s370, %s371
      %p375 = pneg %p369
      %p376 = scmp.eq.s32.totalorder %s35, 1
      %p377 = por %p375, %p376
      %p378 = scmp.ne.s32.totalorder %s370, %s373
      %p379 = scmp.eq.s32.totalorder %s35, 0
      %p380 = por %p378, %p379
      %p381 = scmp.ne.s32.totalorder %s370, %s373
      %p382 = scmp.eq.s32.totalorder %s40, 1
      %p383 = por %p381, %p382
      %p384 = scmp.ne.s32.totalorder %s373, %s374
      %p385 = scmp.eq.s32.totalorder %s40, 0
      %p386 = por %p384, %p385
      %p387 = scmp.ne.s32.totalorder %s373, %s374
      %p388 = scmp.eq.s32.totalorder %s41, 1
      %p389 = por %p387, %p388
      %p391 = scmp.ne.s32.totalorder %s374, %s390
      %p392 = scmp.eq.s32.totalorder %s41, 0
      %p393 = por %p391, %p392
      %s394 = ssub.s32 %s35, %s42
      %p395 = scmp.eq.s32.totalorder %s394, 0
      %s397 = sadd.s32 %s396, 1
      %s398 = scalar_select %p395, %s396, %s397
      %p401 = pneg %p395
      %p402 = scmp.eq.s32.totalorder %s35, 1
      %p403 = por %p401, %p402
      %p404 = scmp.ne.s32.totalorder %s396, %s399
      %p405 = scmp.eq.s32.totalorder %s35, 0
      %p406 = por %p404, %p405
      %p407 = scmp.ne.s32.totalorder %s396, %s399
      %p408 = scmp.eq.s32.totalorder %s40, 1
      %p409 = por %p407, %p408
      %p410 = scmp.ne.s32.totalorder %s399, %s400
      %p411 = scmp.eq.s32.totalorder %s40, 0
      %p412 = por %p410, %p411
      %p413 = scmp.ne.s32.totalorder %s399, %s400
      %p414 = scmp.eq.s32.totalorder %s41, 1
      %p415 = por %p413, %p414
      %p417 = scmp.ne.s32.totalorder %s400, %s416
      %p418 = scmp.eq.s32.totalorder %s41, 0
      %p419 = por %p417, %p418
      %s420 = ssub.s32 %s35, %s42
      %p421 = scmp.eq.s32.totalorder %s420, 0
      %s423 = sadd.s32 %s422, 1
      %s424 = scalar_select %p421, %s422, %s423
      %p427 = pneg %p421
      %p428 = scmp.eq.s32.totalorder %s35, 1
      %p429 = por %p427, %p428
      %p430 = scmp.ne.s32.totalorder %s422, %s425
      %p431 = scmp.eq.s32.totalorder %s35, 0
      %p432 = por %p430, %p431
      %p433 = scmp.ne.s32.totalorder %s422, %s425
      %p434 = scmp.eq.s32.totalorder %s40, 1
      %p435 = por %p433, %p434
      %p436 = scmp.ne.s32.totalorder %s425, %s426
      %p437 = scmp.eq.s32.totalorder %s40, 0
      %p438 = por %p436, %p437
      %p439 = scmp.ne.s32.totalorder %s425, %s426
      %p440 = scmp.eq.s32.totalorder %s41, 1
      %p441 = por %p439, %p440
      %p443 = scmp.ne.s32.totalorder %s426, %s442
      %p444 = scmp.eq.s32.totalorder %s41, 0
      %p445 = por %p443, %p444
      %s446 = ssub.s32 %s35, %s42
      %p447 = scmp.eq.s32.totalorder %s446, 0
      %s449 = sadd.s32 %s448, 1
      %s450 = scalar_select %p447, %s448, %s449
      %p453 = pneg %p447
      %p454 = scmp.eq.s32.totalorder %s35, 1
      %p455 = por %p453, %p454
      %p456 = scmp.ne.s32.totalorder %s448, %s451
      %p457 = scmp.eq.s32.totalorder %s35, 0
      %p458 = por %p456, %p457
      %p459 = scmp.ne.s32.totalorder %s448, %s451
      %p460 = scmp.eq.s32.totalorder %s40, 1
      %p461 = por %p459, %p460
      %p462 = scmp.ne.s32.totalorder %s451, %s452
      %p463 = scmp.eq.s32.totalorder %s40, 0
      %p464 = por %p462, %p463
      %p465 = scmp.ne.s32.totalorder %s451, %s452
      %p466 = scmp.eq.s32.totalorder %s41, 1
      %p467 = por %p465, %p466
      %p469 = scmp.ne.s32.totalorder %s452, %s468
      %p470 = scmp.eq.s32.totalorder %s41, 0
      %p471 = por %p469, %p470
      %s473 = sadd.s32 %s472, 1
      %p476 = scmp.eq.s32.totalorder %s35, 1
      %p477 = scmp.ne.s32.totalorder %s472, %s474
      %p478 = scmp.eq.s32.totalorder %s35, 0
      %p479 = por %p477, %p478
      %p480 = scmp.ne.s32.totalorder %s472, %s474
      %p481 = scmp.eq.s32.totalorder %s40, 1
      %p482 = por %p480, %p481
      %p483 = scmp.ne.s32.totalorder %s474, %s475
      %p484 = scmp.eq.s32.totalorder %s40, 0
      %p485 = por %p483, %p484
      %p486 = scmp.ne.s32.totalorder %s474, %s475
      %p487 = scmp.eq.s32.totalorder %s41, 1
      %p488 = por %p486, %p487
      %p490 = scmp.ne.s32.totalorder %s475, %s489
      %p491 = scmp.eq.s32.totalorder %s41, 0
      %p492 = por %p490, %p491
      %s494 = sadd.s32 %s493, 1
      %p497 = scmp.eq.s32.totalorder %s35, 1
      %p498 = scmp.ne.s32.totalorder %s493, %s495
      %p499 = scmp.eq.s32.totalorder %s35, 0
      %p500 = por %p498, %p499
      %p501 = scmp.ne.s32.totalorder %s493, %s495
      %p502 = scmp.eq.s32.totalorder %s40, 1
      %p503 = por %p501, %p502
      %p504 = scmp.ne.s32.totalorder %s495, %s496
      %p505 = scmp.eq.s32.totalorder %s40, 0
      %p506 = por %p504, %p505
      %p507 = scmp.ne.s32.totalorder %s495, %s496
      %p508 = scmp.eq.s32.totalorder %s41, 1
      %p509 = por %p507, %p508
      %p511 = scmp.ne.s32.totalorder %s496, %s510
      %p512 = scmp.eq.s32.totalorder %s41, 0
      %p513 = por %p511, %p512
      %p514 = scmp.le.s32.totalorder 1, %s35
      %p515 = scmp.lt.s32.totalorder %s35, 3
      %p516 = pnand %p514, %p515
      %p517 = pneg %p516
      // Predicated region
      $region9: #{tpu_custom_call.1} parent=5 // pred_check
        _
      $region10: #{tpu_custom_call.1} parent=5 // pred_check_branch
        %519 = sbr.rel (%p516) target = $region12
      $region11: #{tpu_custom_call.1} parent=5 // pred_region
        %s520 = ssub.s32 %s35, 1
        // Predicated region
        $region13: #{tpu_custom_call.1} parent=11 // pred_check
          %p521 = pneg %p56
        $region14: #{tpu_custom_call.1} parent=11 // pred_check_branch
          %523 = sbr.rel (%p521) target = $region16
        $region15: #{tpu_custom_call.1} parent=11 // pred_region
          _
        $region16: #{tpu_custom_call.1} parent=11 // pred_fallthru
          _
        // Predicated region
        $region17: #{tpu_custom_call.1} parent=11 // pred_check
          %p524 = pneg %p77
        $region18: #{tpu_custom_call.1} parent=11 // pred_check_branch
          %526 = sbr.rel (%p524) target = $region20
        $region19: #{tpu_custom_call.1} parent=11 // pred_region
          %s528 = ssub.s32 1024, 1024
          %529 = vsyncadd [#allocation5], %s528
          %s530 = sshll.u32 [#allocation4], 4
          %s531 = int_to_ptr.vmem [resolvable:$true] %s530
          %536 = dma.hbm_to_vmem [thread:$0]  %s1, 1024, %s531, [#allocation5], 64, 64, 4
        $region20: #{tpu_custom_call.1} parent=11 // pred_fallthru
          _
        // Predicated region
        $region21: #{tpu_custom_call.1} parent=11 // pred_check
          %p537 = pneg %p98
        $region22: #{tpu_custom_call.1} parent=11 // pred_check_branch
          %539 = sbr.rel (%p537) target = $region24
        $region23: #{tpu_custom_call.1} parent=11 // pred_region
          %s541 = ssub.s32 1024, 1024
          %542 = vsyncadd [#allocation8], %s541
          %s543 = sshll.u32 [#allocation7], 4
          %s544 = int_to_ptr.vmem [resolvable:$true] %s543
          %549 = dma.hbm_to_vmem [thread:$0]  %s2, 1024, %s544, [#allocation8], 64, 64, 4
        $region24: #{tpu_custom_call.1} parent=11 // pred_fallthru
          _
        // Predicated region
        $region25: #{tpu_custom_call.1} parent=11 // pred_check
          %p550 = pneg %p119
        $region26: #{tpu_custom_call.1} parent=11 // pred_check_branch
          %552 = sbr.rel (%p550) target = $region28
        $region27: #{tpu_custom_call.1} parent=11 // pred_region
          %s554 = ssub.s32 1024, 1024
          %555 = vsyncadd [#allocation8], %s554
          %s556 = sshll.u32 [#allocation9], 4
          %s557 = int_to_ptr.vmem [resolvable:$true] %s556
          %562 = dma.hbm_to_vmem [thread:$0]  %s3, 1024, %s557, [#allocation8], 64, 64, 4
        $region28: #{tpu_custom_call.1} parent=11 // pred_fallthru
          _
        // Predicated region
        $region29: #{tpu_custom_call.1} parent=11 // pred_check
          %p563 = pneg %p140
        $region30: #{tpu_custom_call.1} parent=11 // pred_check_branch
          %565 = sbr.rel (%p563) target = $region32
        $region31: #{tpu_custom_call.1} parent=11 // pred_region
          %s567 = ssub.s32 1024, 1024
          %568 = vsyncadd [#allocation11], %s567
          %s569 = sshll.u32 [#allocation10], 4
          %s570 = int_to_ptr.vmem [resolvable:$true] %s569
          %575 = dma.hbm_to_vmem [thread:$0]  %s4, 1024, %s570, [#allocation11], 64, 64, 4
        $region32: #{tpu_custom_call.1} parent=11 // pred_fallthru
          _
        // Predicated region
        $region33: #{tpu_custom_call.1} parent=11 // pred_check
          %p576 = pneg %p161
        $region34: #{tpu_custom_call.1} parent=11 // pred_check_branch
          %578 = sbr.rel (%p576) target = $region36
        $region35: #{tpu_custom_call.1} parent=11 // pred_region
          %s580 = ssub.s32 1024, 1024
          %581 = vsyncadd [#allocation11], %s580
          %s582 = sshll.u32 [#allocation12], 4
          %s583 = int_to_ptr.vmem [resolvable:$true] %s582
          %588 = dma.hbm_to_vmem [thread:$0]  %s5, 1024, %s583, [#allocation11], 64, 64, 4
        $region36: #{tpu_custom_call.1} parent=11 // pred_fallthru
          _
        // Predicated region
        $region37: #{tpu_custom_call.1} parent=11 // pred_check
          %p589 = pneg %p182
        $region38: #{tpu_custom_call.1} parent=11 // pred_check_branch
          %591 = sbr.rel (%p589) target = $region40
        $region39: #{tpu_custom_call.1} parent=11 // pred_region
          %s593 = ssub.s32 1024, 1024
          %594 = vsyncadd [#allocation14], %s593
          %s595 = sshll.u32 [#allocation13], 4
          %s596 = int_to_ptr.vmem [resolvable:$true] %s595
          %601 = dma.hbm_to_vmem [thread:$0]  %s6, 1024, %s596, [#allocation14], 64, 64, 4
        $region40: #{tpu_custom_call.1} parent=11 // pred_fallthru
          _
        // Predicated region
        $region41: #{tpu_custom_call.1} parent=11 // pred_check
          %p602 = pneg %p203
        $region42: #{tpu_custom_call.1} parent=11 // pred_check_branch
          %604 = sbr.rel (%p602) target = $region44
        $region43: #{tpu_custom_call.1} parent=11 // pred_region
          %s606 = ssub.s32 1024, 1024
          %607 = vsyncadd [#allocation14], %s606
          %s608 = sshll.u32 [#allocation15], 4
          %s609 = int_to_ptr.vmem [resolvable:$true] %s608
          %614 = dma.hbm_to_vmem [thread:$0]  %s7, 1024, %s609, [#allocation14], 64, 64, 4
        $region44: #{tpu_custom_call.1} parent=11 // pred_fallthru
          _
        // Predicated region
        $region45: #{tpu_custom_call.1} parent=11 // pred_check
          %p615 = pneg %p224
        $region46: #{tpu_custom_call.1} parent=11 // pred_check_branch
          %617 = sbr.rel (%p615) target = $region48
        $region47: #{tpu_custom_call.1} parent=11 // pred_region
          _
        $region48: #{tpu_custom_call.1} parent=11 // pred_fallthru
          _
        // Predicated region
        $region49: #{tpu_custom_call.1} parent=11 // pred_check
          %p618 = pneg %p245
        $region50: #{tpu_custom_call.1} parent=11 // pred_check_branch
          %620 = sbr.rel (%p618) target = $region52
        $region51: #{tpu_custom_call.1} parent=11 // pred_region
          _
        $region52: #{tpu_custom_call.1} parent=11 // pred_fallthru
          _
        // Predicated region
        $region53: #{tpu_custom_call.1} parent=11 // pred_check
          %p621 = pneg %p266
        $region54: #{tpu_custom_call.1} parent=11 // pred_check_branch
          %623 = sbr.rel (%p621) target = $region56
        $region55: #{tpu_custom_call.1} parent=11 // pred_region
          %s625 = ssub.s32 1024, 1024
          %626 = vsyncadd [#allocation17], %s625
          %s627 = sshll.u32 [#allocation16], 4
          %s628 = int_to_ptr.vmem [resolvable:$true] %s627
          %633 = dma.hbm_to_vmem [thread:$0]  %s10, 1024, %s628, [#allocation17], 64, 64, 4
        $region56: #{tpu_custom_call.1} parent=11 // pred_fallthru
          _
        // Predicated region
        $region57: #{tpu_custom_call.1} parent=11 // pred_check
          %p634 = pneg %p287
        $region58: #{tpu_custom_call.1} parent=11 // pred_check_branch
          %636 = sbr.rel (%p634) target = $region60
        $region59: #{tpu_custom_call.1} parent=11 // pred_region
          %s638 = ssub.s32 1024, 1024
          %639 = vsyncadd [#allocation17], %s638
          %s640 = sshll.u32 [#allocation18], 4
          %s641 = int_to_ptr.vmem [resolvable:$true] %s640
          %646 = dma.hbm_to_vmem [thread:$0]  %s11, 1024, %s641, [#allocation17], 64, 64, 4
        $region60: #{tpu_custom_call.1} parent=11 // pred_fallthru
          _
        // Predicated region
        $region61: #{tpu_custom_call.1} parent=11 // pred_check
          %p647 = pneg %p308
        $region62: #{tpu_custom_call.1} parent=11 // pred_check_branch
          %649 = sbr.rel (%p647) target = $region64
        $region63: #{tpu_custom_call.1} parent=11 // pred_region
          %s651 = ssub.s32 128, 128
          %652 = vsyncadd [#allocation20], %s651
          %s654 = sshll.u32 [#allocation19], 4
          %s655 = int_to_ptr.vmem [resolvable:$true] %s654
          %657 = dma.hbm_to_vmem [thread:$0]  %s12, 128, %s655, [#allocation20]
        $region64: #{tpu_custom_call.1} parent=11 // pred_fallthru
          _
      $region12: #{tpu_custom_call.1} parent=5 // pred_fallthru
        _
      %p658 = scmp.lt.s32.totalorder %s35, 2
      // Predicated region
      $region65: #{tpu_custom_call.1} parent=5 // pred_check
        %p659 = pneg %p658
      $region66: #{tpu_custom_call.1} parent=5 // pred_check_branch
        %661 = sbr.rel (%p659) target = $region68
      $region67: #{tpu_custom_call.1} parent=5 // pred_region
        // Predicated region
        $region69: #{tpu_custom_call.1} parent=67 // pred_check
          %p662 = pneg %p328
        $region70: #{tpu_custom_call.1} parent=67 // pred_check_branch
          %664 = sbr.rel (%p662) target = $region72
        $region71: #{tpu_custom_call.1} parent=67 // pred_region
          %s665 = sand.u32 %s35, 1
          %s666 = scalar_lea.sflag [#allocation5], %s665
          %s667 = sand.u32 %s318, 1
          %s668 = smul.addr %s667, 64
          %s669 = scalar_lea.vmem [#allocation21], %s668
          %s671 = ssub.s32 1024, 1024
          %672 = vsyncadd %s666, %s671
          %s673 = smul.addr %s35, 16
          %s674 = smul.addr %s673, 64
          %s675 = scalar_lea.hbm %s13, %s674
          %s676 = sshll.u32 %s669, 4
          %s677 = int_to_ptr.vmem [resolvable:$true] %s676
          %682 = dma.hbm_to_vmem [thread:$0]  %s675, 1024, %s677, %s666, 64, 64, 4
        $region72: #{tpu_custom_call.1} parent=67 // pred_fallthru
          _
        // Predicated region
        $region73: #{tpu_custom_call.1} parent=67 // pred_check
          %p683 = pneg %p354
        $region74: #{tpu_custom_call.1} parent=67 // pred_check_branch
          %685 = sbr.rel (%p683) target = $region76
        $region75: #{tpu_custom_call.1} parent=67 // pred_region
          %p686 = scmp.lt.s32.totalorder %s35, 1
          %s687 = scalar_select %p686, %s35, 1
          %s688 = smul.addr %s687, 32
          %s689 = smul.addr %s688, 4
          %s690 = scalar_lea.vmem %s14, %s689
        $region76: #{tpu_custom_call.1} parent=67 // pred_fallthru
          _
        // Predicated region
        $region77: #{tpu_custom_call.1} parent=67 // pred_check
          %p691 = pneg %p380
        $region78: #{tpu_custom_call.1} parent=67 // pred_check_branch
          %693 = sbr.rel (%p691) target = $region80
        $region79: #{tpu_custom_call.1} parent=67 // pred_region
          %s694 = sand.u32 %s35, 1
          %s695 = scalar_lea.sflag [#allocation5], %s694
          %s696 = sand.u32 %s370, 1
          %s697 = smul.addr %s696, 128
          %s698 = scalar_lea.vmem [#allocation22], %s697
          %s700 = ssub.s32 2048, 2048
          %701 = vsyncadd %s695, %s700
          %s702 = smul.addr %s35, 32
          %s703 = smul.addr %s702, 64
          %s704 = scalar_lea.hbm %s15, %s703
          %s705 = sshll.u32 %s698, 4
          %s706 = int_to_ptr.vmem [resolvable:$true] %s705
          %711 = dma.hbm_to_vmem [thread:$0]  %s704, 2048, %s706, %s695, 64, 64, 4
        $region80: #{tpu_custom_call.1} parent=67 // pred_fallthru
          _
        // Predicated region
        $region81: #{tpu_custom_call.1} parent=67 // pred_check
          %p712 = pneg %p406
        $region82: #{tpu_custom_call.1} parent=67 // pred_check_branch
          %714 = sbr.rel (%p712) target = $region84
        $region83: #{tpu_custom_call.1} parent=67 // pred_region
          %s715 = sand.u32 %s35, 1
          %s716 = scalar_lea.sflag [#allocation5], %s715
          %s717 = sand.u32 %s396, 1
          %s718 = smul.addr %s717, 128
          %s719 = scalar_lea.vmem [#allocation23], %s718
          %s721 = ssub.s32 2048, 2048
          %722 = vsyncadd %s716, %s721
          %s723 = smul.addr %s35, 32
          %s724 = smul.addr %s723, 64
          %s725 = scalar_lea.hbm %s16, %s724
          %s726 = sshll.u32 %s719, 4
          %s727 = int_to_ptr.vmem [resolvable:$true] %s726
          %732 = dma.hbm_to_vmem [thread:$0]  %s725, 2048, %s727, %s716, 64, 64, 4
        $region84: #{tpu_custom_call.1} parent=67 // pred_fallthru
          _
        // Predicated region
        $region85: #{tpu_custom_call.1} parent=67 // pred_check
          %p733 = pneg %p432
        $region86: #{tpu_custom_call.1} parent=67 // pred_check_branch
          %735 = sbr.rel (%p733) target = $region88
        $region87: #{tpu_custom_call.1} parent=67 // pred_region
          %p736 = scmp.lt.s32.totalorder %s35, 1
          %s737 = scalar_select %p736, %s35, 1
          %s738 = smul.addr %s737, 8
          %s739 = scalar_lea.vmem %s17, %s738
        $region88: #{tpu_custom_call.1} parent=67 // pred_fallthru
          _
        // Predicated region
        $region89: #{tpu_custom_call.1} parent=67 // pred_check
          %p740 = pneg %p458
        $region90: #{tpu_custom_call.1} parent=67 // pred_check_branch
          %742 = sbr.rel (%p740) target = $region92
        $region91: #{tpu_custom_call.1} parent=67 // pred_region
          %s743 = sand.u32 %s35, 1
          %s744 = scalar_lea.sflag [#allocation5], %s743
          %s745 = sand.u32 %s448, 1
          %s746 = smul.addr %s745, 16
          %s747 = scalar_lea.vmem [#allocation24], %s746
          %s749 = ssub.s32 256, 256
          %750 = vsyncadd %s744, %s749
          %s751 = smul.addr %s35, 2
          %s752 = smul.addr %s751, 128
          %s753 = scalar_lea.hbm %s18, %s752
          %s754 = sshll.u32 %s747, 4
          %s755 = int_to_ptr.vmem [resolvable:$true] %s754
          %760 = dma.hbm_to_vmem [thread:$0]  %s753, 256, %s755, %s744, 128, 128, 8
        $region92: #{tpu_custom_call.1} parent=67 // pred_fallthru
          _
      $region68: #{tpu_custom_call.1} parent=5 // pred_fallthru
        _
      %p761 = scmp.le.s32.totalorder 1, %s35
      %p762 = scmp.lt.s32.totalorder %s35, 3
      %p763 = pnand %p761, %p762
      %p764 = pneg %p763
      // Predicated region
      $region93: #{tpu_custom_call.1} parent=5 // pred_check
        _
      $region94: #{tpu_custom_call.1} parent=5 // pred_check_branch
        %766 = sbr.rel (%p763) target = $region96
      $region95: #{tpu_custom_call.1} parent=5 // pred_region
        %s767 = ssub.s32 %s35, 1
        // Predicated region
        $region97: #{tpu_custom_call.1} parent=95 // pred_check
          %p768 = pneg %p77
        $region98: #{tpu_custom_call.1} parent=95 // pred_check_branch
          %770 = sbr.rel (%p768) target = $region100
        $region99: #{tpu_custom_call.1} parent=95 // pred_region
          %771 = dma.done [#allocation5], 1024
        $region100: #{tpu_custom_call.1} parent=95 // pred_fallthru
          _
        // Predicated region
        $region101: #{tpu_custom_call.1} parent=95 // pred_check
          %p772 = pneg %p98
        $region102: #{tpu_custom_call.1} parent=95 // pred_check_branch
          %774 = sbr.rel (%p772) target = $region104
        $region103: #{tpu_custom_call.1} parent=95 // pred_region
          %775 = dma.done [#allocation8], 1024
        $region104: #{tpu_custom_call.1} parent=95 // pred_fallthru
          _
        // Predicated region
        $region105: #{tpu_custom_call.1} parent=95 // pred_check
          %p776 = pneg %p119
        $region106: #{tpu_custom_call.1} parent=95 // pred_check_branch
          %778 = sbr.rel (%p776) target = $region108
        $region107: #{tpu_custom_call.1} parent=95 // pred_region
          %779 = dma.done [#allocation8], 1024
        $region108: #{tpu_custom_call.1} parent=95 // pred_fallthru
          _
        // Predicated region
        $region109: #{tpu_custom_call.1} parent=95 // pred_check
          %p780 = pneg %p140
        $region110: #{tpu_custom_call.1} parent=95 // pred_check_branch
          %782 = sbr.rel (%p780) target = $region112
        $region111: #{tpu_custom_call.1} parent=95 // pred_region
          %783 = dma.done [#allocation11], 1024
        $region112: #{tpu_custom_call.1} parent=95 // pred_fallthru
          _
        // Predicated region
        $region113: #{tpu_custom_call.1} parent=95 // pred_check
          %p784 = pneg %p161
        $region114: #{tpu_custom_call.1} parent=95 // pred_check_branch
          %786 = sbr.rel (%p784) target = $region116
        $region115: #{tpu_custom_call.1} parent=95 // pred_region
          %787 = dma.done [#allocation11], 1024
        $region116: #{tpu_custom_call.1} parent=95 // pred_fallthru
          _
        // Predicated region
        $region117: #{tpu_custom_call.1} parent=95 // pred_check
          %p788 = pneg %p182
        $region118: #{tpu_custom_call.1} parent=95 // pred_check_branch
          %790 = sbr.rel (%p788) target = $region120
        $region119: #{tpu_custom_call.1} parent=95 // pred_region
          %791 = dma.done [#allocation14], 1024
        $region120: #{tpu_custom_call.1} parent=95 // pred_fallthru
          _
        // Predicated region
        $region121: #{tpu_custom_call.1} parent=95 // pred_check
          %p792 = pneg %p203
        $region122: #{tpu_custom_call.1} parent=95 // pred_check_branch
          %794 = sbr.rel (%p792) target = $region124
        $region123: #{tpu_custom_call.1} parent=95 // pred_region
          %795 = dma.done [#allocation14], 1024
        $region124: #{tpu_custom_call.1} parent=95 // pred_fallthru
          _
        // Predicated region
        $region125: #{tpu_custom_call.1} parent=95 // pred_check
          %p796 = pneg %p266
        $region126: #{tpu_custom_call.1} parent=95 // pred_check_branch
          %798 = sbr.rel (%p796) target = $region128
        $region127: #{tpu_custom_call.1} parent=95 // pred_region
          %799 = dma.done [#allocation17], 1024
        $region128: #{tpu_custom_call.1} parent=95 // pred_fallthru
          _
        // Predicated region
        $region129: #{tpu_custom_call.1} parent=95 // pred_check
          %p800 = pneg %p287
        $region130: #{tpu_custom_call.1} parent=95 // pred_check_branch
          %802 = sbr.rel (%p800) target = $region132
        $region131: #{tpu_custom_call.1} parent=95 // pred_region
          %803 = dma.done [#allocation17], 1024
        $region132: #{tpu_custom_call.1} parent=95 // pred_fallthru
          _
        // Predicated region
        $region133: #{tpu_custom_call.1} parent=95 // pred_check
          %p804 = pneg %p308
        $region134: #{tpu_custom_call.1} parent=95 // pred_check_branch
          %806 = sbr.rel (%p804) target = $region136
        $region135: #{tpu_custom_call.1} parent=95 // pred_region
          %807 = dma.done [#allocation20], 128
        $region136: #{tpu_custom_call.1} parent=95 // pred_fallthru
          _
        %s808 = sand.u32 %s40, 1
        %s809 = scalar_lea.sflag [#allocation5], %s808
        %s810 = sand.u32 %s321, 1
        %s811 = smul.addr %s810, 64
        %s812 = scalar_lea.vmem [#allocation21], %s811
        // Predicated region
        $region137: #{tpu_custom_call.1} parent=95 // pred_check
          %p813 = pneg %p334
        $region138: #{tpu_custom_call.1} parent=95 // pred_check_branch
          %815 = sbr.rel (%p813) target = $region140
        $region139: #{tpu_custom_call.1} parent=95 // pred_region
          %816 = dma.done %s809, 1024
        $region140: #{tpu_custom_call.1} parent=95 // pred_fallthru
          _
        %s817 = sand.u32 %s40, 1
        %s818 = scalar_lea.sflag [#allocation5], %s817
        %s819 = sand.u32 %s373, 1
        %s820 = smul.addr %s819, 128
        %s821 = scalar_lea.vmem [#allocation22], %s820
        // Predicated region
        $region141: #{tpu_custom_call.1} parent=95 // pred_check
          %p822 = pneg %p386
        $region142: #{tpu_custom_call.1} parent=95 // pred_check_branch
          %824 = sbr.rel (%p822) target = $region144
        $region143: #{tpu_custom_call.1} parent=95 // pred_region
          %825 = dma.done %s818, 2048
        $region144: #{tpu_custom_call.1} parent=95 // pred_fallthru
          _
        %s826 = sand.u32 %s40, 1
        %s827 = scalar_lea.sflag [#allocation5], %s826
        %s828 = sand.u32 %s399, 1
        %s829 = smul.addr %s828, 128
        %s830 = scalar_lea.vmem [#allocation23], %s829
        // Predicated region
        $region145: #{tpu_custom_call.1} parent=95 // pred_check
          %p831 = pneg %p412
        $region146: #{tpu_custom_call.1} parent=95 // pred_check_branch
          %833 = sbr.rel (%p831) target = $region148
        $region147: #{tpu_custom_call.1} parent=95 // pred_region
          %834 = dma.done %s827, 2048
        $region148: #{tpu_custom_call.1} parent=95 // pred_fallthru
          _
        %s835 = sand.u32 %s40, 1
        %s836 = scalar_lea.sflag [#allocation5], %s835
        %s837 = sand.u32 %s451, 1
        %s838 = smul.addr %s837, 16
        %s839 = scalar_lea.vmem [#allocation24], %s838
        // Predicated region
        $region149: #{tpu_custom_call.1} parent=95 // pred_check
          %p840 = pneg %p464
        $region150: #{tpu_custom_call.1} parent=95 // pred_check_branch
          %842 = sbr.rel (%p840) target = $region152
        $region151: #{tpu_custom_call.1} parent=95 // pred_region
          %843 = dma.done %s836, 256
        $region152: #{tpu_custom_call.1} parent=95 // pred_fallthru
          _
        %p844 = pneg %p56
        %p845 = pneg %p53
        %p846 = pneg %p77
        %p847 = pneg %p74
        %p848 = pneg %p98
        %p849 = pneg %p95
        %p850 = pneg %p119
        %p851 = pneg %p116
        %p852 = pneg %p140
        %p853 = pneg %p137
        %p854 = pneg %p161
        %p855 = pneg %p158
        %p856 = pneg %p182
        %p857 = pneg %p179
        %p858 = pneg %p203
        %p859 = pneg %p200
        %p860 = pneg %p224
        %p861 = pneg %p221
        %p862 = pneg %p245
        %p863 = pneg %p242
        %p864 = pneg %p266
        %p865 = pneg %p263
        %p866 = pneg %p287
        %p867 = pneg %p284
        %p868 = pneg %p308
        %p869 = pneg %p305
        %s870 = sand.u32 %s40, 1
        %s871 = scalar_lea.sflag [#allocation5], %s870
        %s872 = sand.u32 %s321, 1
        %s873 = smul.addr %s872, 64
        %s874 = scalar_lea.vmem [#allocation21], %s873
        %p875 = pneg %p334
        %p876 = pneg %p331
        %p877 = scmp.lt.s32.totalorder %s40, 1
        %s878 = scalar_select %p877, %s40, 1
        %s879 = smul.addr %s878, 32
        %s880 = smul.addr %s879, 4
        %s881 = scalar_lea.vmem %s14, %s880
        %p882 = pneg %p360
        %p883 = pneg %p357
        %s884 = sand.u32 %s40, 1
        %s885 = scalar_lea.sflag [#allocation5], %s884
        %s886 = sand.u32 %s373, 1
        %s887 = smul.addr %s886, 128
        %s888 = scalar_lea.vmem [#allocation22], %s887
        %p889 = pneg %p386
        %p890 = pneg %p383
        %s891 = sand.u32 %s40, 1
        %s892 = scalar_lea.sflag [#allocation5], %s891
        %s893 = sand.u32 %s399, 1
        %s894 = smul.addr %s893, 128
        %s895 = scalar_lea.vmem [#allocation23], %s894
        %p896 = pneg %p412
        %p897 = pneg %p409
        %p898 = scmp.lt.s32.totalorder %s40, 1
        %s899 = scalar_select %p898, %s40, 1
        %s900 = smul.addr %s899, 8
        %s901 = scalar_lea.vmem %s17, %s900
        %p902 = pneg %p438
        %p903 = pneg %p435
        %s904 = sand.u32 %s40, 1
        %s905 = scalar_lea.sflag [#allocation5], %s904
        %s906 = sand.u32 %s451, 1
        %s907 = smul.addr %s906, 16
        %s908 = scalar_lea.vmem [#allocation24], %s907
        %p909 = pneg %p464
        %p910 = pneg %p461
        %p911 = pneg %p485
        %p912 = pneg %p482
        %p913 = pneg %p506
        %p914 = pneg %p503
        %p915 = scmp.lt.s32.totalorder %s40, 1
        %s916 = scalar_select %p915, %s40, 1
        %s917 = smul.addr %s916, 32
        %s918 = smul.addr %s917, 4
        %s919 = scalar_lea.vmem %s14, %s918
        %p920 = scmp.lt.s32.totalorder %s40, 1
        %s921 = scalar_select %p920, %s40, 1
        %s922 = smul.addr %s921, 8
        %s923 = scalar_lea.vmem %s17, %s922
        %p925 = scmp.eq.s32.totalorder %s40, 0
        // Predicated region
        $region153: #{tpu_custom_call.1} parent=95 // pred_check
          %p926 = pneg %p925
        $region154: #{tpu_custom_call.1} parent=95 // pred_check_branch
          %928 = sbr.rel (%p926) target = $region156
        $region155: #{tpu_custom_call.1} parent=95 // pred_region
          %v929 = vld [vmem:[#allocation19] sm:$0xff]
          %v930 = vld [vmem:[%s0] sm:$0xf]
          %v931 = vld [vmem:[%s0 + $0x4] sm:$0xf]
          %v932 = vld [vmem:[%s0 + $0x8] sm:$0xf]
          %v933 = vld [vmem:[%s0 + $0xc] sm:$0xf]
          %v934 = vld [vmem:[%s0 + $0x10] sm:$0xf]
          %v935 = vld [vmem:[%s0 + $0x14] sm:$0xf]
          %v936 = vld [vmem:[%s0 + $0x18] sm:$0xf]
          %v937 = vld [vmem:[%s0 + $0x1c] sm:$0xf]
          %v938 = vld [vmem:[%s0 + $0x20] sm:$0xf]
          %v939 = vld [vmem:[%s0 + $0x24] sm:$0xf]
          %v940 = vld [vmem:[%s0 + $0x28] sm:$0xf]
          %v941 = vld [vmem:[%s0 + $0x2c] sm:$0xf]
          %v942 = vld [vmem:[%s0 + $0x30] sm:$0xf]
          %v943 = vld [vmem:[%s0 + $0x34] sm:$0xf]
          %v944 = vld [vmem:[%s0 + $0x38] sm:$0xf]
          %v945 = vld [vmem:[%s0 + $0x3c] sm:$0xf]
          %v946 = vld [vmem:[#allocation16] sm:$0xf]
          %v947 = vld [vmem:[#allocation16 + $0x4] sm:$0xf]
          %v948 = vld [vmem:[#allocation16 + $0x8] sm:$0xf]
          %v949 = vld [vmem:[#allocation16 + $0xc] sm:$0xf]
          %v950 = vld [vmem:[#allocation16 + $0x10] sm:$0xf]
          %v951 = vld [vmem:[#allocation16 + $0x14] sm:$0xf]
          %v952 = vld [vmem:[#allocation16 + $0x18] sm:$0xf]
          %v953 = vld [vmem:[#allocation16 + $0x1c] sm:$0xf]
          %v954 = vld [vmem:[#allocation16 + $0x20] sm:$0xf]
          %v955 = vld [vmem:[#allocation16 + $0x24] sm:$0xf]
          %v956 = vld [vmem:[#allocation16 + $0x28] sm:$0xf]
          %v957 = vld [vmem:[#allocation16 + $0x2c] sm:$0xf]
          %v958 = vld [vmem:[#allocation16 + $0x30] sm:$0xf]
          %v959 = vld [vmem:[#allocation16 + $0x34] sm:$0xf]
          %v960 = vld [vmem:[#allocation16 + $0x38] sm:$0xf]
          %v961 = vld [vmem:[#allocation16 + $0x3c] sm:$0xf]
          %v962 = vlaneseq
          %v963 = vshrl.u32 %v962, 7
          %v964 = vsub.s32 0, %v963
          %v965 = vrot.slane %v929, %v964
          %v982 = vunpack.c.l.b16 %v930
          %v983 = vunpack.c.l.b16 %v931
          %v984 = vunpack.c.l.b16 %v932
          %v985 = vunpack.c.l.b16 %v933
          %v986 = vunpack.c.l.b16 %v934
          %v987 = vunpack.c.l.b16 %v935
          %v988 = vunpack.c.l.b16 %v936
          %v989 = vunpack.c.l.b16 %v937
          %v990 = vunpack.c.l.b16 %v938
          %v991 = vunpack.c.l.b16 %v939
          %v992 = vunpack.c.l.b16 %v940
          %v993 = vunpack.c.l.b16 %v941
          %v994 = vunpack.c.l.b16 %v942
          %v995 = vunpack.c.l.b16 %v943
          %v996 = vunpack.c.l.b16 %v944
          %v997 = vunpack.c.l.b16 %v945
          %v998 = vpack.c.b16 %v983, %v982
          %v999 = vpack.c.b16 %v985, %v984
          %v1000 = vpack.c.b16 %v987, %v986
          %v1001 = vpack.c.b16 %v989, %v988
          %v1002 = vpack.c.b16 %v991, %v990
          %v1003 = vpack.c.b16 %v993, %v992
          %v1004 = vpack.c.b16 %v995, %v994
          %v1005 = vpack.c.b16 %v997, %v996
          %v1030 = vunpack.c.l.b16 %v946
          %v1031 = vunpack.c.l.b16 %v947
          %v1032 = vunpack.c.l.b16 %v948
          %v1033 = vunpack.c.l.b16 %v949
          %v1034 = vunpack.c.l.b16 %v950
          %v1035 = vunpack.c.l.b16 %v951
          %v1036 = vunpack.c.l.b16 %v952
          %v1037 = vunpack.c.l.b16 %v953
          %v1038 = vunpack.c.l.b16 %v954
          %v1039 = vunpack.c.l.b16 %v955
          %v1040 = vunpack.c.l.b16 %v956
          %v1041 = vunpack.c.l.b16 %v957
          %v1042 = vunpack.c.l.b16 %v958
          %v1043 = vunpack.c.l.b16 %v959
          %v1044 = vunpack.c.l.b16 %v960
          %v1045 = vunpack.c.l.b16 %v961
          %v1046 = vpack.c.b16 %v1031, %v1030
          %v1047 = vpack.c.b16 %v1033, %v1032
          %v1048 = vpack.c.b16 %v1035, %v1034
          %v1049 = vpack.c.b16 %v1037, %v1036
          %v1050 = vpack.c.b16 %v1039, %v1038
          %v1051 = vpack.c.b16 %v1041, %v1040
          %v1052 = vpack.c.b16 %v1043, %v1042
          %v1053 = vpack.c.b16 %v1045, %v1044
          %1062 = vmatprep.subr.bf16.mxu0 0
          %1063 = vmatpush1.bf16.msra.mxu0 %v1046
          %1064 = vmatprep.subr.bf16.mxu0 0
          %1065 = vmatpush1.bf16.msra.mxu0 %v1047
          %1066 = vmatprep.subr.bf16.mxu0 0
          %1067 = vmatpush1.bf16.msra.mxu0 %v1048
          %1068 = vmatprep.subr.bf16.mxu0 0
          %1069 = vmatpush1.bf16.msra.mxu0 %v1049
          %1070 = vmatprep.subr.bf16.mxu0 0
          %1071 = vmatpush1.bf16.msra.mxu0 %v1050
          %1072 = vmatprep.subr.bf16.mxu0 0
          %1073 = vmatpush1.bf16.msra.mxu0 %v1051
          %1074 = vmatprep.subr.bf16.mxu0 0
          %1075 = vmatpush1.bf16.msra.mxu0 %v1052
          %1076 = vmatprep.subr.bf16.mxu0 0
          %1077 = vmatpush1.bf16.msra.mxu0 %v1053
          %1078 = vmatprep.subr.bf16.mxu0 0
          %1079 = vmatpush1.bf16.msra.mxu0 0
          %1080 = vmatprep.subr.bf16.mxu0 0
          %1081 = vmatpush1.bf16.msra.mxu0 0
          %1082 = vmatprep.subr.bf16.mxu0 0
          %1083 = vmatpush1.bf16.msra.mxu0 0
          %1084 = vmatprep.subr.bf16.mxu0 0
          %1085 = vmatpush1.bf16.msra.mxu0 0
          %1086 = vmatprep.subr.bf16.mxu0 0
          %1087 = vmatpush1.bf16.msra.mxu0 0
          %1088 = vmatprep.subr.bf16.mxu0 0
          %1089 = vmatpush1.bf16.msra.mxu0 0
          %1090 = vmatprep.subr.bf16.mxu0 0
          %1091 = vmatpush1.bf16.msra.mxu0 0
          %1092 = vmatprep.subr.bf16.mxu0 0
          %1093 = vmatpush1.bf16.msra.mxu0 0
          %1094 = vmatprep.mubr.bf16.mxu0 0
          %1095 = vmatmul.mubr.bf16.gmra.mrb[0].mxu0 %v998
          %v1096 = vpop.f32.mrb[0].mxu0
          %v1097 = vadd.f32 %v965, %v1096
          %v1098 = vpop.f32.mrb[0].mxu0
          %v1099 = vpop.f32.mrb[0].mxu0
          %v1100 = vadd.f32 %v965, %v1099
          %v1101 = vpop.f32.mrb[0].mxu0
          %1102 = vmatprep.mubr.bf16.mxu0 0
          %1103 = vmatmul.mubr.bf16.gmra.mrb[0].mxu0 %v999
          %v1104 = vpop.f32.mrb[0].mxu0
          %v1105 = vadd.f32 %v965, %v1104
          %v1106 = vpop.f32.mrb[0].mxu0
          %v1107 = vpop.f32.mrb[0].mxu0
          %v1108 = vadd.f32 %v965, %v1107
          %v1109 = vpop.f32.mrb[0].mxu0
          %1110 = vmatprep.mubr.bf16.mxu0 0
          %1111 = vmatmul.mubr.bf16.gmra.mrb[0].mxu0 %v1000
          %v1112 = vpop.f32.mrb[0].mxu0
          %v1113 = vadd.f32 %v965, %v1112
          %v1114 = vpop.f32.mrb[0].mxu0
          %v1115 = vpop.f32.mrb[0].mxu0
          %v1116 = vadd.f32 %v965, %v1115
          %v1117 = vpop.f32.mrb[0].mxu0
          %1118 = vmatprep.mubr.bf16.mxu0 0
          %1119 = vmatmul.mubr.bf16.gmra.mrb[0].mxu0 %v1001
          %v1120 = vpop.f32.mrb[0].mxu0
          %v1121 = vadd.f32 %v965, %v1120
          %v1122 = vpop.f32.mrb[0].mxu0
          %v1123 = vpop.f32.mrb[0].mxu0
          %v1124 = vadd.f32 %v965, %v1123
          %v1125 = vpop.f32.mrb[0].mxu0
          %1126 = vmatprep.mubr.bf16.mxu0 0
          %1127 = vmatmul.mubr.bf16.gmra.mrb[0].mxu0 %v1002
          %v1128 = vpop.f32.mrb[0].mxu0
          %v1129 = vadd.f32 %v965, %v1128
          %v1130 = vpop.f32.mrb[0].mxu0
          %v1131 = vpop.f32.mrb[0].mxu0
          %v1132 = vadd.f32 %v965, %v1131
          %v1133 = vpop.f32.mrb[0].mxu0
          %1134 = vmatprep.mubr.bf16.mxu0 0
          %1135 = vmatmul.mubr.bf16.gmra.mrb[0].mxu0 %v1003
          %v1136 = vpop.f32.mrb[0].mxu0
          %v1137 = vadd.f32 %v965, %v1136
          %v1138 = vpop.f32.mrb[0].mxu0
          %v1139 = vpop.f32.mrb[0].mxu0
          %v1140 = vadd.f32 %v965, %v1139
          %v1141 = vpop.f32.mrb[0].mxu0
          %1142 = vmatprep.mubr.bf16.mxu0 0
          %1143 = vmatmul.mubr.bf16.gmra.mrb[0].mxu0 %v1004
          %v1144 = vpop.f32.mrb[0].mxu0
          %v1145 = vadd.f32 %v965, %v1144
          %v1146 = vpop.f32.mrb[0].mxu0
          %v1147 = vpop.f32.mrb[0].mxu0
          %v1148 = vadd.f32 %v965, %v1147
          %v1149 = vpop.f32.mrb[0].mxu0
          %1150 = vmatprep.mubr.bf16.mxu0 0
          %1151 = vmatmul.mubr.bf16.gmra.mrb[0].mxu0 %v1005
          %v1152 = vpop.f32.mrb[0].mxu0
          %v1153 = vadd.f32 %v965, %v1152
          %v1154 = vpop.f32.mrb[0].mxu0
          %v1155 = vpop.f32.mrb[0].mxu0
          %v1156 = vadd.f32 %v965, %v1155
          %v1157 = vpop.f32.mrb[0].mxu0
          %1158 = vdwg.mxu0
          %1159 = vst [vmem:[#allocation2] sm:$0xff] %v1097
          %1160 = vst [vmem:[#allocation2 + $0x8] sm:$0xff] %v1100
          %1161 = vst [vmem:[#allocation2 + $0x10] sm:$0xff] %v1105
          %1162 = vst [vmem:[#allocation2 + $0x18] sm:$0xff] %v1108
          %1163 = vst [vmem:[#allocation2 + $0x20] sm:$0xff] %v1113
          %1164 = vst [vmem:[#allocation2 + $0x28] sm:$0xff] %v1116
          %1165 = vst [vmem:[#allocation2 + $0x30] sm:$0xff] %v1121
          %1166 = vst [vmem:[#allocation2 + $0x38] sm:$0xff] %v1124
          %1167 = vst [vmem:[#allocation2 + $0x40] sm:$0xff] %v1129
          %1168 = vst [vmem:[#allocation2 + $0x48] sm:$0xff] %v1132
          %1169 = vst [vmem:[#allocation2 + $0x50] sm:$0xff] %v1137
          %1170 = vst [vmem:[#allocation2 + $0x58] sm:$0xff] %v1140
          %1171 = vst [vmem:[#allocation2 + $0x60] sm:$0xff] %v1145
          %1172 = vst [vmem:[#allocation2 + $0x68] sm:$0xff] %v1148
          %1173 = vst [vmem:[#allocation2 + $0x70] sm:$0xff] %v1153
          %1174 = vst [vmem:[#allocation2 + $0x78] sm:$0xff] %v1156
          %v1175 = vld [vmem:[#allocation4] sm:$0xf]
          %v1176 = vld [vmem:[#allocation4 + $0x4] sm:$0xf]
          %v1177 = vld [vmem:[#allocation4 + $0x8] sm:$0xf]
          %v1178 = vld [vmem:[#allocation4 + $0xc] sm:$0xf]
          %v1179 = vld [vmem:[#allocation4 + $0x10] sm:$0xf]
          %v1180 = vld [vmem:[#allocation4 + $0x14] sm:$0xf]
          %v1181 = vld [vmem:[#allocation4 + $0x18] sm:$0xf]
          %v1182 = vld [vmem:[#allocation4 + $0x1c] sm:$0xf]
          %v1183 = vld [vmem:[#allocation4 + $0x20] sm:$0xf]
          %v1184 = vld [vmem:[#allocation4 + $0x24] sm:$0xf]
          %v1185 = vld [vmem:[#allocation4 + $0x28] sm:$0xf]
          %v1186 = vld [vmem:[#allocation4 + $0x2c] sm:$0xf]
          %v1187 = vld [vmem:[#allocation4 + $0x30] sm:$0xf]
          %v1188 = vld [vmem:[#allocation4 + $0x34] sm:$0xf]
          %v1189 = vld [vmem:[#allocation4 + $0x38] sm:$0xf]
          %v1190 = vld [vmem:[#allocation4 + $0x3c] sm:$0xf]
          %v1191 = vld [vmem:[#allocation18] sm:$0xf]
          %v1192 = vld [vmem:[#allocation18 + $0x4] sm:$0xf]
          %v1193 = vld [vmem:[#allocation18 + $0x8] sm:$0xf]
          %v1194 = vld [vmem:[#allocation18 + $0xc] sm:$0xf]
          %v1195 = vld [vmem:[#allocation18 + $0x10] sm:$0xf]
          %v1196 = vld [vmem:[#allocation18 + $0x14] sm:$0xf]
          %v1197 = vld [vmem:[#allocation18 + $0x18] sm:$0xf]
          %v1198 = vld [vmem:[#allocation18 + $0x1c] sm:$0xf]
          %v1199 = vld [vmem:[#allocation18 + $0x20] sm:$0xf]
          %v1200 = vld [vmem:[#allocation18 + $0x24] sm:$0xf]
          %v1201 = vld [vmem:[#allocation18 + $0x28] sm:$0xf]
          %v1202 = vld [vmem:[#allocation18 + $0x2c] sm:$0xf]
          %v1203 = vld [vmem:[#allocation18 + $0x30] sm:$0xf]
          %v1204 = vld [vmem:[#allocation18 + $0x34] sm:$0xf]
          %v1205 = vld [vmem:[#allocation18 + $0x38] sm:$0xf]
          %v1206 = vld [vmem:[#allocation18 + $0x3c] sm:$0xf]
          %v1207 = vlaneseq
          %v1208 = vshrl.u32 %v1207, 7
          %v1209 = vsub.s32 1, %v1208
          %v1210 = vrot.slane %v929, %v1209
          %v1227 = vunpack.c.l.b16 %v1175
          %v1228 = vunpack.c.l.b16 %v1176
          %v1229 = vunpack.c.l.b16 %v1177
          %v1230 = vunpack.c.l.b16 %v1178
          %v1231 = vunpack.c.l.b16 %v1179
          %v1232 = vunpack.c.l.b16 %v1180
          %v1233 = vunpack.c.l.b16 %v1181
          %v1234 = vunpack.c.l.b16 %v1182
          %v1235 = vunpack.c.l.b16 %v1183
          %v1236 = vunpack.c.l.b16 %v1184
          %v1237 = vunpack.c.l.b16 %v1185
          %v1238 = vunpack.c.l.b16 %v1186
          %v1239 = vunpack.c.l.b16 %v1187
          %v1240 = vunpack.c.l.b16 %v1188
          %v1241 = vunpack.c.l.b16 %v1189
          %v1242 = vunpack.c.l.b16 %v1190
          %v1243 = vpack.c.b16 %v1228, %v1227
          %v1244 = vpack.c.b16 %v1230, %v1229
          %v1245 = vpack.c.b16 %v1232, %v1231
          %v1246 = vpack.c.b16 %v1234, %v1233
          %v1247 = vpack.c.b16 %v1236, %v1235
          %v1248 = vpack.c.b16 %v1238, %v1237
          %v1249 = vpack.c.b16 %v1240, %v1239
          %v1250 = vpack.c.b16 %v1242, %v1241
          %v1275 = vunpack.c.l.b16 %v1191
          %v1276 = vunpack.c.l.b16 %v1192
          %v1277 = vunpack.c.l.b16 %v1193
          %v1278 = vunpack.c.l.b16 %v1194
          %v1279 = vunpack.c.l.b16 %v1195
          %v1280 = vunpack.c.l.b16 %v1196
          %v1281 = vunpack.c.l.b16 %v1197
          %v1282 = vunpack.c.l.b16 %v1198
          %v1283 = vunpack.c.l.b16 %v1199
          %v1284 = vunpack.c.l.b16 %v1200
          %v1285 = vunpack.c.l.b16 %v1201
          %v1286 = vunpack.c.l.b16 %v1202
          %v1287 = vunpack.c.l.b16 %v1203
          %v1288 = vunpack.c.l.b16 %v1204
          %v1289 = vunpack.c.l.b16 %v1205
          %v1290 = vunpack.c.l.b16 %v1206
          %v1291 = vpack.c.b16 %v1276, %v1275
          %v1292 = vpack.c.b16 %v1278, %v1277
          %v1293 = vpack.c.b16 %v1280, %v1279
          %v1294 = vpack.c.b16 %v1282, %v1281
          %v1295 = vpack.c.b16 %v1284, %v1283
          %v1296 = vpack.c.b16 %v1286, %v1285
          %v1297 = vpack.c.b16 %v1288, %v1287
          %v1298 = vpack.c.b16 %v1290, %v1289
          %1307 = vmatprep.subr.bf16.mxu0 0
          %1308 = vmatpush1.bf16.msra.mxu0 %v1291
          %1309 = vmatprep.subr.bf16.mxu0 0
          %1310 = vmatpush1.bf16.msra.mxu0 %v1292
          %1311 = vmatprep.subr.bf16.mxu0 0
          %1312 = vmatpush1.bf16.msra.mxu0 %v1293
          %1313 = vmatprep.subr.bf16.mxu0 0
          %1314 = vmatpush1.bf16.msra.mxu0 %v1294
          %1315 = vmatprep.subr.bf16.mxu0 0
          %1316 = vmatpush1.bf16.msra.mxu0 %v1295
          %1317 = vmatprep.subr.bf16.mxu0 0
          %1318 = vmatpush1.bf16.msra.mxu0 %v1296
          %1319 = vmatprep.subr.bf16.mxu0 0
          %1320 = vmatpush1.bf16.msra.mxu0 %v1297
          %1321 = vmatprep.subr.bf16.mxu0 0
          %1322 = vmatpush1.bf16.msra.mxu0 %v1298
          %1323 = vmatprep.subr.bf16.mxu0 0
          %1324 = vmatpush1.bf16.msra.mxu0 0
          %1325 = vmatprep.subr.bf16.mxu0 0
          %1326 = vmatpush1.bf16.msra.mxu0 0
          %1327 = vmatprep.subr.bf16.mxu0 0
          %1328 = vmatpush1.bf16.msra.mxu0 0
          %1329 = vmatprep.subr.bf16.mxu0 0
          %1330 = vmatpush1.bf16.msra.mxu0 0
          %1331 = vmatprep.subr.bf16.mxu0 0
          %1332 = vmatpush1.bf16.msra.mxu0 0
          %1333 = vmatprep.subr.bf16.mxu0 0
          %1334 = vmatpush1.bf16.msra.mxu0 0
          %1335 = vmatprep.subr.bf16.mxu0 0
          %1336 = vmatpush1.bf16.msra.mxu0 0
          %1337 = vmatprep.subr.bf16.mxu0 0
          %1338 = vmatpush1.bf16.msra.mxu0 0
          %1339 = vmatprep.mubr.bf16.mxu0 0
          %1340 = vmatmul.mubr.bf16.gmra.mrb[0].mxu0 %v1243
          %v1341 = vpop.f32.mrb[0].mxu0
          %v1342 = vadd.f32 %v1210, %v1341
          %v1343 = vpop.f32.mrb[0].mxu0
          %v1344 = vpop.f32.mrb[0].mxu0
          %v1345 = vadd.f32 %v1210, %v1344
          %v1346 = vpop.f32.mrb[0].mxu0
          %1347 = vmatprep.mubr.bf16.mxu0 0
          %1348 = vmatmul.mubr.bf16.gmra.mrb[0].mxu0 %v1244
          %v1349 = vpop.f32.mrb[0].mxu0
          %v1350 = vadd.f32 %v1210, %v1349
          %v1351 = vpop.f32.mrb[0].mxu0
          %v1352 = vpop.f32.mrb[0].mxu0
          %v1353 = vadd.f32 %v1210, %v1352
          %v1354 = vpop.f32.mrb[0].mxu0
          %1355 = vmatprep.mubr.bf16.mxu0 0
          %1356 = vmatmul.mubr.bf16.gmra.mrb[0].mxu0 %v1245
          %v1357 = vpop.f32.mrb[0].mxu0
          %v1358 = vadd.f32 %v1210, %v1357
          %v1359 = vpop.f32.mrb[0].mxu0
          %v1360 = vpop.f32.mrb[0].mxu0
          %v1361 = vadd.f32 %v1210, %v1360
          %v1362 = vpop.f32.mrb[0].mxu0
          %1363 = vmatprep.mubr.bf16.mxu0 0
          %1364 = vmatmul.mubr.bf16.gmra.mrb[0].mxu0 %v1246
          %v1365 = vpop.f32.mrb[0].mxu0
          %v1366 = vadd.f32 %v1210, %v1365
          %v1367 = vpop.f32.mrb[0].mxu0
          %v1368 = vpop.f32.mrb[0].mxu0
          %v1369 = vadd.f32 %v1210, %v1368
          %v1370 = vpop.f32.mrb[0].mxu0
          %1371 = vmatprep.mubr.bf16.mxu0 0
          %1372 = vmatmul.mubr.bf16.gmra.mrb[0].mxu0 %v1247
          %v1373 = vpop.f32.mrb[0].mxu0
          %v1374 = vadd.f32 %v1210, %v1373
          %v1375 = vpop.f32.mrb[0].mxu0
          %v1376 = vpop.f32.mrb[0].mxu0
          %v1377 = vadd.f32 %v1210, %v1376
          %v1378 = vpop.f32.mrb[0].mxu0
          %1379 = vmatprep.mubr.bf16.mxu0 0
          %1380 = vmatmul.mubr.bf16.gmra.mrb[0].mxu0 %v1248
          %v1381 = vpop.f32.mrb[0].mxu0
          %v1382 = vadd.f32 %v1210, %v1381
          %v1383 = vpop.f32.mrb[0].mxu0
          %v1384 = vpop.f32.mrb[0].mxu0
          %v1385 = vadd.f32 %v1210, %v1384
          %v1386 = vpop.f32.mrb[0].mxu0
          %1387 = vmatprep.mubr.bf16.mxu0 0
          %1388 = vmatmul.mubr.bf16.gmra.mrb[0].mxu0 %v1249
          %v1389 = vpop.f32.mrb[0].mxu0
          %v1390 = vadd.f32 %v1210, %v1389
          %v1391 = vpop.f32.mrb[0].mxu0
          %v1392 = vpop.f32.mrb[0].mxu0
          %v1393 = vadd.f32 %v1210, %v1392
          %v1394 = vpop.f32.mrb[0].mxu0
          %1395 = vmatprep.mubr.bf16.mxu0 0
          %1396 = vmatmul.mubr.bf16.gmra.mrb[0].mxu0 %v1250
          %v1397 = vpop.f32.mrb[0].mxu0
          %v1398 = vadd.f32 %v1210, %v1397
          %v1399 = vpop.f32.mrb[0].mxu0
          %v1400 = vpop.f32.mrb[0].mxu0
          %v1401 = vadd.f32 %v1210, %v1400
          %v1402 = vpop.f32.mrb[0].mxu0
          %1403 = vdwg.mxu0
          %1404 = vst [vmem:[#allocation3] sm:$0xff] %v1342
          %1405 = vst [vmem:[#allocation3 + $0x8] sm:$0xff] %v1345
          %1406 = vst [vmem:[#allocation3 + $0x10] sm:$0xff] %v1350
          %1407 = vst [vmem:[#allocation3 + $0x18] sm:$0xff] %v1353
          %1408 = vst [vmem:[#allocation3 + $0x20] sm:$0xff] %v1358
          %1409 = vst [vmem:[#allocation3 + $0x28] sm:$0xff] %v1361
          %1410 = vst [vmem:[#allocation3 + $0x30] sm:$0xff] %v1366
          %1411 = vst [vmem:[#allocation3 + $0x38] sm:$0xff] %v1369
          %1412 = vst [vmem:[#allocation3 + $0x40] sm:$0xff] %v1374
          %1413 = vst [vmem:[#allocation3 + $0x48] sm:$0xff] %v1377
          %1414 = vst [vmem:[#allocation3 + $0x50] sm:$0xff] %v1382
          %1415 = vst [vmem:[#allocation3 + $0x58] sm:$0xff] %v1385
          %1416 = vst [vmem:[#allocation3 + $0x60] sm:$0xff] %v1390
          %1417 = vst [vmem:[#allocation3 + $0x68] sm:$0xff] %v1393
          %1418 = vst [vmem:[#allocation3 + $0x70] sm:$0xff] %v1398
          %1419 = vst [vmem:[#allocation3 + $0x78] sm:$0xff] %v1401
        $region156: #{tpu_custom_call.1} parent=95 // pred_fallthru
          _
        %v1420 = vld [vmem:[#allocation2] sm:$0xff]
        %v1421 = vld [vmem:[#allocation2 + $0x8] sm:$0xff]
        %v1422 = vld [vmem:[#allocation2 + $0x10] sm:$0xff]
        %v1423 = vld [vmem:[#allocation2 + $0x18] sm:$0xff]
        %v1424 = vld [vmem:[#allocation2 + $0x20] sm:$0xff]
        %v1425 = vld [vmem:[#allocation2 + $0x28] sm:$0xff]
        %v1426 = vld [vmem:[#allocation2 + $0x30] sm:$0xff]
        %v1427 = vld [vmem:[#allocation2 + $0x38] sm:$0xff]
        %v1428 = vld [vmem:[#allocation2 + $0x40] sm:$0xff]
        %v1429 = vld [vmem:[#allocation2 + $0x48] sm:$0xff]
        %v1430 = vld [vmem:[#allocation2 + $0x50] sm:$0xff]
        %v1431 = vld [vmem:[#allocation2 + $0x58] sm:$0xff]
        %v1432 = vld [vmem:[#allocation2 + $0x60] sm:$0xff]
        %v1433 = vld [vmem:[#allocation2 + $0x68] sm:$0xff]
        %v1434 = vld [vmem:[#allocation2 + $0x70] sm:$0xff]
        %v1435 = vld [vmem:[#allocation2 + $0x78] sm:$0xff]
        %v1436 = vld [vmem:[#allocation3] sm:$0xff]
        %v1437 = vld [vmem:[#allocation3 + $0x8] sm:$0xff]
        %v1438 = vld [vmem:[#allocation3 + $0x10] sm:$0xff]
        %v1439 = vld [vmem:[#allocation3 + $0x18] sm:$0xff]
        %v1440 = vld [vmem:[#allocation3 + $0x20] sm:$0xff]
        %v1441 = vld [vmem:[#allocation3 + $0x28] sm:$0xff]
        %v1442 = vld [vmem:[#allocation3 + $0x30] sm:$0xff]
        %v1443 = vld [vmem:[#allocation3 + $0x38] sm:$0xff]
        %v1444 = vld [vmem:[#allocation3 + $0x40] sm:$0xff]
        %v1445 = vld [vmem:[#allocation3 + $0x48] sm:$0xff]
        %v1446 = vld [vmem:[#allocation3 + $0x50] sm:$0xff]
        %v1447 = vld [vmem:[#allocation3 + $0x58] sm:$0xff]
        %v1448 = vld [vmem:[#allocation3 + $0x60] sm:$0xff]
        %v1449 = vld [vmem:[#allocation3 + $0x68] sm:$0xff]
        %v1450 = vld [vmem:[#allocation3 + $0x70] sm:$0xff]
        %v1451 = vld [vmem:[#allocation3 + $0x78] sm:$0xff]
        %v1452 = vld [vmem:[%s8] sm:$0xff]
        %v1453 = vld [vmem:[%s8 + $0x8] sm:$0xff]
        %v1454 = vld [vmem:[%s8 + $0x10] sm:$0xff]
        %v1455 = vld [vmem:[%s8 + $0x18] sm:$0xff]
        %v1456 = vld [vmem:[%s8 + $0x20] sm:$0xff]
        %v1457 = vld [vmem:[%s8 + $0x28] sm:$0xff]
        %v1458 = vld [vmem:[%s8 + $0x30] sm:$0xff]
        %v1459 = vld [vmem:[%s8 + $0x38] sm:$0xff]
        %v1460 = vld [vmem:[%s8 + $0x40] sm:$0xff]
        %v1461 = vld [vmem:[%s8 + $0x48] sm:$0xff]
        %v1462 = vld [vmem:[%s8 + $0x50] sm:$0xff]
        %v1463 = vld [vmem:[%s8 + $0x58] sm:$0xff]
        %v1464 = vld [vmem:[%s8 + $0x60] sm:$0xff]
        %v1465 = vld [vmem:[%s8 + $0x68] sm:$0xff]
        %v1466 = vld [vmem:[%s8 + $0x70] sm:$0xff]
        %v1467 = vld [vmem:[%s8 + $0x78] sm:$0xff]
        %v1468 = vld [vmem:[%s9] sm:$0xff]
        %v1469 = vld [vmem:[%s9 + $0x8] sm:$0xff]
        %v1470 = vld [vmem:[%s9 + $0x10] sm:$0xff]
        %v1471 = vld [vmem:[%s9 + $0x18] sm:$0xff]
        %v1472 = vld [vmem:[%s9 + $0x20] sm:$0xff]
        %v1473 = vld [vmem:[%s9 + $0x28] sm:$0xff]
        %v1474 = vld [vmem:[%s9 + $0x30] sm:$0xff]
        %v1475 = vld [vmem:[%s9 + $0x38] sm:$0xff]
        %v1476 = vld [vmem:[%s9 + $0x40] sm:$0xff]
        %v1477 = vld [vmem:[%s9 + $0x48] sm:$0xff]
        %v1478 = vld [vmem:[%s9 + $0x50] sm:$0xff]
        %v1479 = vld [vmem:[%s9 + $0x58] sm:$0xff]
        %v1480 = vld [vmem:[%s9 + $0x60] sm:$0xff]
        %v1481 = vld [vmem:[%s9 + $0x68] sm:$0xff]
        %v1482 = vld [vmem:[%s9 + $0x70] sm:$0xff]
        %v1483 = vld [vmem:[%s9 + $0x78] sm:$0xff]
        %v1484 = vld [vmem:[%s839] sm:$0xff]
        %v1485 = vld [vmem:[%s839 + $0x8] sm:$0xff]
        %v1486 = vld [vmem:[%s923] sm:$0xff]
        %v1487 = vld [vmem:[%s919] sm:$0xf]
        %v1488 = vld [vmem:[%s919 + $0x4] sm:$0xf]
        %v1489 = vld [vmem:[%s919 + $0x8] sm:$0xf]
        %v1490 = vld [vmem:[%s919 + $0xc] sm:$0xf]
        %v1491 = vld [vmem:[%s919 + $0x10] sm:$0xf]
        %v1492 = vld [vmem:[%s919 + $0x14] sm:$0xf]
        %v1493 = vld [vmem:[%s919 + $0x18] sm:$0xf]
        %v1494 = vld [vmem:[%s919 + $0x1c] sm:$0xf]
        %v1495 = vld [vmem:[%s919 + $0x20] sm:$0xf]
        %v1496 = vld [vmem:[%s919 + $0x24] sm:$0xf]
        %v1497 = vld [vmem:[%s919 + $0x28] sm:$0xf]
        %v1498 = vld [vmem:[%s919 + $0x2c] sm:$0xf]
        %v1499 = vld [vmem:[%s919 + $0x30] sm:$0xf]
        %v1500 = vld [vmem:[%s919 + $0x34] sm:$0xf]
        %v1501 = vld [vmem:[%s919 + $0x38] sm:$0xf]
        %v1502 = vld [vmem:[%s919 + $0x3c] sm:$0xf]
        %v1503 = vld [vmem:[%s919 + $0x40] sm:$0xf]
        %v1504 = vld [vmem:[%s919 + $0x44] sm:$0xf]
        %v1505 = vld [vmem:[%s919 + $0x48] sm:$0xf]
        %v1506 = vld [vmem:[%s919 + $0x4c] sm:$0xf]
        %v1507 = vld [vmem:[%s919 + $0x50] sm:$0xf]
        %v1508 = vld [vmem:[%s919 + $0x54] sm:$0xf]
        %v1509 = vld [vmem:[%s919 + $0x58] sm:$0xf]
        %v1510 = vld [vmem:[%s919 + $0x5c] sm:$0xf]
        %v1511 = vld [vmem:[%s919 + $0x60] sm:$0xf]
        %v1512 = vld [vmem:[%s919 + $0x64] sm:$0xf]
        %v1513 = vld [vmem:[%s919 + $0x68] sm:$0xf]
        %v1514 = vld [vmem:[%s919 + $0x6c] sm:$0xf]
        %v1515 = vld [vmem:[%s919 + $0x70] sm:$0xf]
        %v1516 = vld [vmem:[%s919 + $0x74] sm:$0xf]
        %v1517 = vld [vmem:[%s919 + $0x78] sm:$0xf]
        %v1518 = vld [vmem:[%s919 + $0x7c] sm:$0xf]
        %v1519 = vld [vmem:[%s821] sm:$0xf]
        %v1520 = vld [vmem:[%s821 + $0x4] sm:$0xf]
        %v1521 = vld [vmem:[%s821 + $0x8] sm:$0xf]
        %v1522 = vld [vmem:[%s821 + $0xc] sm:$0xf]
        %v1523 = vld [vmem:[%s821 + $0x10] sm:$0xf]
        %v1524 = vld [vmem:[%s821 + $0x14] sm:$0xf]
        %v1525 = vld [vmem:[%s821 + $0x18] sm:$0xf]
        %v1526 = vld [vmem:[%s821 + $0x1c] sm:$0xf]
        %v1527 = vld [vmem:[%s821 + $0x20] sm:$0xf]
        %v1528 = vld [vmem:[%s821 + $0x24] sm:$0xf]
        %v1529 = vld [vmem:[%s821 + $0x28] sm:$0xf]
        %v1530 = vld [vmem:[%s821 + $0x2c] sm:$0xf]
        %v1531 = vld [vmem:[%s821 + $0x30] sm:$0xf]
        %v1532 = vld [vmem:[%s821 + $0x34] sm:$0xf]
        %v1533 = vld [vmem:[%s821 + $0x38] sm:$0xf]
        %v1534 = vld [vmem:[%s821 + $0x3c] sm:$0xf]
        %v1535 = vld [vmem:[%s821 + $0x40] sm:$0xf]
        %v1536 = vld [vmem:[%s821 + $0x44] sm:$0xf]
        %v1537 = vld [vmem:[%s821 + $0x48] sm:$0xf]
        %v1538 = vld [vmem:[%s821 + $0x4c] sm:$0xf]
        %v1539 = vld [vmem:[%s821 + $0x50] sm:$0xf]
        %v1540 = vld [vmem:[%s821 + $0x54] sm:$0xf]
        %v1541 = vld [vmem:[%s821 + $0x58] sm:$0xf]
        %v1542 = vld [vmem:[%s821 + $0x5c] sm:$0xf]
        %v1543 = vld [vmem:[%s821 + $0x60] sm:$0xf]
        %v1544 = vld [vmem:[%s821 + $0x64] sm:$0xf]
        %v1545 = vld [vmem:[%s821 + $0x68] sm:$0xf]
        %v1546 = vld [vmem:[%s821 + $0x6c] sm:$0xf]
        %v1547 = vld [vmem:[%s821 + $0x70] sm:$0xf]
        %v1548 = vld [vmem:[%s821 + $0x74] sm:$0xf]
        %v1549 = vld [vmem:[%s821 + $0x78] sm:$0xf]
        %v1550 = vld [vmem:[%s821 + $0x7c] sm:$0xf]
        %v1551 = vld [vmem:[%s830] sm:$0xf]
        %v1552 = vld [vmem:[%s830 + $0x4] sm:$0xf]
        %v1553 = vld [vmem:[%s830 + $0x8] sm:$0xf]
        %v1554 = vld [vmem:[%s830 + $0xc] sm:$0xf]
        %v1555 = vld [vmem:[%s830 + $0x10] sm:$0xf]
        %v1556 = vld [vmem:[%s830 + $0x14] sm:$0xf]
        %v1557 = vld [vmem:[%s830 + $0x18] sm:$0xf]
        %v1558 = vld [vmem:[%s830 + $0x1c] sm:$0xf]
        %v1559 = vld [vmem:[%s830 + $0x20] sm:$0xf]
        %v1560 = vld [vmem:[%s830 + $0x24] sm:$0xf]
        %v1561 = vld [vmem:[%s830 + $0x28] sm:$0xf]
        %v1562 = vld [vmem:[%s830 + $0x2c] sm:$0xf]
        %v1563 = vld [vmem:[%s830 + $0x30] sm:$0xf]
        %v1564 = vld [vmem:[%s830 + $0x34] sm:$0xf]
        %v1565 = vld [vmem:[%s830 + $0x38] sm:$0xf]
        %v1566 = vld [vmem:[%s830 + $0x3c] sm:$0xf]
        %v1567 = vld [vmem:[%s830 + $0x40] sm:$0xf]
        %v1568 = vld [vmem:[%s830 + $0x44] sm:$0xf]
        %v1569 = vld [vmem:[%s830 + $0x48] sm:$0xf]
        %v1570 = vld [vmem:[%s830 + $0x4c] sm:$0xf]
        %v1571 = vld [vmem:[%s830 + $0x50] sm:$0xf]
        %v1572 = vld [vmem:[%s830 + $0x54] sm:$0xf]
        %v1573 = vld [vmem:[%s830 + $0x58] sm:$0xf]
        %v1574 = vld [vmem:[%s830 + $0x5c] sm:$0xf]
        %v1575 = vld [vmem:[%s830 + $0x60] sm:$0xf]
        %v1576 = vld [vmem:[%s830 + $0x64] sm:$0xf]
        %v1577 = vld [vmem:[%s830 + $0x68] sm:$0xf]
        %v1578 = vld [vmem:[%s830 + $0x6c] sm:$0xf]
        %v1579 = vld [vmem:[%s830 + $0x70] sm:$0xf]
        %v1580 = vld [vmem:[%s830 + $0x74] sm:$0xf]
        %v1581 = vld [vmem:[%s830 + $0x78] sm:$0xf]
        %v1582 = vld [vmem:[%s830 + $0x7c] sm:$0xf]
        %v1583 = vld [vmem:[#allocation7] sm:$0xf]
        %v1584 = vld [vmem:[#allocation7 + $0x4] sm:$0xf]
        %v1585 = vld [vmem:[#allocation7 + $0x8] sm:$0xf]
        %v1586 = vld [vmem:[#allocation7 + $0xc] sm:$0xf]
        %v1587 = vld [vmem:[#allocation7 + $0x10] sm:$0xf]
        %v1588 = vld [vmem:[#allocation7 + $0x14] sm:$0xf]
        %v1589 = vld [vmem:[#allocation7 + $0x18] sm:$0xf]
        %v1590 = vld [vmem:[#allocation7 + $0x1c] sm:$0xf]
        %v1591 = vld [vmem:[#allocation7 + $0x20] sm:$0xf]
        %v1592 = vld [vmem:[#allocation7 + $0x24] sm:$0xf]
        %v1593 = vld [vmem:[#allocation7 + $0x28] sm:$0xf]
        %v1594 = vld [vmem:[#allocation7 + $0x2c] sm:$0xf]
        %v1595 = vld [vmem:[#allocation7 + $0x30] sm:$0xf]
        %v1596 = vld [vmem:[#allocation7 + $0x34] sm:$0xf]
        %v1597 = vld [vmem:[#allocation7 + $0x38] sm:$0xf]
        %v1598 = vld [vmem:[#allocation7 + $0x3c] sm:$0xf]
        %v1599 = vld [vmem:[%s812] sm:$0xf]
        %v1600 = vld [vmem:[%s812 + $0x4] sm:$0xf]
        %v1601 = vld [vmem:[%s812 + $0x8] sm:$0xf]
        %v1602 = vld [vmem:[%s812 + $0xc] sm:$0xf]
        %v1603 = vld [vmem:[%s812 + $0x10] sm:$0xf]
        %v1604 = vld [vmem:[%s812 + $0x14] sm:$0xf]
        %v1605 = vld [vmem:[%s812 + $0x18] sm:$0xf]
        %v1606 = vld [vmem:[%s812 + $0x1c] sm:$0xf]
        %v1607 = vld [vmem:[%s812 + $0x20] sm:$0xf]
        %v1608 = vld [vmem:[%s812 + $0x24] sm:$0xf]
        %v1609 = vld [vmem:[%s812 + $0x28] sm:$0xf]
        %v1610 = vld [vmem:[%s812 + $0x2c] sm:$0xf]
        %v1611 = vld [vmem:[%s812 + $0x30] sm:$0xf]
        %v1612 = vld [vmem:[%s812 + $0x34] sm:$0xf]
        %v1613 = vld [vmem:[%s812 + $0x38] sm:$0xf]
        %v1614 = vld [vmem:[%s812 + $0x3c] sm:$0xf]
        %v1615 = vlaneseq
        %v1616 = vshrl.u32 %v1615, 7
        %v1617 = vsub.s32 0, %v1616
        %v1618 = vrot.slane %v1484, %v1617
        %v1635 = vunpack.c.l.b16 %v1583
        %v1636 = vunpack.c.l.b16 %v1584
        %v1637 = vunpack.c.l.b16 %v1585
        %v1638 = vunpack.c.l.b16 %v1586
        %v1639 = vunpack.c.l.b16 %v1587
        %v1640 = vunpack.c.l.b16 %v1588
        %v1641 = vunpack.c.l.b16 %v1589
        %v1642 = vunpack.c.l.b16 %v1590
        %v1643 = vunpack.c.l.b16 %v1591
        %v1644 = vunpack.c.l.b16 %v1592
        %v1645 = vunpack.c.l.b16 %v1593
        %v1646 = vunpack.c.l.b16 %v1594
        %v1647 = vunpack.c.l.b16 %v1595
        %v1648 = vunpack.c.l.b16 %v1596
        %v1649 = vunpack.c.l.b16 %v1597
        %v1650 = vunpack.c.l.b16 %v1598
        %v1651 = vpack.c.b16 %v1636, %v1635
        %v1652 = vpack.c.b16 %v1638, %v1637
        %v1653 = vpack.c.b16 %v1640, %v1639
        %v1654 = vpack.c.b16 %v1642, %v1641
        %v1655 = vpack.c.b16 %v1644, %v1643
        %v1656 = vpack.c.b16 %v1646, %v1645
        %v1657 = vpack.c.b16 %v1648, %v1647
        %v1658 = vpack.c.b16 %v1650, %v1649
        %v1683 = vunpack.c.l.b16 %v1599
        %v1684 = vunpack.c.l.b16 %v1600
        %v1685 = vunpack.c.l.b16 %v1601
        %v1686 = vunpack.c.l.b16 %v1602
        %v1687 = vunpack.c.l.b16 %v1603
        %v1688 = vunpack.c.l.b16 %v1604
        %v1689 = vunpack.c.l.b16 %v1605
        %v1690 = vunpack.c.l.b16 %v1606
        %v1691 = vunpack.c.l.b16 %v1607
        %v1692 = vunpack.c.l.b16 %v1608
        %v1693 = vunpack.c.l.b16 %v1609
        %v1694 = vunpack.c.l.b16 %v1610
        %v1695 = vunpack.c.l.b16 %v1611
        %v1696 = vunpack.c.l.b16 %v1612
        %v1697 = vunpack.c.l.b16 %v1613
        %v1698 = vunpack.c.l.b16 %v1614
        %v1699 = vpack.c.b16 %v1684, %v1683
        %v1700 = vpack.c.b16 %v1686, %v1685
        %v1701 = vpack.c.b16 %v1688, %v1687
        %v1702 = vpack.c.b16 %v1690, %v1689
        %v1703 = vpack.c.b16 %v1692, %v1691
        %v1704 = vpack.c.b16 %v1694, %v1693
        %v1705 = vpack.c.b16 %v1696, %v1695
        %v1706 = vpack.c.b16 %v1698, %v1697
        %1715 = vmatprep.subr.bf16.mxu0 0
        %1716 = vmatpush1.bf16.msra.mxu0 %v1699
        %1717 = vmatprep.subr.bf16.mxu0 0
        %1718 = vmatpush1.bf16.msra.mxu0 %v1700
        %1719 = vmatprep.subr.bf16.mxu0 0
        %1720 = vmatpush1.bf16.msra.mxu0 %v1701
        %1721 = vmatprep.subr.bf16.mxu0 0
        %1722 = vmatpush1.bf16.msra.mxu0 %v1702
        %1723 = vmatprep.subr.bf16.mxu0 0
        %1724 = vmatpush1.bf16.msra.mxu0 %v1703
        %1725 = vmatprep.subr.bf16.mxu0 0
        %1726 = vmatpush1.bf16.msra.mxu0 %v1704
        %1727 = vmatprep.subr.bf16.mxu0 0
        %1728 = vmatpush1.bf16.msra.mxu0 %v1705
        %1729 = vmatprep.subr.bf16.mxu0 0
        %1730 = vmatpush1.bf16.msra.mxu0 %v1706
        %1731 = vmatprep.subr.bf16.mxu0 0
        %1732 = vmatpush1.bf16.msra.mxu0 0
        %1733 = vmatprep.subr.bf16.mxu0 0
        %1734 = vmatpush1.bf16.msra.mxu0 0
        %1735 = vmatprep.subr.bf16.mxu0 0
        %1736 = vmatpush1.bf16.msra.mxu0 0
        %1737 = vmatprep.subr.bf16.mxu0 0
        %1738 = vmatpush1.bf16.msra.mxu0 0
        %1739 = vmatprep.subr.bf16.mxu0 0
        %1740 = vmatpush1.bf16.msra.mxu0 0
        %1741 = vmatprep.subr.bf16.mxu0 0
        %1742 = vmatpush1.bf16.msra.mxu0 0
        %1743 = vmatprep.subr.bf16.mxu0 0
        %1744 = vmatpush1.bf16.msra.mxu0 0
        %1745 = vmatprep.subr.bf16.mxu0 0
        %1746 = vmatpush1.bf16.msra.mxu0 0
        %1747 = vmatprep.mubr.bf16.mxu0 0
        %1748 = vmatmul.mubr.bf16.gmra.mrb[0].mxu0 %v1651
        %v1749 = vpop.f32.mrb[0].mxu0
        %v1750 = vadd.f32 %v1618, %v1749
        %v1751 = vpop.f32.mrb[0].mxu0
        %v1752 = vpop.f32.mrb[0].mxu0
        %v1753 = vadd.f32 %v1618, %v1752
        %v1754 = vpop.f32.mrb[0].mxu0
        %1755 = vmatprep.mubr.bf16.mxu0 0
        %1756 = vmatmul.mubr.bf16.gmra.mrb[0].mxu0 %v1652
        %v1757 = vpop.f32.mrb[0].mxu0
        %v1758 = vadd.f32 %v1618, %v1757
        %v1759 = vpop.f32.mrb[0].mxu0
        %v1760 = vpop.f32.mrb[0].mxu0
        %v1761 = vadd.f32 %v1618, %v1760
        %v1762 = vpop.f32.mrb[0].mxu0
        %1763 = vmatprep.mubr.bf16.mxu0 0
        %1764 = vmatmul.mubr.bf16.gmra.mrb[0].mxu0 %v1653
        %v1765 = vpop.f32.mrb[0].mxu0
        %v1766 = vadd.f32 %v1618, %v1765
        %v1767 = vpop.f32.mrb[0].mxu0
        %v1768 = vpop.f32.mrb[0].mxu0
        %v1769 = vadd.f32 %v1618, %v1768
        %v1770 = vpop.f32.mrb[0].mxu0
        %1771 = vmatprep.mubr.bf16.mxu0 0
        %1772 = vmatmul.mubr.bf16.gmra.mrb[0].mxu0 %v1654
        %v1773 = vpop.f32.mrb[0].mxu0
        %v1774 = vadd.f32 %v1618, %v1773
        %v1775 = vpop.f32.mrb[0].mxu0
        %v1776 = vpop.f32.mrb[0].mxu0
        %v1777 = vadd.f32 %v1618, %v1776
        %v1778 = vpop.f32.mrb[0].mxu0
        %1779 = vmatprep.mubr.bf16.mxu0 0
        %1780 = vmatmul.mubr.bf16.gmra.mrb[0].mxu0 %v1655
        %v1781 = vpop.f32.mrb[0].mxu0
        %v1782 = vadd.f32 %v1618, %v1781
        %v1783 = vpop.f32.mrb[0].mxu0
        %v1784 = vpop.f32.mrb[0].mxu0
        %v1785 = vadd.f32 %v1618, %v1784
        %v1786 = vpop.f32.mrb[0].mxu0
        %1787 = vmatprep.mubr.bf16.mxu0 0
        %1788 = vmatmul.mubr.bf16.gmra.mrb[0].mxu0 %v1656
        %v1789 = vpop.f32.mrb[0].mxu0
        %v1790 = vadd.f32 %v1618, %v1789
        %v1791 = vpop.f32.mrb[0].mxu0
        %v1792 = vpop.f32.mrb[0].mxu0
        %v1793 = vadd.f32 %v1618, %v1792
        %v1794 = vpop.f32.mrb[0].mxu0
        %1795 = vmatprep.mubr.bf16.mxu0 0
        %1796 = vmatmul.mubr.bf16.gmra.mrb[0].mxu0 %v1657
        %v1797 = vpop.f32.mrb[0].mxu0
        %v1798 = vadd.f32 %v1618, %v1797
        %v1799 = vpop.f32.mrb[0].mxu0
        %v1800 = vpop.f32.mrb[0].mxu0
        %v1801 = vadd.f32 %v1618, %v1800
        %v1802 = vpop.f32.mrb[0].mxu0
        %1803 = vmatprep.mubr.bf16.mxu0 0
        %1804 = vmatmul.mubr.bf16.gmra.mrb[0].mxu0 %v1658
        %v1805 = vpop.f32.mrb[0].mxu0
        %v1806 = vadd.f32 %v1618, %v1805
        %v1807 = vpop.f32.mrb[0].mxu0
        %v1808 = vpop.f32.mrb[0].mxu0
        %v1809 = vadd.f32 %v1618, %v1808
        %v1810 = vpop.f32.mrb[0].mxu0
        %1811 = vdwg.mxu0
        %v1812 = vld [vmem:[#allocation9] sm:$0xf]
        %v1813 = vld [vmem:[#allocation9 + $0x4] sm:$0xf]
        %v1814 = vld [vmem:[#allocation9 + $0x8] sm:$0xf]
        %v1815 = vld [vmem:[#allocation9 + $0xc] sm:$0xf]
        %v1816 = vld [vmem:[#allocation9 + $0x10] sm:$0xf]
        %v1817 = vld [vmem:[#allocation9 + $0x14] sm:$0xf]
        %v1818 = vld [vmem:[#allocation9 + $0x18] sm:$0xf]
        %v1819 = vld [vmem:[#allocation9 + $0x1c] sm:$0xf]
        %v1820 = vld [vmem:[#allocation9 + $0x20] sm:$0xf]
        %v1821 = vld [vmem:[#allocation9 + $0x24] sm:$0xf]
        %v1822 = vld [vmem:[#allocation9 + $0x28] sm:$0xf]
        %v1823 = vld [vmem:[#allocation9 + $0x2c] sm:$0xf]
        %v1824 = vld [vmem:[#allocation9 + $0x30] sm:$0xf]
        %v1825 = vld [vmem:[#allocation9 + $0x34] sm:$0xf]
        %v1826 = vld [vmem:[#allocation9 + $0x38] sm:$0xf]
        %v1827 = vld [vmem:[#allocation9 + $0x3c] sm:$0xf]
        %v1828 = vpack.c.bf16 %v1421, %v1420
        %v1829 = vpack.c.bf16 %v1423, %v1422
        %v1830 = vpack.c.bf16 %v1425, %v1424
        %v1831 = vpack.c.bf16 %v1427, %v1426
        %v1832 = vpack.c.bf16 %v1429, %v1428
        %v1833 = vpack.c.bf16 %v1431, %v1430
        %v1834 = vpack.c.bf16 %v1433, %v1432
        %v1835 = vpack.c.bf16 %v1435, %v1434
        %v1852 = vunpack.c.l.b16 %v1812
        %v1853 = vunpack.c.l.b16 %v1813
        %v1854 = vunpack.c.l.b16 %v1814
        %v1855 = vunpack.c.l.b16 %v1815
        %v1856 = vunpack.c.l.b16 %v1816
        %v1857 = vunpack.c.l.b16 %v1817
        %v1858 = vunpack.c.l.b16 %v1818
        %v1859 = vunpack.c.l.b16 %v1819
        %v1860 = vunpack.c.l.b16 %v1820
        %v1861 = vunpack.c.l.b16 %v1821
        %v1862 = vunpack.c.l.b16 %v1822
        %v1863 = vunpack.c.l.b16 %v1823
        %v1864 = vunpack.c.l.b16 %v1824
        %v1865 = vunpack.c.l.b16 %v1825
        %v1866 = vunpack.c.l.b16 %v1826
        %v1867 = vunpack.c.l.b16 %v1827
        %v1868 = vpack.c.b16 %v1853, %v1852
        %v1869 = vpack.c.b16 %v1855, %v1854
        %v1870 = vpack.c.b16 %v1857, %v1856
        %v1871 = vpack.c.b16 %v1859, %v1858
        %v1872 = vpack.c.b16 %v1861, %v1860
        %v1873 = vpack.c.b16 %v1863, %v1862
        %v1874 = vpack.c.b16 %v1865, %v1864
        %v1875 = vpack.c.b16 %v1867, %v1866
        %1884 = vmatprep.subr.bf16.mxu0 0
        %1885 = vmatpush1.bf16.msra.mxu0 %v1828
        %1886 = vmatprep.subr.bf16.mxu0 0
        %1887 = vmatpush1.bf16.msra.mxu0 %v1829
        %1888 = vmatprep.subr.bf16.mxu0 0
        %1889 = vmatpush1.bf16.msra.mxu0 %v1830
        %1890 = vmatprep.subr.bf16.mxu0 0
        %1891 = vmatpush1.bf16.msra.mxu0 %v1831
        %1892 = vmatprep.subr.bf16.mxu0 0
        %1893 = vmatpush1.bf16.msra.mxu0 %v1832
        %1894 = vmatprep.subr.bf16.mxu0 0
        %1895 = vmatpush1.bf16.msra.mxu0 %v1833
        %1896 = vmatprep.subr.bf16.mxu0 0
        %1897 = vmatpush1.bf16.msra.mxu0 %v1834
        %1898 = vmatprep.subr.bf16.mxu0 0
        %1899 = vmatpush1.bf16.msra.mxu0 %v1835
        %1900 = vmatprep.subr.bf16.mxu0 0
        %1901 = vmatpush1.bf16.msra.mxu0 0
        %1902 = vmatprep.subr.bf16.mxu0 0
        %1903 = vmatpush1.bf16.msra.mxu0 0
        %1904 = vmatprep.subr.bf16.mxu0 0
        %1905 = vmatpush1.bf16.msra.mxu0 0
        %1906 = vmatprep.subr.bf16.mxu0 0
        %1907 = vmatpush1.bf16.msra.mxu0 0
        %1908 = vmatprep.subr.bf16.mxu0 0
        %1909 = vmatpush1.bf16.msra.mxu0 0
        %1910 = vmatprep.subr.bf16.mxu0 0
        %1911 = vmatpush1.bf16.msra.mxu0 0
        %1912 = vmatprep.subr.bf16.mxu0 0
        %1913 = vmatpush1.bf16.msra.mxu0 0
        %1914 = vmatprep.subr.bf16.mxu0 0
        %1915 = vmatpush1.bf16.msra.mxu0 0
        %1916 = vmatprep.mubr.bf16.mxu0 0
        %1917 = vmatmul.mubr.bf16.gmra.mrb[0].mxu0 %v1868
        %v1918 = vpop.f32.mrb[0].mxu0
        %v1919 = vadd.f32 %v1750, %v1918
        %v1920 = vpop.f32.mrb[0].mxu0
        %v1921 = vpop.f32.mrb[0].mxu0
        %v1922 = vadd.f32 %v1753, %v1921
        %v1923 = vpop.f32.mrb[0].mxu0
        %1924 = vmatprep.mubr.bf16.mxu0 0
        %1925 = vmatmul.mubr.bf16.gmra.mrb[0].mxu0 %v1869
        %v1926 = vpop.f32.mrb[0].mxu0
        %v1927 = vadd.f32 %v1758, %v1926
        %v1928 = vpop.f32.mrb[0].mxu0
        %v1929 = vpop.f32.mrb[0].mxu0
        %v1930 = vadd.f32 %v1761, %v1929
        %v1931 = vpop.f32.mrb[0].mxu0
        %1932 = vmatprep.mubr.bf16.mxu0 0
        %1933 = vmatmul.mubr.bf16.gmra.mrb[0].mxu0 %v1870
        %v1934 = vpop.f32.mrb[0].mxu0
        %v1935 = vadd.f32 %v1766, %v1934
        %v1936 = vpop.f32.mrb[0].mxu0
        %v1937 = vpop.f32.mrb[0].mxu0
        %v1938 = vadd.f32 %v1769, %v1937
        %v1939 = vpop.f32.mrb[0].mxu0
        %1940 = vmatprep.mubr.bf16.mxu0 0
        %1941 = vmatmul.mubr.bf16.gmra.mrb[0].mxu0 %v1871
        %v1942 = vpop.f32.mrb[0].mxu0
        %v1943 = vadd.f32 %v1774, %v1942
        %v1944 = vpop.f32.mrb[0].mxu0
        %v1945 = vpop.f32.mrb[0].mxu0
        %v1946 = vadd.f32 %v1777, %v1945
        %v1947 = vpop.f32.mrb[0].mxu0
        %1948 = vmatprep.mubr.bf16.mxu0 0
        %1949 = vmatmul.mubr.bf16.gmra.mrb[0].mxu0 %v1872
        %v1950 = vpop.f32.mrb[0].mxu0
        %v1951 = vadd.f32 %v1782, %v1950
        %v1952 = vpop.f32.mrb[0].mxu0
        %v1953 = vpop.f32.mrb[0].mxu0
        %v1954 = vadd.f32 %v1785, %v1953
        %v1955 = vpop.f32.mrb[0].mxu0
        %1956 = vmatprep.mubr.bf16.mxu0 0
        %1957 = vmatmul.mubr.bf16.gmra.mrb[0].mxu0 %v1873
        %v1958 = vpop.f32.mrb[0].mxu0
        %v1959 = vadd.f32 %v1790, %v1958
        %v1960 = vpop.f32.mrb[0].mxu0
        %v1961 = vpop.f32.mrb[0].mxu0
        %v1962 = vadd.f32 %v1793, %v1961
        %v1963 = vpop.f32.mrb[0].mxu0
        %1964 = vmatprep.mubr.bf16.mxu0 0
        %1965 = vmatmul.mubr.bf16.gmra.mrb[0].mxu0 %v1874
        %v1966 = vpop.f32.mrb[0].mxu0
        %v1967 = vadd.f32 %v1798, %v1966
        %v1968 = vpop.f32.mrb[0].mxu0
        %v1969 = vpop.f32.mrb[0].mxu0
        %v1970 = vadd.f32 %v1801, %v1969
        %v1971 = vpop.f32.mrb[0].mxu0
        %1972 = vmatprep.mubr.bf16.mxu0 0
        %1973 = vmatmul.mubr.bf16.gmra.mrb[0].mxu0 %v1875
        %v1974 = vpop.f32.mrb[0].mxu0
        %v1975 = vadd.f32 %v1806, %v1974
        %v1976 = vpop.f32.mrb[0].mxu0
        %v1977 = vpop.f32.mrb[0].mxu0
        %v1978 = vadd.f32 %v1809, %v1977
        %v1979 = vpop.f32.mrb[0].mxu0
        %1980 = vdwg.mxu0
        %v1981 = vmax.f32 %v1919, 0.0
        %v1982 = vmax.f32 %v1922, 0.0
        %v1983 = vmax.f32 %v1927, 0.0
        %v1984 = vmax.f32 %v1930, 0.0
        %v1985 = vmax.f32 %v1935, 0.0
        %v1986 = vmax.f32 %v1938, 0.0
        %v1987 = vmax.f32 %v1943, 0.0
        %v1988 = vmax.f32 %v1946, 0.0
        %v1989 = vmax.f32 %v1951, 0.0
        %v1990 = vmax.f32 %v1954, 0.0
        %v1991 = vmax.f32 %v1959, 0.0
        %v1992 = vmax.f32 %v1962, 0.0
        %v1993 = vmax.f32 %v1967, 0.0
        %v1994 = vmax.f32 %v1970, 0.0
        %v1995 = vmax.f32 %v1975, 0.0
        %v1996 = vmax.f32 %v1978, 0.0
        %v1997 = vld [vmem:[#allocation10] sm:$0xf]
        %v1998 = vld [vmem:[#allocation10 + $0x4] sm:$0xf]
        %v1999 = vld [vmem:[#allocation10 + $0x8] sm:$0xf]
        %v2000 = vld [vmem:[#allocation10 + $0xc] sm:$0xf]
        %v2001 = vld [vmem:[#allocation10 + $0x10] sm:$0xf]
        %v2002 = vld [vmem:[#allocation10 + $0x14] sm:$0xf]
        %v2003 = vld [vmem:[#allocation10 + $0x18] sm:$0xf]
        %v2004 = vld [vmem:[#allocation10 + $0x1c] sm:$0xf]
        %v2005 = vld [vmem:[#allocation10 + $0x20] sm:$0xf]
        %v2006 = vld [vmem:[#allocation10 + $0x24] sm:$0xf]
        %v2007 = vld [vmem:[#allocation10 + $0x28] sm:$0xf]
        %v2008 = vld [vmem:[#allocation10 + $0x2c] sm:$0xf]
        %v2009 = vld [vmem:[#allocation10 + $0x30] sm:$0xf]
        %v2010 = vld [vmem:[#allocation10 + $0x34] sm:$0xf]
        %v2011 = vld [vmem:[#allocation10 + $0x38] sm:$0xf]
        %v2012 = vld [vmem:[#allocation10 + $0x3c] sm:$0xf]
        %v2013 = vpack.c.bf16 %v1982, %v1981
        %v2014 = vpack.c.bf16 %v1984, %v1983
        %v2015 = vpack.c.bf16 %v1986, %v1985
        %v2016 = vpack.c.bf16 %v1988, %v1987
        %v2017 = vpack.c.bf16 %v1990, %v1989
        %v2018 = vpack.c.bf16 %v1992, %v1991
        %v2019 = vpack.c.bf16 %v1994, %v1993
        %v2020 = vpack.c.bf16 %v1996, %v1995
        %v2037 = vunpack.c.l.b16 %v1997
        %v2038 = vunpack.c.l.b16 %v1998
        %v2039 = vunpack.c.l.b16 %v1999
        %v2040 = vunpack.c.l.b16 %v2000
        %v2041 = vunpack.c.l.b16 %v2001
        %v2042 = vunpack.c.l.b16 %v2002
        %v2043 = vunpack.c.l.b16 %v2003
        %v2044 = vunpack.c.l.b16 %v2004
        %v2045 = vunpack.c.l.b16 %v2005
        %v2046 = vunpack.c.l.b16 %v2006
        %v2047 = vunpack.c.l.b16 %v2007
        %v2048 = vunpack.c.l.b16 %v2008
        %v2049 = vunpack.c.l.b16 %v2009
        %v2050 = vunpack.c.l.b16 %v2010
        %v2051 = vunpack.c.l.b16 %v2011
        %v2052 = vunpack.c.l.b16 %v2012
        %v2053 = vpack.c.b16 %v2038, %v2037
        %v2054 = vpack.c.b16 %v2040, %v2039
        %v2055 = vpack.c.b16 %v2042, %v2041
        %v2056 = vpack.c.b16 %v2044, %v2043
        %v2057 = vpack.c.b16 %v2046, %v2045
        %v2058 = vpack.c.b16 %v2048, %v2047
        %v2059 = vpack.c.b16 %v2050, %v2049
        %v2060 = vpack.c.b16 %v2052, %v2051
        %2069 = vmatprep.subr.bf16.mxu0 0
        %2070 = vmatpush1.bf16.msra.mxu0 %v2013
        %2071 = vmatprep.subr.bf16.mxu0 0
        %2072 = vmatpush1.bf16.msra.mxu0 %v2014
        %2073 = vmatprep.subr.bf16.mxu0 0
        %2074 = vmatpush1.bf16.msra.mxu0 %v2015
        %2075 = vmatprep.subr.bf16.mxu0 0
        %2076 = vmatpush1.bf16.msra.mxu0 %v2016
        %2077 = vmatprep.subr.bf16.mxu0 0
        %2078 = vmatpush1.bf16.msra.mxu0 %v2017
        %2079 = vmatprep.subr.bf16.mxu0 0
        %2080 = vmatpush1.bf16.msra.mxu0 %v2018
        %2081 = vmatprep.subr.bf16.mxu0 0
        %2082 = vmatpush1.bf16.msra.mxu0 %v2019
        %2083 = vmatprep.subr.bf16.mxu0 0
        %2084 = vmatpush1.bf16.msra.mxu0 %v2020
        %2085 = vmatprep.subr.bf16.mxu0 0
        %2086 = vmatpush1.bf16.msra.mxu0 0
        %2087 = vmatprep.subr.bf16.mxu0 0
        %2088 = vmatpush1.bf16.msra.mxu0 0
        %2089 = vmatprep.subr.bf16.mxu0 0
        %2090 = vmatpush1.bf16.msra.mxu0 0
        %2091 = vmatprep.subr.bf16.mxu0 0
        %2092 = vmatpush1.bf16.msra.mxu0 0
        %2093 = vmatprep.subr.bf16.mxu0 0
        %2094 = vmatpush1.bf16.msra.mxu0 0
        %2095 = vmatprep.subr.bf16.mxu0 0
        %2096 = vmatpush1.bf16.msra.mxu0 0
        %2097 = vmatprep.subr.bf16.mxu0 0
        %2098 = vmatpush1.bf16.msra.mxu0 0
        %2099 = vmatprep.subr.bf16.mxu0 0
        %2100 = vmatpush1.bf16.msra.mxu0 0
        %2101 = vmatprep.mubr.bf16.mxu0 0
        %2102 = vmatmul.mubr.bf16.gmra.mrb[0].mxu0 %v2053
        %v2103 = vpop.f32.mrb[0].mxu0
        %v2104 = vadd.f32 0.0, %v2103
        %v2105 = vpop.f32.mrb[0].mxu0
        %v2106 = vpop.f32.mrb[0].mxu0
        %v2107 = vadd.f32 0.0, %v2106
        %v2108 = vpop.f32.mrb[0].mxu0
        %2109 = vmatprep.mubr.bf16.mxu0 0
        %2110 = vmatmul.mubr.bf16.gmra.mrb[0].mxu0 %v2054
        %v2111 = vpop.f32.mrb[0].mxu0
        %v2112 = vadd.f32 0.0, %v2111
        %v2113 = vpop.f32.mrb[0].mxu0
        %v2114 = vpop.f32.mrb[0].mxu0
        %v2115 = vadd.f32 0.0, %v2114
        %v2116 = vpop.f32.mrb[0].mxu0
        %2117 = vmatprep.mubr.bf16.mxu0 0
        %2118 = vmatmul.mubr.bf16.gmra.mrb[0].mxu0 %v2055
        %v2119 = vpop.f32.mrb[0].mxu0
        %v2120 = vadd.f32 0.0, %v2119
        %v2121 = vpop.f32.mrb[0].mxu0
        %v2122 = vpop.f32.mrb[0].mxu0
        %v2123 = vadd.f32 0.0, %v2122
        %v2124 = vpop.f32.mrb[0].mxu0
        %2125 = vmatprep.mubr.bf16.mxu0 0
        %2126 = vmatmul.mubr.bf16.gmra.mrb[0].mxu0 %v2056
        %v2127 = vpop.f32.mrb[0].mxu0
        %v2128 = vadd.f32 0.0, %v2127
        %v2129 = vpop.f32.mrb[0].mxu0
        %v2130 = vpop.f32.mrb[0].mxu0
        %v2131 = vadd.f32 0.0, %v2130
        %v2132 = vpop.f32.mrb[0].mxu0
        %2133 = vmatprep.mubr.bf16.mxu0 0
        %2134 = vmatmul.mubr.bf16.gmra.mrb[0].mxu0 %v2057
        %v2135 = vpop.f32.mrb[0].mxu0
        %v2136 = vadd.f32 0.0, %v2135
        %v2137 = vpop.f32.mrb[0].mxu0
        %v2138 = vpop.f32.mrb[0].mxu0
        %v2139 = vadd.f32 0.0, %v2138
        %v2140 = vpop.f32.mrb[0].mxu0
        %2141 = vmatprep.mubr.bf16.mxu0 0
        %2142 = vmatmul.mubr.bf16.gmra.mrb[0].mxu0 %v2058
        %v2143 = vpop.f32.mrb[0].mxu0
        %v2144 = vadd.f32 0.0, %v2143
        %v2145 = vpop.f32.mrb[0].mxu0
        %v2146 = vpop.f32.mrb[0].mxu0
        %v2147 = vadd.f32 0.0, %v2146
        %v2148 = vpop.f32.mrb[0].mxu0
        %2149 = vmatprep.mubr.bf16.mxu0 0
        %2150 = vmatmul.mubr.bf16.gmra.mrb[0].mxu0 %v2059
        %v2151 = vpop.f32.mrb[0].mxu0
        %v2152 = vadd.f32 0.0, %v2151
        %v2153 = vpop.f32.mrb[0].mxu0
        %v2154 = vpop.f32.mrb[0].mxu0
        %v2155 = vadd.f32 0.0, %v2154
        %v2156 = vpop.f32.mrb[0].mxu0
        %2157 = vmatprep.mubr.bf16.mxu0 0
        %2158 = vmatmul.mubr.bf16.gmra.mrb[0].mxu0 %v2060
        %v2159 = vpop.f32.mrb[0].mxu0
        %v2160 = vadd.f32 0.0, %v2159
        %v2161 = vpop.f32.mrb[0].mxu0
        %v2162 = vpop.f32.mrb[0].mxu0
        %v2163 = vadd.f32 0.0, %v2162
        %v2164 = vpop.f32.mrb[0].mxu0
        %2165 = vdwg.mxu0
        %v2166 = vadd.f32 %v1420, %v2104
        %v2167 = vadd.f32 %v1421, %v2107
        %v2168 = vadd.f32 %v1422, %v2112
        %v2169 = vadd.f32 %v1423, %v2115
        %v2170 = vadd.f32 %v1424, %v2120
        %v2171 = vadd.f32 %v1425, %v2123
        %v2172 = vadd.f32 %v1426, %v2128
        %v2173 = vadd.f32 %v1427, %v2131
        %v2174 = vadd.f32 %v1428, %v2136
        %v2175 = vadd.f32 %v1429, %v2139
        %v2176 = vadd.f32 %v1430, %v2144
        %v2177 = vadd.f32 %v1431, %v2147
        %v2178 = vadd.f32 %v1432, %v2152
        %v2179 = vadd.f32 %v1433, %v2155
        %v2180 = vadd.f32 %v1434, %v2160
        %v2181 = vadd.f32 %v1435, %v2163
        %v2182 = vpack.c.bf16 %v2167, %v2166
        %v2183 = vpack.c.bf16 %v2169, %v2168
        %v2184 = vpack.c.bf16 %v2171, %v2170
        %v2185 = vpack.c.bf16 %v2173, %v2172
        %v2186 = vpack.c.bf16 %v2175, %v2174
        %v2187 = vpack.c.bf16 %v2177, %v2176
        %v2188 = vpack.c.bf16 %v2179, %v2178
        %v2189 = vpack.c.bf16 %v2181, %v2180
        %v2190 = vlaneseq
        %v2191 = vshrl.u32 %v2190, 7
        %v2192 = vsub.s32 0, %v2191
        %v2193 = vrot.slane %v1486, %v2192
        %v2210 = vunpack.c.l.b16 %v1487
        %v2211 = vunpack.c.l.b16 %v1488
        %v2212 = vunpack.c.l.b16 %v1489
        %v2213 = vunpack.c.l.b16 %v1490
        %v2214 = vunpack.c.l.b16 %v1491
        %v2215 = vunpack.c.l.b16 %v1492
        %v2216 = vunpack.c.l.b16 %v1493
        %v2217 = vunpack.c.l.b16 %v1494
        %v2218 = vunpack.c.l.b16 %v1495
        %v2219 = vunpack.c.l.b16 %v1496
        %v2220 = vunpack.c.l.b16 %v1497
        %v2221 = vunpack.c.l.b16 %v1498
        %v2222 = vunpack.c.l.b16 %v1499
        %v2223 = vunpack.c.l.b16 %v1500
        %v2224 = vunpack.c.l.b16 %v1501
        %v2225 = vunpack.c.l.b16 %v1502
        %v2226 = vpack.c.b16 %v2211, %v2210
        %v2227 = vpack.c.b16 %v2213, %v2212
        %v2228 = vpack.c.b16 %v2215, %v2214
        %v2229 = vpack.c.b16 %v2217, %v2216
        %v2230 = vpack.c.b16 %v2219, %v2218
        %v2231 = vpack.c.b16 %v2221, %v2220
        %v2232 = vpack.c.b16 %v2223, %v2222
        %v2233 = vpack.c.b16 %v2225, %v2224
        %2242 = vmatprep.subr.bf16.mxu0 0
        %2243 = vmatpush1.bf16.msra.mxu0 %v2226
        %2244 = vmatprep.subr.bf16.mxu0 0
        %2245 = vmatpush1.bf16.msra.mxu0 %v2227
        %2246 = vmatprep.subr.bf16.mxu0 0
        %2247 = vmatpush1.bf16.msra.mxu0 %v2228
        %2248 = vmatprep.subr.bf16.mxu0 0
        %2249 = vmatpush1.bf16.msra.mxu0 %v2229
        %2250 = vmatprep.subr.bf16.mxu0 0
        %2251 = vmatpush1.bf16.msra.mxu0 %v2230
        %2252 = vmatprep.subr.bf16.mxu0 0
        %2253 = vmatpush1.bf16.msra.mxu0 %v2231
        %2254 = vmatprep.subr.bf16.mxu0 0
        %2255 = vmatpush1.bf16.msra.mxu0 %v2232
        %2256 = vmatprep.subr.bf16.mxu0 0
        %2257 = vmatpush1.bf16.msra.mxu0 %v2233
        %2258 = vmatprep.subr.bf16.mxu0 0
        %2259 = vmatpush1.bf16.msra.mxu0 0
        %2260 = vmatprep.subr.bf16.mxu0 0
        %2261 = vmatpush1.bf16.msra.mxu0 0
        %2262 = vmatprep.subr.bf16.mxu0 0
        %2263 = vmatpush1.bf16.msra.mxu0 0
        %2264 = vmatprep.subr.bf16.mxu0 0
        %2265 = vmatpush1.bf16.msra.mxu0 0
        %2266 = vmatprep.subr.bf16.mxu0 0
        %2267 = vmatpush1.bf16.msra.mxu0 0
        %2268 = vmatprep.subr.bf16.mxu0 0
        %2269 = vmatpush1.bf16.msra.mxu0 0
        %2270 = vmatprep.subr.bf16.mxu0 0
        %2271 = vmatpush1.bf16.msra.mxu0 0
        %2272 = vmatprep.subr.bf16.mxu0 0
        %2273 = vmatpush1.bf16.msra.mxu0 0
        %2274 = vmatprep.mubr.bf16.mxu0 0
        %2275 = vmatmul.mubr.bf16.gmra.mrb[0].mxu0 %v2182
        %v2276 = vpop.f32.mrb[0].mxu0
        %v2277 = vadd.f32 %v2193, %v2276
        %v2278 = vpop.f32.mrb[0].mxu0
        %v2279 = vpop.f32.mrb[0].mxu0
        %v2280 = vadd.f32 %v2193, %v2279
        %v2281 = vpop.f32.mrb[0].mxu0
        %2282 = vmatprep.mubr.bf16.mxu0 0
        %2283 = vmatmul.mubr.bf16.gmra.mrb[0].mxu0 %v2183
        %v2284 = vpop.f32.mrb[0].mxu0
        %v2285 = vadd.f32 %v2193, %v2284
        %v2286 = vpop.f32.mrb[0].mxu0
        %v2287 = vpop.f32.mrb[0].mxu0
        %v2288 = vadd.f32 %v2193, %v2287
        %v2289 = vpop.f32.mrb[0].mxu0
        %2290 = vmatprep.mubr.bf16.mxu0 0
        %2291 = vmatmul.mubr.bf16.gmra.mrb[0].mxu0 %v2184
        %v2292 = vpop.f32.mrb[0].mxu0
        %v2293 = vadd.f32 %v2193, %v2292
        %v2294 = vpop.f32.mrb[0].mxu0
        %v2295 = vpop.f32.mrb[0].mxu0
        %v2296 = vadd.f32 %v2193, %v2295
        %v2297 = vpop.f32.mrb[0].mxu0
        %2298 = vmatprep.mubr.bf16.mxu0 0
        %2299 = vmatmul.mubr.bf16.gmra.mrb[0].mxu0 %v2185
        %v2300 = vpop.f32.mrb[0].mxu0
        %v2301 = vadd.f32 %v2193, %v2300
        %v2302 = vpop.f32.mrb[0].mxu0
        %v2303 = vpop.f32.mrb[0].mxu0
        %v2304 = vadd.f32 %v2193, %v2303
        %v2305 = vpop.f32.mrb[0].mxu0
        %2306 = vmatprep.mubr.bf16.mxu0 0
        %2307 = vmatmul.mubr.bf16.gmra.mrb[0].mxu0 %v2186
        %v2308 = vpop.f32.mrb[0].mxu0
        %v2309 = vadd.f32 %v2193, %v2308
        %v2310 = vpop.f32.mrb[0].mxu0
        %v2311 = vpop.f32.mrb[0].mxu0
        %v2312 = vadd.f32 %v2193, %v2311
        %v2313 = vpop.f32.mrb[0].mxu0
        %2314 = vmatprep.mubr.bf16.mxu0 0
        %2315 = vmatmul.mubr.bf16.gmra.mrb[0].mxu0 %v2187
        %v2316 = vpop.f32.mrb[0].mxu0
        %v2317 = vadd.f32 %v2193, %v2316
        %v2318 = vpop.f32.mrb[0].mxu0
        %v2319 = vpop.f32.mrb[0].mxu0
        %v2320 = vadd.f32 %v2193, %v2319
        %v2321 = vpop.f32.mrb[0].mxu0
        %2322 = vmatprep.mubr.bf16.mxu0 0
        %2323 = vmatmul.mubr.bf16.gmra.mrb[0].mxu0 %v2188
        %v2324 = vpop.f32.mrb[0].mxu0
        %v2325 = vadd.f32 %v2193, %v2324
        %v2326 = vpop.f32.mrb[0].mxu0
        %v2327 = vpop.f32.mrb[0].mxu0
        %v2328 = vadd.f32 %v2193, %v2327
        %v2329 = vpop.f32.mrb[0].mxu0
        %2330 = vmatprep.mubr.bf16.mxu0 0
        %2331 = vmatmul.mubr.bf16.gmra.mrb[0].mxu0 %v2189
        %v2332 = vpop.f32.mrb[0].mxu0
        %v2333 = vadd.f32 %v2193, %v2332
        %v2334 = vpop.f32.mrb[0].mxu0
        %v2335 = vpop.f32.mrb[0].mxu0
        %v2336 = vadd.f32 %v2193, %v2335
        %v2337 = vpop.f32.mrb[0].mxu0
        %2338 = vdwg.mxu0
        %2340 = vset.pattern.permute.xlu0 1
        %2341 = vperm.xlu0 %2340, %v1452
        %v2342 = vpop.permute.xlu0 %2341
        %2345 = vset.pattern.permute.xlu0 1
        %2346 = vperm.xlu0 %2345, %v1453
        %v2347 = vpop.permute.xlu0 %2346
        %2350 = vset.pattern.permute.xlu0 1
        %2351 = vperm.xlu0 %2350, %v1454
        %v2352 = vpop.permute.xlu0 %2351
        %2355 = vset.pattern.permute.xlu0 1
        %2356 = vperm.xlu0 %2355, %v1455
        %v2357 = vpop.permute.xlu0 %2356
        %2360 = vset.pattern.permute.xlu0 1
        %2361 = vperm.xlu0 %2360, %v1456
        %v2362 = vpop.permute.xlu0 %2361
        %2365 = vset.pattern.permute.xlu0 1
        %2366 = vperm.xlu0 %2365, %v1457
        %v2367 = vpop.permute.xlu0 %2366
        %2370 = vset.pattern.permute.xlu0 1
        %2371 = vperm.xlu0 %2370, %v1458
        %v2372 = vpop.permute.xlu0 %2371
        %2375 = vset.pattern.permute.xlu0 1
        %2376 = vperm.xlu0 %2375, %v1459
        %v2377 = vpop.permute.xlu0 %2376
        %2380 = vset.pattern.permute.xlu0 1
        %2381 = vperm.xlu0 %2380, %v1460
        %v2382 = vpop.permute.xlu0 %2381
        %2385 = vset.pattern.permute.xlu0 1
        %2386 = vperm.xlu0 %2385, %v1461
        %v2387 = vpop.permute.xlu0 %2386
        %2390 = vset.pattern.permute.xlu0 1
        %2391 = vperm.xlu0 %2390, %v1462
        %v2392 = vpop.permute.xlu0 %2391
        %2395 = vset.pattern.permute.xlu0 1
        %2396 = vperm.xlu0 %2395, %v1463
        %v2397 = vpop.permute.xlu0 %2396
        %2400 = vset.pattern.permute.xlu0 1
        %2401 = vperm.xlu0 %2400, %v1464
        %v2402 = vpop.permute.xlu0 %2401
        %2405 = vset.pattern.permute.xlu0 1
        %2406 = vperm.xlu0 %2405, %v1465
        %v2407 = vpop.permute.xlu0 %2406
        %2410 = vset.pattern.permute.xlu0 1
        %2411 = vperm.xlu0 %2410, %v1466
        %v2412 = vpop.permute.xlu0 %2411
        %2415 = vset.pattern.permute.xlu0 1
        %2416 = vperm.xlu0 %2415, %v1467
        %v2417 = vpop.permute.xlu0 %2416
        %v2419 = vmul.f32 %v2277, %v2342
        %v2420 = vmul.f32 %v2280, %v2347
        %v2421 = vmul.f32 %v2285, %v2352
        %v2422 = vmul.f32 %v2288, %v2357
        %v2423 = vmul.f32 %v2293, %v2362
        %v2424 = vmul.f32 %v2296, %v2367
        %v2425 = vmul.f32 %v2301, %v2372
        %v2426 = vmul.f32 %v2304, %v2377
        %v2427 = vmul.f32 %v2309, %v2382
        %v2428 = vmul.f32 %v2312, %v2387
        %v2429 = vmul.f32 %v2317, %v2392
        %v2430 = vmul.f32 %v2320, %v2397
        %v2431 = vmul.f32 %v2325, %v2402
        %v2432 = vmul.f32 %v2328, %v2407
        %v2433 = vmul.f32 %v2333, %v2412
        %v2434 = vmul.f32 %v2336, %v2417
        %v2435 = vadd.f32 %v2419, %v2420
        %v2436 = vadd.f32 %v2435, %v2421
        %v2437 = vadd.f32 %v2436, %v2422
        %v2438 = vadd.f32 %v2437, %v2423
        %v2439 = vadd.f32 %v2438, %v2424
        %v2440 = vadd.f32 %v2439, %v2425
        %v2441 = vadd.f32 %v2440, %v2426
        %v2442 = vadd.f32 %v2441, %v2427
        %v2443 = vadd.f32 %v2442, %v2428
        %v2444 = vadd.f32 %v2443, %v2429
        %v2445 = vadd.f32 %v2444, %v2430
        %v2446 = vadd.f32 %v2445, %v2431
        %v2447 = vadd.f32 %v2446, %v2432
        %v2448 = vadd.f32 %v2447, %v2433
        %v2449 = vadd.f32 %v2448, %v2434
        %v2450 = vrot.slane %v2449, 4
        %v2451 = vadd.f32 %v2449, %v2450
        %v2452 = vrot.slane %v2451, 2
        %v2453 = vadd.f32 %v2451, %v2452
        %v2454 = vrot.slane %v2453, 1
        %v2455 = vadd.f32 %v2453, %v2454
        %2456 = vset.pattern.permute.xlu0 2
        %2457 = vperm.xlu0 %2456, %v1452
        %v2458 = vpop.permute.xlu0 %2457
        %v2460 = vmul.f32 %v2455, %v2458
        %v2461 = vlaneseq
        %v2462 = vshrl.u32 %v2461, 7
        %v2463 = vsub.s32 0, %v2462
        %v2464 = vrot.slane %v2460, %v2463
        %v2465 = vsub.f32 %v2277, %v2464
        %v2466 = vsub.f32 %v2280, %v2464
        %v2467 = vsub.f32 %v2285, %v2464
        %v2468 = vsub.f32 %v2288, %v2464
        %v2469 = vsub.f32 %v2293, %v2464
        %v2470 = vsub.f32 %v2296, %v2464
        %v2471 = vsub.f32 %v2301, %v2464
        %v2472 = vsub.f32 %v2304, %v2464
        %v2473 = vsub.f32 %v2309, %v2464
        %v2474 = vsub.f32 %v2312, %v2464
        %v2475 = vsub.f32 %v2317, %v2464
        %v2476 = vsub.f32 %v2320, %v2464
        %v2477 = vsub.f32 %v2325, %v2464
        %v2478 = vsub.f32 %v2328, %v2464
        %v2479 = vsub.f32 %v2333, %v2464
        %v2480 = vsub.f32 %v2336, %v2464
        %v2481 = vmul.f32 %v2465, %v2342
        %v2482 = vmul.f32 %v2466, %v2347
        %v2483 = vmul.f32 %v2467, %v2352
        %v2484 = vmul.f32 %v2468, %v2357
        %v2485 = vmul.f32 %v2469, %v2362
        %v2486 = vmul.f32 %v2470, %v2367
        %v2487 = vmul.f32 %v2471, %v2372
        %v2488 = vmul.f32 %v2472, %v2377
        %v2489 = vmul.f32 %v2473, %v2382
        %v2490 = vmul.f32 %v2474, %v2387
        %v2491 = vmul.f32 %v2475, %v2392
        %v2492 = vmul.f32 %v2476, %v2397
        %v2493 = vmul.f32 %v2477, %v2402
        %v2494 = vmul.f32 %v2478, %v2407
        %v2495 = vmul.f32 %v2479, %v2412
        %v2496 = vmul.f32 %v2480, %v2417
        %v2497 = vmul.f32 %v2481, %v2481
        %v2498 = vmul.f32 %v2482, %v2482
        %v2499 = vmul.f32 %v2483, %v2483
        %v2500 = vmul.f32 %v2484, %v2484
        %v2501 = vmul.f32 %v2485, %v2485
        %v2502 = vmul.f32 %v2486, %v2486
        %v2503 = vmul.f32 %v2487, %v2487
        %v2504 = vmul.f32 %v2488, %v2488
        %v2505 = vmul.f32 %v2489, %v2489
        %v2506 = vmul.f32 %v2490, %v2490
        %v2507 = vmul.f32 %v2491, %v2491
        %v2508 = vmul.f32 %v2492, %v2492
        %v2509 = vmul.f32 %v2493, %v2493
        %v2510 = vmul.f32 %v2494, %v2494
        %v2511 = vmul.f32 %v2495, %v2495
        %v2512 = vmul.f32 %v2496, %v2496
        %v2513 = vadd.f32 %v2497, %v2498
        %v2514 = vadd.f32 %v2513, %v2499
        %v2515 = vadd.f32 %v2514, %v2500
        %v2516 = vadd.f32 %v2515, %v2501
        %v2517 = vadd.f32 %v2516, %v2502
        %v2518 = vadd.f32 %v2517, %v2503
        %v2519 = vadd.f32 %v2518, %v2504
        %v2520 = vadd.f32 %v2519, %v2505
        %v2521 = vadd.f32 %v2520, %v2506
        %v2522 = vadd.f32 %v2521, %v2507
        %v2523 = vadd.f32 %v2522, %v2508
        %v2524 = vadd.f32 %v2523, %v2509
        %v2525 = vadd.f32 %v2524, %v2510
        %v2526 = vadd.f32 %v2525, %v2511
        %v2527 = vadd.f32 %v2526, %v2512
        %v2528 = vrot.slane %v2527, 4
        %v2529 = vadd.f32 %v2527, %v2528
        %v2530 = vrot.slane %v2529, 2
        %v2531 = vadd.f32 %v2529, %v2530
        %v2532 = vrot.slane %v2531, 1
        %v2533 = vadd.f32 %v2531, %v2532
        %v2534 = vmul.f32 %v2533, %v2458
        %v2535 = vadd.f32 %v2534, 1e-05
        %v2536 = vrsqrt.pop %v2535
        %v2537 = vlaneseq
        %v2538 = vshrl.u32 %v2537, 7
        %v2539 = vsub.s32 0, %v2538
        %v2540 = vrot.slane %v2536, %v2539
        %v2541 = vmul.f32 %v2465, %v2540
        %v2542 = vmul.f32 %v2466, %v2540
        %v2543 = vmul.f32 %v2467, %v2540
        %v2544 = vmul.f32 %v2468, %v2540
        %v2545 = vmul.f32 %v2469, %v2540
        %v2546 = vmul.f32 %v2470, %v2540
        %v2547 = vmul.f32 %v2471, %v2540
        %v2548 = vmul.f32 %v2472, %v2540
        %v2549 = vmul.f32 %v2473, %v2540
        %v2550 = vmul.f32 %v2474, %v2540
        %v2551 = vmul.f32 %v2475, %v2540
        %v2552 = vmul.f32 %v2476, %v2540
        %v2553 = vmul.f32 %v2477, %v2540
        %v2554 = vmul.f32 %v2478, %v2540
        %v2555 = vmul.f32 %v2479, %v2540
        %v2556 = vmul.f32 %v2480, %v2540
        %v2557 = vlaneseq
        %v2558 = vshrl.u32 %v2557, 7
        %v2559 = vsub.s32 1, %v2558
        %v2560 = vrot.slane %v1486, %v2559
        %v2561 = vmul.f32 %v2541, %v2560
        %v2562 = vmul.f32 %v2542, %v2560
        %v2563 = vmul.f32 %v2543, %v2560
        %v2564 = vmul.f32 %v2544, %v2560
        %v2565 = vmul.f32 %v2545, %v2560
        %v2566 = vmul.f32 %v2546, %v2560
        %v2567 = vmul.f32 %v2547, %v2560
        %v2568 = vmul.f32 %v2548, %v2560
        %v2569 = vmul.f32 %v2549, %v2560
        %v2570 = vmul.f32 %v2550, %v2560
        %v2571 = vmul.f32 %v2551, %v2560
        %v2572 = vmul.f32 %v2552, %v2560
        %v2573 = vmul.f32 %v2553, %v2560
        %v2574 = vmul.f32 %v2554, %v2560
        %v2575 = vmul.f32 %v2555, %v2560
        %v2576 = vmul.f32 %v2556, %v2560
        %v2577 = vlaneseq
        %v2578 = vshrl.u32 %v2577, 7
        %v2579 = vsub.s32 2, %v2578
        %v2580 = vrot.slane %v1486, %v2579
        %v2581 = vadd.f32 %v2561, %v2580
        %v2582 = vadd.f32 %v2562, %v2580
        %v2583 = vadd.f32 %v2563, %v2580
        %v2584 = vadd.f32 %v2564, %v2580
        %v2585 = vadd.f32 %v2565, %v2580
        %v2586 = vadd.f32 %v2566, %v2580
        %v2587 = vadd.f32 %v2567, %v2580
        %v2588 = vadd.f32 %v2568, %v2580
        %v2589 = vadd.f32 %v2569, %v2580
        %v2590 = vadd.f32 %v2570, %v2580
        %v2591 = vadd.f32 %v2571, %v2580
        %v2592 = vadd.f32 %v2572, %v2580
        %v2593 = vadd.f32 %v2573, %v2580
        %v2594 = vadd.f32 %v2574, %v2580
        %v2595 = vadd.f32 %v2575, %v2580
        %v2596 = vadd.f32 %v2576, %v2580
        %v2597 = vmax.f32 %v2581, 0.0
        %v2598 = vmax.f32 %v2582, 0.0
        %v2599 = vmax.f32 %v2583, 0.0
        %v2600 = vmax.f32 %v2584, 0.0
        %v2601 = vmax.f32 %v2585, 0.0
        %v2602 = vmax.f32 %v2586, 0.0
        %v2603 = vmax.f32 %v2587, 0.0
        %v2604 = vmax.f32 %v2588, 0.0
        %v2605 = vmax.f32 %v2589, 0.0
        %v2606 = vmax.f32 %v2590, 0.0
        %v2607 = vmax.f32 %v2591, 0.0
        %v2608 = vmax.f32 %v2592, 0.0
        %v2609 = vmax.f32 %v2593, 0.0
        %v2610 = vmax.f32 %v2594, 0.0
        %v2611 = vmax.f32 %v2595, 0.0
        %v2612 = vmax.f32 %v2596, 0.0
        %v2613 = vpack.c.bf16 %v2598, %v2597
        %v2614 = vpack.c.bf16 %v2600, %v2599
        %v2615 = vpack.c.bf16 %v2602, %v2601
        %v2616 = vpack.c.bf16 %v2604, %v2603
        %v2617 = vpack.c.bf16 %v2606, %v2605
        %v2618 = vpack.c.bf16 %v2608, %v2607
        %v2619 = vpack.c.bf16 %v2610, %v2609
        %v2620 = vpack.c.bf16 %v2612, %v2611
        %v2621 = vlaneseq
        %v2622 = vshrl.u32 %v2621, 7
        %v2623 = vsub.s32 1, %v2622
        %v2624 = vrot.slane %v1484, %v2623
        %v2641 = vunpack.c.l.b16 %v1519
        %v2642 = vunpack.c.l.b16 %v1520
        %v2643 = vunpack.c.l.b16 %v1521
        %v2644 = vunpack.c.l.b16 %v1522
        %v2645 = vunpack.c.l.b16 %v1523
        %v2646 = vunpack.c.l.b16 %v1524
        %v2647 = vunpack.c.l.b16 %v1525
        %v2648 = vunpack.c.l.b16 %v1526
        %v2649 = vunpack.c.l.b16 %v1527
        %v2650 = vunpack.c.l.b16 %v1528
        %v2651 = vunpack.c.l.b16 %v1529
        %v2652 = vunpack.c.l.b16 %v1530
        %v2653 = vunpack.c.l.b16 %v1531
        %v2654 = vunpack.c.l.b16 %v1532
        %v2655 = vunpack.c.l.b16 %v1533
        %v2656 = vunpack.c.l.b16 %v1534
        %v2657 = vpack.c.b16 %v2642, %v2641
        %v2658 = vpack.c.b16 %v2644, %v2643
        %v2659 = vpack.c.b16 %v2646, %v2645
        %v2660 = vpack.c.b16 %v2648, %v2647
        %v2661 = vpack.c.b16 %v2650, %v2649
        %v2662 = vpack.c.b16 %v2652, %v2651
        %v2663 = vpack.c.b16 %v2654, %v2653
        %v2664 = vpack.c.b16 %v2656, %v2655
        %2673 = vmatprep.subr.bf16.mxu0 0
        %2674 = vmatpush1.bf16.msra.mxu0 %v2657
        %2675 = vmatprep.subr.bf16.mxu0 0
        %2676 = vmatpush1.bf16.msra.mxu0 %v2658
        %2677 = vmatprep.subr.bf16.mxu0 0
        %2678 = vmatpush1.bf16.msra.mxu0 %v2659
        %2679 = vmatprep.subr.bf16.mxu0 0
        %2680 = vmatpush1.bf16.msra.mxu0 %v2660
        %2681 = vmatprep.subr.bf16.mxu0 0
        %2682 = vmatpush1.bf16.msra.mxu0 %v2661
        %2683 = vmatprep.subr.bf16.mxu0 0
        %2684 = vmatpush1.bf16.msra.mxu0 %v2662
        %2685 = vmatprep.subr.bf16.mxu0 0
        %2686 = vmatpush1.bf16.msra.mxu0 %v2663
        %2687 = vmatprep.subr.bf16.mxu0 0
        %2688 = vmatpush1.bf16.msra.mxu0 %v2664
        %2689 = vmatprep.subr.bf16.mxu0 0
        %2690 = vmatpush1.bf16.msra.mxu0 0
        %2691 = vmatprep.subr.bf16.mxu0 0
        %2692 = vmatpush1.bf16.msra.mxu0 0
        %2693 = vmatprep.subr.bf16.mxu0 0
        %2694 = vmatpush1.bf16.msra.mxu0 0
        %2695 = vmatprep.subr.bf16.mxu0 0
        %2696 = vmatpush1.bf16.msra.mxu0 0
        %2697 = vmatprep.subr.bf16.mxu0 0
        %2698 = vmatpush1.bf16.msra.mxu0 0
        %2699 = vmatprep.subr.bf16.mxu0 0
        %2700 = vmatpush1.bf16.msra.mxu0 0
        %2701 = vmatprep.subr.bf16.mxu0 0
        %2702 = vmatpush1.bf16.msra.mxu0 0
        %2703 = vmatprep.subr.bf16.mxu0 0
        %2704 = vmatpush1.bf16.msra.mxu0 0
        %2705 = vmatprep.mubr.bf16.mxu0 0
        %2706 = vmatmul.mubr.bf16.gmra.mrb[0].mxu0 %v2613
        %v2707 = vpop.f32.mrb[0].mxu0
        %v2708 = vadd.f32 %v2624, %v2707
        %v2709 = vpop.f32.mrb[0].mxu0
        %v2710 = vpop.f32.mrb[0].mxu0
        %v2711 = vadd.f32 %v2624, %v2710
        %v2712 = vpop.f32.mrb[0].mxu0
        %2713 = vmatprep.mubr.bf16.mxu0 0
        %2714 = vmatmul.mubr.bf16.gmra.mrb[0].mxu0 %v2614
        %v2715 = vpop.f32.mrb[0].mxu0
        %v2716 = vadd.f32 %v2624, %v2715
        %v2717 = vpop.f32.mrb[0].mxu0
        %v2718 = vpop.f32.mrb[0].mxu0
        %v2719 = vadd.f32 %v2624, %v2718
        %v2720 = vpop.f32.mrb[0].mxu0
        %2721 = vmatprep.mubr.bf16.mxu0 0
        %2722 = vmatmul.mubr.bf16.gmra.mrb[0].mxu0 %v2615
        %v2723 = vpop.f32.mrb[0].mxu0
        %v2724 = vadd.f32 %v2624, %v2723
        %v2725 = vpop.f32.mrb[0].mxu0
        %v2726 = vpop.f32.mrb[0].mxu0
        %v2727 = vadd.f32 %v2624, %v2726
        %v2728 = vpop.f32.mrb[0].mxu0
        %2729 = vmatprep.mubr.bf16.mxu0 0
        %2730 = vmatmul.mubr.bf16.gmra.mrb[0].mxu0 %v2616
        %v2731 = vpop.f32.mrb[0].mxu0
        %v2732 = vadd.f32 %v2624, %v2731
        %v2733 = vpop.f32.mrb[0].mxu0
        %v2734 = vpop.f32.mrb[0].mxu0
        %v2735 = vadd.f32 %v2624, %v2734
        %v2736 = vpop.f32.mrb[0].mxu0
        %2737 = vmatprep.mubr.bf16.mxu0 0
        %2738 = vmatmul.mubr.bf16.gmra.mrb[0].mxu0 %v2617
        %v2739 = vpop.f32.mrb[0].mxu0
        %v2740 = vadd.f32 %v2624, %v2739
        %v2741 = vpop.f32.mrb[0].mxu0
        %v2742 = vpop.f32.mrb[0].mxu0
        %v2743 = vadd.f32 %v2624, %v2742
        %v2744 = vpop.f32.mrb[0].mxu0
        %2745 = vmatprep.mubr.bf16.mxu0 0
        %2746 = vmatmul.mubr.bf16.gmra.mrb[0].mxu0 %v2618
        %v2747 = vpop.f32.mrb[0].mxu0
        %v2748 = vadd.f32 %v2624, %v2747
        %v2749 = vpop.f32.mrb[0].mxu0
        %v2750 = vpop.f32.mrb[0].mxu0
        %v2751 = vadd.f32 %v2624, %v2750
        %v2752 = vpop.f32.mrb[0].mxu0
        %2753 = vmatprep.mubr.bf16.mxu0 0
        %2754 = vmatmul.mubr.bf16.gmra.mrb[0].mxu0 %v2619
        %v2755 = vpop.f32.mrb[0].mxu0
        %v2756 = vadd.f32 %v2624, %v2755
        %v2757 = vpop.f32.mrb[0].mxu0
        %v2758 = vpop.f32.mrb[0].mxu0
        %v2759 = vadd.f32 %v2624, %v2758
        %v2760 = vpop.f32.mrb[0].mxu0
        %2761 = vmatprep.mubr.bf16.mxu0 0
        %2762 = vmatmul.mubr.bf16.gmra.mrb[0].mxu0 %v2620
        %v2763 = vpop.f32.mrb[0].mxu0
        %v2764 = vadd.f32 %v2624, %v2763
        %v2765 = vpop.f32.mrb[0].mxu0
        %v2766 = vpop.f32.mrb[0].mxu0
        %v2767 = vadd.f32 %v2624, %v2766
        %v2768 = vpop.f32.mrb[0].mxu0
        %2769 = vdwg.mxu0
        %v2770 = vmul.f32 %v2708, %v2342
        %v2771 = vmul.f32 %v2711, %v2347
        %v2772 = vmul.f32 %v2716, %v2352
        %v2773 = vmul.f32 %v2719, %v2357
        %v2774 = vmul.f32 %v2724, %v2362
        %v2775 = vmul.f32 %v2727, %v2367
        %v2776 = vmul.f32 %v2732, %v2372
        %v2777 = vmul.f32 %v2735, %v2377
        %v2778 = vmul.f32 %v2740, %v2382
        %v2779 = vmul.f32 %v2743, %v2387
        %v2780 = vmul.f32 %v2748, %v2392
        %v2781 = vmul.f32 %v2751, %v2397
        %v2782 = vmul.f32 %v2756, %v2402
        %v2783 = vmul.f32 %v2759, %v2407
        %v2784 = vmul.f32 %v2764, %v2412
        %v2785 = vmul.f32 %v2767, %v2417
        %v2786 = vadd.f32 %v2770, %v2771
        %v2787 = vadd.f32 %v2786, %v2772
        %v2788 = vadd.f32 %v2787, %v2773
        %v2789 = vadd.f32 %v2788, %v2774
        %v2790 = vadd.f32 %v2789, %v2775
        %v2791 = vadd.f32 %v2790, %v2776
        %v2792 = vadd.f32 %v2791, %v2777
        %v2793 = vadd.f32 %v2792, %v2778
        %v2794 = vadd.f32 %v2793, %v2779
        %v2795 = vadd.f32 %v2794, %v2780
        %v2796 = vadd.f32 %v2795, %v2781
        %v2797 = vadd.f32 %v2796, %v2782
        %v2798 = vadd.f32 %v2797, %v2783
        %v2799 = vadd.f32 %v2798, %v2784
        %v2800 = vadd.f32 %v2799, %v2785
        %v2801 = vrot.slane %v2800, 4
        %v2802 = vadd.f32 %v2800, %v2801
        %v2803 = vrot.slane %v2802, 2
        %v2804 = vadd.f32 %v2802, %v2803
        %v2805 = vrot.slane %v2804, 1
        %v2806 = vadd.f32 %v2804, %v2805
        %v2807 = vmul.f32 %v2806, %v2458
        %v2808 = vlaneseq
        %v2809 = vshrl.u32 %v2808, 7
        %v2810 = vsub.s32 0, %v2809
        %v2811 = vrot.slane %v2807, %v2810
        %v2812 = vsub.f32 %v2708, %v2811
        %v2813 = vsub.f32 %v2711, %v2811
        %v2814 = vsub.f32 %v2716, %v2811
        %v2815 = vsub.f32 %v2719, %v2811
        %v2816 = vsub.f32 %v2724, %v2811
        %v2817 = vsub.f32 %v2727, %v2811
        %v2818 = vsub.f32 %v2732, %v2811
        %v2819 = vsub.f32 %v2735, %v2811
        %v2820 = vsub.f32 %v2740, %v2811
        %v2821 = vsub.f32 %v2743, %v2811
        %v2822 = vsub.f32 %v2748, %v2811
        %v2823 = vsub.f32 %v2751, %v2811
        %v2824 = vsub.f32 %v2756, %v2811
        %v2825 = vsub.f32 %v2759, %v2811
        %v2826 = vsub.f32 %v2764, %v2811
        %v2827 = vsub.f32 %v2767, %v2811
        %v2828 = vmul.f32 %v2812, %v2342
        %v2829 = vmul.f32 %v2813, %v2347
        %v2830 = vmul.f32 %v2814, %v2352
        %v2831 = vmul.f32 %v2815, %v2357
        %v2832 = vmul.f32 %v2816, %v2362
        %v2833 = vmul.f32 %v2817, %v2367
        %v2834 = vmul.f32 %v2818, %v2372
        %v2835 = vmul.f32 %v2819, %v2377
        %v2836 = vmul.f32 %v2820, %v2382
        %v2837 = vmul.f32 %v2821, %v2387
        %v2838 = vmul.f32 %v2822, %v2392
        %v2839 = vmul.f32 %v2823, %v2397
        %v2840 = vmul.f32 %v2824, %v2402
        %v2841 = vmul.f32 %v2825, %v2407
        %v2842 = vmul.f32 %v2826, %v2412
        %v2843 = vmul.f32 %v2827, %v2417
        %v2844 = vmul.f32 %v2828, %v2828
        %v2845 = vmul.f32 %v2829, %v2829
        %v2846 = vmul.f32 %v2830, %v2830
        %v2847 = vmul.f32 %v2831, %v2831
        %v2848 = vmul.f32 %v2832, %v2832
        %v2849 = vmul.f32 %v2833, %v2833
        %v2850 = vmul.f32 %v2834, %v2834
        %v2851 = vmul.f32 %v2835, %v2835
        %v2852 = vmul.f32 %v2836, %v2836
        %v2853 = vmul.f32 %v2837, %v2837
        %v2854 = vmul.f32 %v2838, %v2838
        %v2855 = vmul.f32 %v2839, %v2839
        %v2856 = vmul.f32 %v2840, %v2840
        %v2857 = vmul.f32 %v2841, %v2841
        %v2858 = vmul.f32 %v2842, %v2842
        %v2859 = vmul.f32 %v2843, %v2843
        %v2860 = vadd.f32 %v2844, %v2845
        %v2861 = vadd.f32 %v2860, %v2846
        %v2862 = vadd.f32 %v2861, %v2847
        %v2863 = vadd.f32 %v2862, %v2848
        %v2864 = vadd.f32 %v2863, %v2849
        %v2865 = vadd.f32 %v2864, %v2850
        %v2866 = vadd.f32 %v2865, %v2851
        %v2867 = vadd.f32 %v2866, %v2852
        %v2868 = vadd.f32 %v2867, %v2853
        %v2869 = vadd.f32 %v2868, %v2854
        %v2870 = vadd.f32 %v2869, %v2855
        %v2871 = vadd.f32 %v2870, %v2856
        %v2872 = vadd.f32 %v2871, %v2857
        %v2873 = vadd.f32 %v2872, %v2858
        %v2874 = vadd.f32 %v2873, %v2859
        %v2875 = vrot.slane %v2874, 4
        %v2876 = vadd.f32 %v2874, %v2875
        %v2877 = vrot.slane %v2876, 2
        %v2878 = vadd.f32 %v2876, %v2877
        %v2879 = vrot.slane %v2878, 1
        %v2880 = vadd.f32 %v2878, %v2879
        %v2881 = vmul.f32 %v2880, %v2458
        %v2882 = vadd.f32 %v2881, 1e-05
        %v2883 = vrsqrt.pop %v2882
        %v2884 = vlaneseq
        %v2885 = vshrl.u32 %v2884, 7
        %v2886 = vsub.s32 0, %v2885
        %v2887 = vrot.slane %v2883, %v2886
        %v2888 = vmul.f32 %v2812, %v2887
        %v2889 = vmul.f32 %v2813, %v2887
        %v2890 = vmul.f32 %v2814, %v2887
        %v2891 = vmul.f32 %v2815, %v2887
        %v2892 = vmul.f32 %v2816, %v2887
        %v2893 = vmul.f32 %v2817, %v2887
        %v2894 = vmul.f32 %v2818, %v2887
        %v2895 = vmul.f32 %v2819, %v2887
        %v2896 = vmul.f32 %v2820, %v2887
        %v2897 = vmul.f32 %v2821, %v2887
        %v2898 = vmul.f32 %v2822, %v2887
        %v2899 = vmul.f32 %v2823, %v2887
        %v2900 = vmul.f32 %v2824, %v2887
        %v2901 = vmul.f32 %v2825, %v2887
        %v2902 = vmul.f32 %v2826, %v2887
        %v2903 = vmul.f32 %v2827, %v2887
        %v2904 = vlaneseq
        %v2905 = vshrl.u32 %v2904, 7
        %v2906 = vsub.s32 2, %v2905
        %v2907 = vrot.slane %v1484, %v2906
        %v2908 = vmul.f32 %v2888, %v2907
        %v2909 = vmul.f32 %v2889, %v2907
        %v2910 = vmul.f32 %v2890, %v2907
        %v2911 = vmul.f32 %v2891, %v2907
        %v2912 = vmul.f32 %v2892, %v2907
        %v2913 = vmul.f32 %v2893, %v2907
        %v2914 = vmul.f32 %v2894, %v2907
        %v2915 = vmul.f32 %v2895, %v2907
        %v2916 = vmul.f32 %v2896, %v2907
        %v2917 = vmul.f32 %v2897, %v2907
        %v2918 = vmul.f32 %v2898, %v2907
        %v2919 = vmul.f32 %v2899, %v2907
        %v2920 = vmul.f32 %v2900, %v2907
        %v2921 = vmul.f32 %v2901, %v2907
        %v2922 = vmul.f32 %v2902, %v2907
        %v2923 = vmul.f32 %v2903, %v2907
        %v2924 = vlaneseq
        %v2925 = vshrl.u32 %v2924, 7
        %v2926 = vsub.s32 3, %v2925
        %v2927 = vrot.slane %v1484, %v2926
        %v2928 = vadd.f32 %v2908, %v2927
        %v2929 = vadd.f32 %v2909, %v2927
        %v2930 = vadd.f32 %v2910, %v2927
        %v2931 = vadd.f32 %v2911, %v2927
        %v2932 = vadd.f32 %v2912, %v2927
        %v2933 = vadd.f32 %v2913, %v2927
        %v2934 = vadd.f32 %v2914, %v2927
        %v2935 = vadd.f32 %v2915, %v2927
        %v2936 = vadd.f32 %v2916, %v2927
        %v2937 = vadd.f32 %v2917, %v2927
        %v2938 = vadd.f32 %v2918, %v2927
        %v2939 = vadd.f32 %v2919, %v2927
        %v2940 = vadd.f32 %v2920, %v2927
        %v2941 = vadd.f32 %v2921, %v2927
        %v2942 = vadd.f32 %v2922, %v2927
        %v2943 = vadd.f32 %v2923, %v2927
        %v2944 = vmax.f32 %v2928, 0.0
        %v2945 = vmax.f32 %v2929, 0.0
        %v2946 = vmax.f32 %v2930, 0.0
        %v2947 = vmax.f32 %v2931, 0.0
        %v2948 = vmax.f32 %v2932, 0.0
        %v2949 = vmax.f32 %v2933, 0.0
        %v2950 = vmax.f32 %v2934, 0.0
        %v2951 = vmax.f32 %v2935, 0.0
        %v2952 = vmax.f32 %v2936, 0.0
        %v2953 = vmax.f32 %v2937, 0.0
        %v2954 = vmax.f32 %v2938, 0.0
        %v2955 = vmax.f32 %v2939, 0.0
        %v2956 = vmax.f32 %v2940, 0.0
        %v2957 = vmax.f32 %v2941, 0.0
        %v2958 = vmax.f32 %v2942, 0.0
        %v2959 = vmax.f32 %v2943, 0.0
        %v2960 = vld [vmem:[#allocation12] sm:$0xf]
        %v2961 = vld [vmem:[#allocation12 + $0x4] sm:$0xf]
        %v2962 = vld [vmem:[#allocation12 + $0x8] sm:$0xf]
        %v2963 = vld [vmem:[#allocation12 + $0xc] sm:$0xf]
        %v2964 = vld [vmem:[#allocation12 + $0x10] sm:$0xf]
        %v2965 = vld [vmem:[#allocation12 + $0x14] sm:$0xf]
        %v2966 = vld [vmem:[#allocation12 + $0x18] sm:$0xf]
        %v2967 = vld [vmem:[#allocation12 + $0x1c] sm:$0xf]
        %v2968 = vld [vmem:[#allocation12 + $0x20] sm:$0xf]
        %v2969 = vld [vmem:[#allocation12 + $0x24] sm:$0xf]
        %v2970 = vld [vmem:[#allocation12 + $0x28] sm:$0xf]
        %v2971 = vld [vmem:[#allocation12 + $0x2c] sm:$0xf]
        %v2972 = vld [vmem:[#allocation12 + $0x30] sm:$0xf]
        %v2973 = vld [vmem:[#allocation12 + $0x34] sm:$0xf]
        %v2974 = vld [vmem:[#allocation12 + $0x38] sm:$0xf]
        %v2975 = vld [vmem:[#allocation12 + $0x3c] sm:$0xf]
        %v2976 = vpack.c.bf16 %v1437, %v1436
        %v2977 = vpack.c.bf16 %v1439, %v1438
        %v2978 = vpack.c.bf16 %v1441, %v1440
        %v2979 = vpack.c.bf16 %v1443, %v1442
        %v2980 = vpack.c.bf16 %v1445, %v1444
        %v2981 = vpack.c.bf16 %v1447, %v1446
        %v2982 = vpack.c.bf16 %v1449, %v1448
        %v2983 = vpack.c.bf16 %v1451, %v1450
        %v3000 = vunpack.c.l.b16 %v2960
        %v3001 = vunpack.c.l.b16 %v2961
        %v3002 = vunpack.c.l.b16 %v2962
        %v3003 = vunpack.c.l.b16 %v2963
        %v3004 = vunpack.c.l.b16 %v2964
        %v3005 = vunpack.c.l.b16 %v2965
        %v3006 = vunpack.c.l.b16 %v2966
        %v3007 = vunpack.c.l.b16 %v2967
        %v3008 = vunpack.c.l.b16 %v2968
        %v3009 = vunpack.c.l.b16 %v2969
        %v3010 = vunpack.c.l.b16 %v2970
        %v3011 = vunpack.c.l.b16 %v2971
        %v3012 = vunpack.c.l.b16 %v2972
        %v3013 = vunpack.c.l.b16 %v2973
        %v3014 = vunpack.c.l.b16 %v2974
        %v3015 = vunpack.c.l.b16 %v2975
        %v3016 = vpack.c.b16 %v3001, %v3000
        %v3017 = vpack.c.b16 %v3003, %v3002
        %v3018 = vpack.c.b16 %v3005, %v3004
        %v3019 = vpack.c.b16 %v3007, %v3006
        %v3020 = vpack.c.b16 %v3009, %v3008
        %v3021 = vpack.c.b16 %v3011, %v3010
        %v3022 = vpack.c.b16 %v3013, %v3012
        %v3023 = vpack.c.b16 %v3015, %v3014
        %3032 = vmatprep.subr.bf16.mxu0 0
        %3033 = vmatpush1.bf16.msra.mxu0 %v2976
        %3034 = vmatprep.subr.bf16.mxu0 0
        %3035 = vmatpush1.bf16.msra.mxu0 %v2977
        %3036 = vmatprep.subr.bf16.mxu0 0
        %3037 = vmatpush1.bf16.msra.mxu0 %v2978
        %3038 = vmatprep.subr.bf16.mxu0 0
        %3039 = vmatpush1.bf16.msra.mxu0 %v2979
        %3040 = vmatprep.subr.bf16.mxu0 0
        %3041 = vmatpush1.bf16.msra.mxu0 %v2980
        %3042 = vmatprep.subr.bf16.mxu0 0
        %3043 = vmatpush1.bf16.msra.mxu0 %v2981
        %3044 = vmatprep.subr.bf16.mxu0 0
        %3045 = vmatpush1.bf16.msra.mxu0 %v2982
        %3046 = vmatprep.subr.bf16.mxu0 0
        %3047 = vmatpush1.bf16.msra.mxu0 %v2983
        %3048 = vmatprep.subr.bf16.mxu0 0
        %3049 = vmatpush1.bf16.msra.mxu0 0
        %3050 = vmatprep.subr.bf16.mxu0 0
        %3051 = vmatpush1.bf16.msra.mxu0 0
        %3052 = vmatprep.subr.bf16.mxu0 0
        %3053 = vmatpush1.bf16.msra.mxu0 0
        %3054 = vmatprep.subr.bf16.mxu0 0
        %3055 = vmatpush1.bf16.msra.mxu0 0
        %3056 = vmatprep.subr.bf16.mxu0 0
        %3057 = vmatpush1.bf16.msra.mxu0 0
        %3058 = vmatprep.subr.bf16.mxu0 0
        %3059 = vmatpush1.bf16.msra.mxu0 0
        %3060 = vmatprep.subr.bf16.mxu0 0
        %3061 = vmatpush1.bf16.msra.mxu0 0
        %3062 = vmatprep.subr.bf16.mxu0 0
        %3063 = vmatpush1.bf16.msra.mxu0 0
        %3064 = vmatprep.mubr.bf16.mxu0 0
        %3065 = vmatmul.mubr.bf16.gmra.mrb[0].mxu0 %v3016
        %v3066 = vpop.f32.mrb[0].mxu0
        %v3067 = vadd.f32 0.0, %v3066
        %v3068 = vpop.f32.mrb[0].mxu0
        %v3069 = vpop.f32.mrb[0].mxu0
        %v3070 = vadd.f32 0.0, %v3069
        %v3071 = vpop.f32.mrb[0].mxu0
        %3072 = vmatprep.mubr.bf16.mxu0 0
        %3073 = vmatmul.mubr.bf16.gmra.mrb[0].mxu0 %v3017
        %v3074 = vpop.f32.mrb[0].mxu0
        %v3075 = vadd.f32 0.0, %v3074
        %v3076 = vpop.f32.mrb[0].mxu0
        %v3077 = vpop.f32.mrb[0].mxu0
        %v3078 = vadd.f32 0.0, %v3077
        %v3079 = vpop.f32.mrb[0].mxu0
        %3080 = vmatprep.mubr.bf16.mxu0 0
        %3081 = vmatmul.mubr.bf16.gmra.mrb[0].mxu0 %v3018
        %v3082 = vpop.f32.mrb[0].mxu0
        %v3083 = vadd.f32 0.0, %v3082
        %v3084 = vpop.f32.mrb[0].mxu0
        %v3085 = vpop.f32.mrb[0].mxu0
        %v3086 = vadd.f32 0.0, %v3085
        %v3087 = vpop.f32.mrb[0].mxu0
        %3088 = vmatprep.mubr.bf16.mxu0 0
        %3089 = vmatmul.mubr.bf16.gmra.mrb[0].mxu0 %v3019
        %v3090 = vpop.f32.mrb[0].mxu0
        %v3091 = vadd.f32 0.0, %v3090
        %v3092 = vpop.f32.mrb[0].mxu0
        %v3093 = vpop.f32.mrb[0].mxu0
        %v3094 = vadd.f32 0.0, %v3093
        %v3095 = vpop.f32.mrb[0].mxu0
        %3096 = vmatprep.mubr.bf16.mxu0 0
        %3097 = vmatmul.mubr.bf16.gmra.mrb[0].mxu0 %v3020
        %v3098 = vpop.f32.mrb[0].mxu0
        %v3099 = vadd.f32 0.0, %v3098
        %v3100 = vpop.f32.mrb[0].mxu0
        %v3101 = vpop.f32.mrb[0].mxu0
        %v3102 = vadd.f32 0.0, %v3101
        %v3103 = vpop.f32.mrb[0].mxu0
        %3104 = vmatprep.mubr.bf16.mxu0 0
        %3105 = vmatmul.mubr.bf16.gmra.mrb[0].mxu0 %v3021
        %v3106 = vpop.f32.mrb[0].mxu0
        %v3107 = vadd.f32 0.0, %v3106
        %v3108 = vpop.f32.mrb[0].mxu0
        %v3109 = vpop.f32.mrb[0].mxu0
        %v3110 = vadd.f32 0.0, %v3109
        %v3111 = vpop.f32.mrb[0].mxu0
        %3112 = vmatprep.mubr.bf16.mxu0 0
        %3113 = vmatmul.mubr.bf16.gmra.mrb[0].mxu0 %v3022
        %v3114 = vpop.f32.mrb[0].mxu0
        %v3115 = vadd.f32 0.0, %v3114
        %v3116 = vpop.f32.mrb[0].mxu0
        %v3117 = vpop.f32.mrb[0].mxu0
        %v3118 = vadd.f32 0.0, %v3117
        %v3119 = vpop.f32.mrb[0].mxu0
        %3120 = vmatprep.mubr.bf16.mxu0 0
        %3121 = vmatmul.mubr.bf16.gmra.mrb[0].mxu0 %v3023
        %v3122 = vpop.f32.mrb[0].mxu0
        %v3123 = vadd.f32 0.0, %v3122
        %v3124 = vpop.f32.mrb[0].mxu0
        %v3125 = vpop.f32.mrb[0].mxu0
        %v3126 = vadd.f32 0.0, %v3125
        %v3127 = vpop.f32.mrb[0].mxu0
        %3128 = vdwg.mxu0
        %v3129 = vadd.f32 %v1436, %v3067
        %v3130 = vadd.f32 %v1437, %v3070
        %v3131 = vadd.f32 %v1438, %v3075
        %v3132 = vadd.f32 %v1439, %v3078
        %v3133 = vadd.f32 %v1440, %v3083
        %v3134 = vadd.f32 %v1441, %v3086
        %v3135 = vadd.f32 %v1442, %v3091
        %v3136 = vadd.f32 %v1443, %v3094
        %v3137 = vadd.f32 %v1444, %v3099
        %v3138 = vadd.f32 %v1445, %v3102
        %v3139 = vadd.f32 %v1446, %v3107
        %v3140 = vadd.f32 %v1447, %v3110
        %v3141 = vadd.f32 %v1448, %v3115
        %v3142 = vadd.f32 %v1449, %v3118
        %v3143 = vadd.f32 %v1450, %v3123
        %v3144 = vadd.f32 %v1451, %v3126
        %v3145 = vpack.c.bf16 %v3130, %v3129
        %v3146 = vpack.c.bf16 %v3132, %v3131
        %v3147 = vpack.c.bf16 %v3134, %v3133
        %v3148 = vpack.c.bf16 %v3136, %v3135
        %v3149 = vpack.c.bf16 %v3138, %v3137
        %v3150 = vpack.c.bf16 %v3140, %v3139
        %v3151 = vpack.c.bf16 %v3142, %v3141
        %v3152 = vpack.c.bf16 %v3144, %v3143
        %v3153 = vlaneseq
        %v3154 = vshrl.u32 %v3153, 7
        %v3155 = vsub.s32 3, %v3154
        %v3156 = vrot.slane %v1486, %v3155
        %v3173 = vunpack.c.l.b16 %v1503
        %v3174 = vunpack.c.l.b16 %v1504
        %v3175 = vunpack.c.l.b16 %v1505
        %v3176 = vunpack.c.l.b16 %v1506
        %v3177 = vunpack.c.l.b16 %v1507
        %v3178 = vunpack.c.l.b16 %v1508
        %v3179 = vunpack.c.l.b16 %v1509
        %v3180 = vunpack.c.l.b16 %v1510
        %v3181 = vunpack.c.l.b16 %v1511
        %v3182 = vunpack.c.l.b16 %v1512
        %v3183 = vunpack.c.l.b16 %v1513
        %v3184 = vunpack.c.l.b16 %v1514
        %v3185 = vunpack.c.l.b16 %v1515
        %v3186 = vunpack.c.l.b16 %v1516
        %v3187 = vunpack.c.l.b16 %v1517
        %v3188 = vunpack.c.l.b16 %v1518
        %v3189 = vpack.c.b16 %v3174, %v3173
        %v3190 = vpack.c.b16 %v3176, %v3175
        %v3191 = vpack.c.b16 %v3178, %v3177
        %v3192 = vpack.c.b16 %v3180, %v3179
        %v3193 = vpack.c.b16 %v3182, %v3181
        %v3194 = vpack.c.b16 %v3184, %v3183
        %v3195 = vpack.c.b16 %v3186, %v3185
        %v3196 = vpack.c.b16 %v3188, %v3187
        %3205 = vmatprep.subr.bf16.mxu0 0
        %3206 = vmatpush1.bf16.msra.mxu0 %v3189
        %3207 = vmatprep.subr.bf16.mxu0 0
        %3208 = vmatpush1.bf16.msra.mxu0 %v3190
        %3209 = vmatprep.subr.bf16.mxu0 0
        %3210 = vmatpush1.bf16.msra.mxu0 %v3191
        %3211 = vmatprep.subr.bf16.mxu0 0
        %3212 = vmatpush1.bf16.msra.mxu0 %v3192
        %3213 = vmatprep.subr.bf16.mxu0 0
        %3214 = vmatpush1.bf16.msra.mxu0 %v3193
        %3215 = vmatprep.subr.bf16.mxu0 0
        %3216 = vmatpush1.bf16.msra.mxu0 %v3194
        %3217 = vmatprep.subr.bf16.mxu0 0
        %3218 = vmatpush1.bf16.msra.mxu0 %v3195
        %3219 = vmatprep.subr.bf16.mxu0 0
        %3220 = vmatpush1.bf16.msra.mxu0 %v3196
        %3221 = vmatprep.subr.bf16.mxu0 0
        %3222 = vmatpush1.bf16.msra.mxu0 0
        %3223 = vmatprep.subr.bf16.mxu0 0
        %3224 = vmatpush1.bf16.msra.mxu0 0
        %3225 = vmatprep.subr.bf16.mxu0 0
        %3226 = vmatpush1.bf16.msra.mxu0 0
        %3227 = vmatprep.subr.bf16.mxu0 0
        %3228 = vmatpush1.bf16.msra.mxu0 0
        %3229 = vmatprep.subr.bf16.mxu0 0
        %3230 = vmatpush1.bf16.msra.mxu0 0
        %3231 = vmatprep.subr.bf16.mxu0 0
        %3232 = vmatpush1.bf16.msra.mxu0 0
        %3233 = vmatprep.subr.bf16.mxu0 0
        %3234 = vmatpush1.bf16.msra.mxu0 0
        %3235 = vmatprep.subr.bf16.mxu0 0
        %3236 = vmatpush1.bf16.msra.mxu0 0
        %3237 = vmatprep.mubr.bf16.mxu0 0
        %3238 = vmatmul.mubr.bf16.gmra.mrb[0].mxu0 %v3145
        %v3239 = vpop.f32.mrb[0].mxu0
        %v3240 = vadd.f32 %v3156, %v3239
        %v3241 = vpop.f32.mrb[0].mxu0
        %v3242 = vpop.f32.mrb[0].mxu0
        %v3243 = vadd.f32 %v3156, %v3242
        %v3244 = vpop.f32.mrb[0].mxu0
        %3245 = vmatprep.mubr.bf16.mxu0 0
        %3246 = vmatmul.mubr.bf16.gmra.mrb[0].mxu0 %v3146
        %v3247 = vpop.f32.mrb[0].mxu0
        %v3248 = vadd.f32 %v3156, %v3247
        %v3249 = vpop.f32.mrb[0].mxu0
        %v3250 = vpop.f32.mrb[0].mxu0
        %v3251 = vadd.f32 %v3156, %v3250
        %v3252 = vpop.f32.mrb[0].mxu0
        %3253 = vmatprep.mubr.bf16.mxu0 0
        %3254 = vmatmul.mubr.bf16.gmra.mrb[0].mxu0 %v3147
        %v3255 = vpop.f32.mrb[0].mxu0
        %v3256 = vadd.f32 %v3156, %v3255
        %v3257 = vpop.f32.mrb[0].mxu0
        %v3258 = vpop.f32.mrb[0].mxu0
        %v3259 = vadd.f32 %v3156, %v3258
        %v3260 = vpop.f32.mrb[0].mxu0
        %3261 = vmatprep.mubr.bf16.mxu0 0
        %3262 = vmatmul.mubr.bf16.gmra.mrb[0].mxu0 %v3148
        %v3263 = vpop.f32.mrb[0].mxu0
        %v3264 = vadd.f32 %v3156, %v3263
        %v3265 = vpop.f32.mrb[0].mxu0
        %v3266 = vpop.f32.mrb[0].mxu0
        %v3267 = vadd.f32 %v3156, %v3266
        %v3268 = vpop.f32.mrb[0].mxu0
        %3269 = vmatprep.mubr.bf16.mxu0 0
        %3270 = vmatmul.mubr.bf16.gmra.mrb[0].mxu0 %v3149
        %v3271 = vpop.f32.mrb[0].mxu0
        %v3272 = vadd.f32 %v3156, %v3271
        %v3273 = vpop.f32.mrb[0].mxu0
        %v3274 = vpop.f32.mrb[0].mxu0
        %v3275 = vadd.f32 %v3156, %v3274
        %v3276 = vpop.f32.mrb[0].mxu0
        %3277 = vmatprep.mubr.bf16.mxu0 0
        %3278 = vmatmul.mubr.bf16.gmra.mrb[0].mxu0 %v3150
        %v3279 = vpop.f32.mrb[0].mxu0
        %v3280 = vadd.f32 %v3156, %v3279
        %v3281 = vpop.f32.mrb[0].mxu0
        %v3282 = vpop.f32.mrb[0].mxu0
        %v3283 = vadd.f32 %v3156, %v3282
        %v3284 = vpop.f32.mrb[0].mxu0
        %3285 = vmatprep.mubr.bf16.mxu0 0
        %3286 = vmatmul.mubr.bf16.gmra.mrb[0].mxu0 %v3151
        %v3287 = vpop.f32.mrb[0].mxu0
        %v3288 = vadd.f32 %v3156, %v3287
        %v3289 = vpop.f32.mrb[0].mxu0
        %v3290 = vpop.f32.mrb[0].mxu0
        %v3291 = vadd.f32 %v3156, %v3290
        %v3292 = vpop.f32.mrb[0].mxu0
        %3293 = vmatprep.mubr.bf16.mxu0 0
        %3294 = vmatmul.mubr.bf16.gmra.mrb[0].mxu0 %v3152
        %v3295 = vpop.f32.mrb[0].mxu0
        %v3296 = vadd.f32 %v3156, %v3295
        %v3297 = vpop.f32.mrb[0].mxu0
        %v3298 = vpop.f32.mrb[0].mxu0
        %v3299 = vadd.f32 %v3156, %v3298
        %v3300 = vpop.f32.mrb[0].mxu0
        %3301 = vdwg.mxu0
        %3303 = vset.pattern.permute.xlu0 1
        %3304 = vperm.xlu0 %3303, %v1468
        %v3305 = vpop.permute.xlu0 %3304
        %3308 = vset.pattern.permute.xlu0 1
        %3309 = vperm.xlu0 %3308, %v1469
        %v3310 = vpop.permute.xlu0 %3309
        %3313 = vset.pattern.permute.xlu0 1
        %3314 = vperm.xlu0 %3313, %v1470
        %v3315 = vpop.permute.xlu0 %3314
        %3318 = vset.pattern.permute.xlu0 1
        %3319 = vperm.xlu0 %3318, %v1471
        %v3320 = vpop.permute.xlu0 %3319
        %3323 = vset.pattern.permute.xlu0 1
        %3324 = vperm.xlu0 %3323, %v1472
        %v3325 = vpop.permute.xlu0 %3324
        %3328 = vset.pattern.permute.xlu0 1
        %3329 = vperm.xlu0 %3328, %v1473
        %v3330 = vpop.permute.xlu0 %3329
        %3333 = vset.pattern.permute.xlu0 1
        %3334 = vperm.xlu0 %3333, %v1474
        %v3335 = vpop.permute.xlu0 %3334
        %3338 = vset.pattern.permute.xlu0 1
        %3339 = vperm.xlu0 %3338, %v1475
        %v3340 = vpop.permute.xlu0 %3339
        %3343 = vset.pattern.permute.xlu0 1
        %3344 = vperm.xlu0 %3343, %v1476
        %v3345 = vpop.permute.xlu0 %3344
        %3348 = vset.pattern.permute.xlu0 1
        %3349 = vperm.xlu0 %3348, %v1477
        %v3350 = vpop.permute.xlu0 %3349
        %3353 = vset.pattern.permute.xlu0 1
        %3354 = vperm.xlu0 %3353, %v1478
        %v3355 = vpop.permute.xlu0 %3354
        %3358 = vset.pattern.permute.xlu0 1
        %3359 = vperm.xlu0 %3358, %v1479
        %v3360 = vpop.permute.xlu0 %3359
        %3363 = vset.pattern.permute.xlu0 1
        %3364 = vperm.xlu0 %3363, %v1480
        %v3365 = vpop.permute.xlu0 %3364
        %3368 = vset.pattern.permute.xlu0 1
        %3369 = vperm.xlu0 %3368, %v1481
        %v3370 = vpop.permute.xlu0 %3369
        %3373 = vset.pattern.permute.xlu0 1
        %3374 = vperm.xlu0 %3373, %v1482
        %v3375 = vpop.permute.xlu0 %3374
        %3378 = vset.pattern.permute.xlu0 1
        %3379 = vperm.xlu0 %3378, %v1483
        %v3380 = vpop.permute.xlu0 %3379
        %v3382 = vmul.f32 %v3240, %v3305
        %v3383 = vmul.f32 %v3243, %v3310
        %v3384 = vmul.f32 %v3248, %v3315
        %v3385 = vmul.f32 %v3251, %v3320
        %v3386 = vmul.f32 %v3256, %v3325
        %v3387 = vmul.f32 %v3259, %v3330
        %v3388 = vmul.f32 %v3264, %v3335
        %v3389 = vmul.f32 %v3267, %v3340
        %v3390 = vmul.f32 %v3272, %v3345
        %v3391 = vmul.f32 %v3275, %v3350
        %v3392 = vmul.f32 %v3280, %v3355
        %v3393 = vmul.f32 %v3283, %v3360
        %v3394 = vmul.f32 %v3288, %v3365
        %v3395 = vmul.f32 %v3291, %v3370
        %v3396 = vmul.f32 %v3296, %v3375
        %v3397 = vmul.f32 %v3299, %v3380
        %v3398 = vadd.f32 %v3382, %v3383
        %v3399 = vadd.f32 %v3398, %v3384
        %v3400 = vadd.f32 %v3399, %v3385
        %v3401 = vadd.f32 %v3400, %v3386
        %v3402 = vadd.f32 %v3401, %v3387
        %v3403 = vadd.f32 %v3402, %v3388
        %v3404 = vadd.f32 %v3403, %v3389
        %v3405 = vadd.f32 %v3404, %v3390
        %v3406 = vadd.f32 %v3405, %v3391
        %v3407 = vadd.f32 %v3406, %v3392
        %v3408 = vadd.f32 %v3407, %v3393
        %v3409 = vadd.f32 %v3408, %v3394
        %v3410 = vadd.f32 %v3409, %v3395
        %v3411 = vadd.f32 %v3410, %v3396
        %v3412 = vadd.f32 %v3411, %v3397
        %v3413 = vrot.slane %v3412, 4
        %v3414 = vadd.f32 %v3412, %v3413
        %v3415 = vrot.slane %v3414, 2
        %v3416 = vadd.f32 %v3414, %v3415
        %v3417 = vrot.slane %v3416, 1
        %v3418 = vadd.f32 %v3416, %v3417
        %3419 = vset.pattern.permute.xlu0 2
        %3420 = vperm.xlu0 %3419, %v1468
        %v3421 = vpop.permute.xlu0 %3420
        %v3423 = vmul.f32 %v3418, %v3421
        %v3424 = vlaneseq
        %v3425 = vshrl.u32 %v3424, 7
        %v3426 = vsub.s32 0, %v3425
        %v3427 = vrot.slane %v3423, %v3426
        %v3428 = vsub.f32 %v3240, %v3427
        %v3429 = vsub.f32 %v3243, %v3427
        %v3430 = vsub.f32 %v3248, %v3427
        %v3431 = vsub.f32 %v3251, %v3427
        %v3432 = vsub.f32 %v3256, %v3427
        %v3433 = vsub.f32 %v3259, %v3427
        %v3434 = vsub.f32 %v3264, %v3427
        %v3435 = vsub.f32 %v3267, %v3427
        %v3436 = vsub.f32 %v3272, %v3427
        %v3437 = vsub.f32 %v3275, %v3427
        %v3438 = vsub.f32 %v3280, %v3427
        %v3439 = vsub.f32 %v3283, %v3427
        %v3440 = vsub.f32 %v3288, %v3427
        %v3441 = vsub.f32 %v3291, %v3427
        %v3442 = vsub.f32 %v3296, %v3427
        %v3443 = vsub.f32 %v3299, %v3427
        %v3444 = vmul.f32 %v3428, %v3305
        %v3445 = vmul.f32 %v3429, %v3310
        %v3446 = vmul.f32 %v3430, %v3315
        %v3447 = vmul.f32 %v3431, %v3320
        %v3448 = vmul.f32 %v3432, %v3325
        %v3449 = vmul.f32 %v3433, %v3330
        %v3450 = vmul.f32 %v3434, %v3335
        %v3451 = vmul.f32 %v3435, %v3340
        %v3452 = vmul.f32 %v3436, %v3345
        %v3453 = vmul.f32 %v3437, %v3350
        %v3454 = vmul.f32 %v3438, %v3355
        %v3455 = vmul.f32 %v3439, %v3360
        %v3456 = vmul.f32 %v3440, %v3365
        %v3457 = vmul.f32 %v3441, %v3370
        %v3458 = vmul.f32 %v3442, %v3375
        %v3459 = vmul.f32 %v3443, %v3380
        %v3460 = vmul.f32 %v3444, %v3444
        %v3461 = vmul.f32 %v3445, %v3445
        %v3462 = vmul.f32 %v3446, %v3446
        %v3463 = vmul.f32 %v3447, %v3447
        %v3464 = vmul.f32 %v3448, %v3448
        %v3465 = vmul.f32 %v3449, %v3449
        %v3466 = vmul.f32 %v3450, %v3450
        %v3467 = vmul.f32 %v3451, %v3451
        %v3468 = vmul.f32 %v3452, %v3452
        %v3469 = vmul.f32 %v3453, %v3453
        %v3470 = vmul.f32 %v3454, %v3454
        %v3471 = vmul.f32 %v3455, %v3455
        %v3472 = vmul.f32 %v3456, %v3456
        %v3473 = vmul.f32 %v3457, %v3457
        %v3474 = vmul.f32 %v3458, %v3458
        %v3475 = vmul.f32 %v3459, %v3459
        %v3476 = vadd.f32 %v3460, %v3461
        %v3477 = vadd.f32 %v3476, %v3462
        %v3478 = vadd.f32 %v3477, %v3463
        %v3479 = vadd.f32 %v3478, %v3464
        %v3480 = vadd.f32 %v3479, %v3465
        %v3481 = vadd.f32 %v3480, %v3466
        %v3482 = vadd.f32 %v3481, %v3467
        %v3483 = vadd.f32 %v3482, %v3468
        %v3484 = vadd.f32 %v3483, %v3469
        %v3485 = vadd.f32 %v3484, %v3470
        %v3486 = vadd.f32 %v3485, %v3471
        %v3487 = vadd.f32 %v3486, %v3472
        %v3488 = vadd.f32 %v3487, %v3473
        %v3489 = vadd.f32 %v3488, %v3474
        %v3490 = vadd.f32 %v3489, %v3475
        %v3491 = vrot.slane %v3490, 4
        %v3492 = vadd.f32 %v3490, %v3491
        %v3493 = vrot.slane %v3492, 2
        %v3494 = vadd.f32 %v3492, %v3493
        %v3495 = vrot.slane %v3494, 1
        %v3496 = vadd.f32 %v3494, %v3495
        %v3497 = vmul.f32 %v3496, %v3421
        %v3498 = vadd.f32 %v3497, 1e-05
        %v3499 = vrsqrt.pop %v3498
        %v3500 = vlaneseq
        %v3501 = vshrl.u32 %v3500, 7
        %v3502 = vsub.s32 0, %v3501
        %v3503 = vrot.slane %v3499, %v3502
        %v3504 = vmul.f32 %v3428, %v3503
        %v3505 = vmul.f32 %v3429, %v3503
        %v3506 = vmul.f32 %v3430, %v3503
        %v3507 = vmul.f32 %v3431, %v3503
        %v3508 = vmul.f32 %v3432, %v3503
        %v3509 = vmul.f32 %v3433, %v3503
        %v3510 = vmul.f32 %v3434, %v3503
        %v3511 = vmul.f32 %v3435, %v3503
        %v3512 = vmul.f32 %v3436, %v3503
        %v3513 = vmul.f32 %v3437, %v3503
        %v3514 = vmul.f32 %v3438, %v3503
        %v3515 = vmul.f32 %v3439, %v3503
        %v3516 = vmul.f32 %v3440, %v3503
        %v3517 = vmul.f32 %v3441, %v3503
        %v3518 = vmul.f32 %v3442, %v3503
        %v3519 = vmul.f32 %v3443, %v3503
        %v3520 = vlaneseq
        %v3521 = vshrl.u32 %v3520, 7
        %v3522 = vsub.s32 4, %v3521
        %v3523 = vrot.slane %v1486, %v3522
        %v3524 = vmul.f32 %v3504, %v3523
        %v3525 = vmul.f32 %v3505, %v3523
        %v3526 = vmul.f32 %v3506, %v3523
        %v3527 = vmul.f32 %v3507, %v3523
        %v3528 = vmul.f32 %v3508, %v3523
        %v3529 = vmul.f32 %v3509, %v3523
        %v3530 = vmul.f32 %v3510, %v3523
        %v3531 = vmul.f32 %v3511, %v3523
        %v3532 = vmul.f32 %v3512, %v3523
        %v3533 = vmul.f32 %v3513, %v3523
        %v3534 = vmul.f32 %v3514, %v3523
        %v3535 = vmul.f32 %v3515, %v3523
        %v3536 = vmul.f32 %v3516, %v3523
        %v3537 = vmul.f32 %v3517, %v3523
        %v3538 = vmul.f32 %v3518, %v3523
        %v3539 = vmul.f32 %v3519, %v3523
        %v3540 = vlaneseq
        %v3541 = vshrl.u32 %v3540, 7
        %v3542 = vsub.s32 5, %v3541
        %v3543 = vrot.slane %v1486, %v3542
        %v3544 = vadd.f32 %v3524, %v3543
        %v3545 = vadd.f32 %v3525, %v3543
        %v3546 = vadd.f32 %v3526, %v3543
        %v3547 = vadd.f32 %v3527, %v3543
        %v3548 = vadd.f32 %v3528, %v3543
        %v3549 = vadd.f32 %v3529, %v3543
        %v3550 = vadd.f32 %v3530, %v3543
        %v3551 = vadd.f32 %v3531, %v3543
        %v3552 = vadd.f32 %v3532, %v3543
        %v3553 = vadd.f32 %v3533, %v3543
        %v3554 = vadd.f32 %v3534, %v3543
        %v3555 = vadd.f32 %v3535, %v3543
        %v3556 = vadd.f32 %v3536, %v3543
        %v3557 = vadd.f32 %v3537, %v3543
        %v3558 = vadd.f32 %v3538, %v3543
        %v3559 = vadd.f32 %v3539, %v3543
        %v3560 = vmax.f32 %v3544, 0.0
        %v3561 = vmax.f32 %v3545, 0.0
        %v3562 = vmax.f32 %v3546, 0.0
        %v3563 = vmax.f32 %v3547, 0.0
        %v3564 = vmax.f32 %v3548, 0.0
        %v3565 = vmax.f32 %v3549, 0.0
        %v3566 = vmax.f32 %v3550, 0.0
        %v3567 = vmax.f32 %v3551, 0.0
        %v3568 = vmax.f32 %v3552, 0.0
        %v3569 = vmax.f32 %v3553, 0.0
        %v3570 = vmax.f32 %v3554, 0.0
        %v3571 = vmax.f32 %v3555, 0.0
        %v3572 = vmax.f32 %v3556, 0.0
        %v3573 = vmax.f32 %v3557, 0.0
        %v3574 = vmax.f32 %v3558, 0.0
        %v3575 = vmax.f32 %v3559, 0.0
        %v3576 = vpack.c.bf16 %v3561, %v3560
        %v3577 = vpack.c.bf16 %v3563, %v3562
        %v3578 = vpack.c.bf16 %v3565, %v3564
        %v3579 = vpack.c.bf16 %v3567, %v3566
        %v3580 = vpack.c.bf16 %v3569, %v3568
        %v3581 = vpack.c.bf16 %v3571, %v3570
        %v3582 = vpack.c.bf16 %v3573, %v3572
        %v3583 = vpack.c.bf16 %v3575, %v3574
        %v3584 = vlaneseq
        %v3585 = vshrl.u32 %v3584, 7
        %v3586 = vsub.s32 4, %v3585
        %v3587 = vrot.slane %v1484, %v3586
        %v3604 = vunpack.c.l.b16 %v1535
        %v3605 = vunpack.c.l.b16 %v1536
        %v3606 = vunpack.c.l.b16 %v1537
        %v3607 = vunpack.c.l.b16 %v1538
        %v3608 = vunpack.c.l.b16 %v1539
        %v3609 = vunpack.c.l.b16 %v1540
        %v3610 = vunpack.c.l.b16 %v1541
        %v3611 = vunpack.c.l.b16 %v1542
        %v3612 = vunpack.c.l.b16 %v1543
        %v3613 = vunpack.c.l.b16 %v1544
        %v3614 = vunpack.c.l.b16 %v1545
        %v3615 = vunpack.c.l.b16 %v1546
        %v3616 = vunpack.c.l.b16 %v1547
        %v3617 = vunpack.c.l.b16 %v1548
        %v3618 = vunpack.c.l.b16 %v1549
        %v3619 = vunpack.c.l.b16 %v1550
        %v3620 = vpack.c.b16 %v3605, %v3604
        %v3621 = vpack.c.b16 %v3607, %v3606
        %v3622 = vpack.c.b16 %v3609, %v3608
        %v3623 = vpack.c.b16 %v3611, %v3610
        %v3624 = vpack.c.b16 %v3613, %v3612
        %v3625 = vpack.c.b16 %v3615, %v3614
        %v3626 = vpack.c.b16 %v3617, %v3616
        %v3627 = vpack.c.b16 %v3619, %v3618
        %3636 = vmatprep.subr.bf16.mxu0 0
        %3637 = vmatpush1.bf16.msra.mxu0 %v3620
        %3638 = vmatprep.subr.bf16.mxu0 0
        %3639 = vmatpush1.bf16.msra.mxu0 %v3621
        %3640 = vmatprep.subr.bf16.mxu0 0
        %3641 = vmatpush1.bf16.msra.mxu0 %v3622
        %3642 = vmatprep.subr.bf16.mxu0 0
        %3643 = vmatpush1.bf16.msra.mxu0 %v3623
        %3644 = vmatprep.subr.bf16.mxu0 0
        %3645 = vmatpush1.bf16.msra.mxu0 %v3624
        %3646 = vmatprep.subr.bf16.mxu0 0
        %3647 = vmatpush1.bf16.msra.mxu0 %v3625
        %3648 = vmatprep.subr.bf16.mxu0 0
        %3649 = vmatpush1.bf16.msra.mxu0 %v3626
        %3650 = vmatprep.subr.bf16.mxu0 0
        %3651 = vmatpush1.bf16.msra.mxu0 %v3627
        %3652 = vmatprep.subr.bf16.mxu0 0
        %3653 = vmatpush1.bf16.msra.mxu0 0
        %3654 = vmatprep.subr.bf16.mxu0 0
        %3655 = vmatpush1.bf16.msra.mxu0 0
        %3656 = vmatprep.subr.bf16.mxu0 0
        %3657 = vmatpush1.bf16.msra.mxu0 0
        %3658 = vmatprep.subr.bf16.mxu0 0
        %3659 = vmatpush1.bf16.msra.mxu0 0
        %3660 = vmatprep.subr.bf16.mxu0 0
        %3661 = vmatpush1.bf16.msra.mxu0 0
        %3662 = vmatprep.subr.bf16.mxu0 0
        %3663 = vmatpush1.bf16.msra.mxu0 0
        %3664 = vmatprep.subr.bf16.mxu0 0
        %3665 = vmatpush1.bf16.msra.mxu0 0
        %3666 = vmatprep.subr.bf16.mxu0 0
        %3667 = vmatpush1.bf16.msra.mxu0 0
        %3668 = vmatprep.mubr.bf16.mxu0 0
        %3669 = vmatmul.mubr.bf16.gmra.mrb[0].mxu0 %v3576
        %v3670 = vpop.f32.mrb[0].mxu0
        %v3671 = vadd.f32 %v3587, %v3670
        %v3672 = vpop.f32.mrb[0].mxu0
        %v3673 = vpop.f32.mrb[0].mxu0
        %v3674 = vadd.f32 %v3587, %v3673
        %v3675 = vpop.f32.mrb[0].mxu0
        %3676 = vmatprep.mubr.bf16.mxu0 0
        %3677 = vmatmul.mubr.bf16.gmra.mrb[0].mxu0 %v3577
        %v3678 = vpop.f32.mrb[0].mxu0
        %v3679 = vadd.f32 %v3587, %v3678
        %v3680 = vpop.f32.mrb[0].mxu0
        %v3681 = vpop.f32.mrb[0].mxu0
        %v3682 = vadd.f32 %v3587, %v3681
        %v3683 = vpop.f32.mrb[0].mxu0
        %3684 = vmatprep.mubr.bf16.mxu0 0
        %3685 = vmatmul.mubr.bf16.gmra.mrb[0].mxu0 %v3578
        %v3686 = vpop.f32.mrb[0].mxu0
        %v3687 = vadd.f32 %v3587, %v3686
        %v3688 = vpop.f32.mrb[0].mxu0
        %v3689 = vpop.f32.mrb[0].mxu0
        %v3690 = vadd.f32 %v3587, %v3689
        %v3691 = vpop.f32.mrb[0].mxu0
        %3692 = vmatprep.mubr.bf16.mxu0 0
        %3693 = vmatmul.mubr.bf16.gmra.mrb[0].mxu0 %v3579
        %v3694 = vpop.f32.mrb[0].mxu0
        %v3695 = vadd.f32 %v3587, %v3694
        %v3696 = vpop.f32.mrb[0].mxu0
        %v3697 = vpop.f32.mrb[0].mxu0
        %v3698 = vadd.f32 %v3587, %v3697
        %v3699 = vpop.f32.mrb[0].mxu0
        %3700 = vmatprep.mubr.bf16.mxu0 0
        %3701 = vmatmul.mubr.bf16.gmra.mrb[0].mxu0 %v3580
        %v3702 = vpop.f32.mrb[0].mxu0
        %v3703 = vadd.f32 %v3587, %v3702
        %v3704 = vpop.f32.mrb[0].mxu0
        %v3705 = vpop.f32.mrb[0].mxu0
        %v3706 = vadd.f32 %v3587, %v3705
        %v3707 = vpop.f32.mrb[0].mxu0
        %3708 = vmatprep.mubr.bf16.mxu0 0
        %3709 = vmatmul.mubr.bf16.gmra.mrb[0].mxu0 %v3581
        %v3710 = vpop.f32.mrb[0].mxu0
        %v3711 = vadd.f32 %v3587, %v3710
        %v3712 = vpop.f32.mrb[0].mxu0
        %v3713 = vpop.f32.mrb[0].mxu0
        %v3714 = vadd.f32 %v3587, %v3713
        %v3715 = vpop.f32.mrb[0].mxu0
        %3716 = vmatprep.mubr.bf16.mxu0 0
        %3717 = vmatmul.mubr.bf16.gmra.mrb[0].mxu0 %v3582
        %v3718 = vpop.f32.mrb[0].mxu0
        %v3719 = vadd.f32 %v3587, %v3718
        %v3720 = vpop.f32.mrb[0].mxu0
        %v3721 = vpop.f32.mrb[0].mxu0
        %v3722 = vadd.f32 %v3587, %v3721
        %v3723 = vpop.f32.mrb[0].mxu0
        %3724 = vmatprep.mubr.bf16.mxu0 0
        %3725 = vmatmul.mubr.bf16.gmra.mrb[0].mxu0 %v3583
        %v3726 = vpop.f32.mrb[0].mxu0
        %v3727 = vadd.f32 %v3587, %v3726
        %v3728 = vpop.f32.mrb[0].mxu0
        %v3729 = vpop.f32.mrb[0].mxu0
        %v3730 = vadd.f32 %v3587, %v3729
        %v3731 = vpop.f32.mrb[0].mxu0
        %3732 = vdwg.mxu0
        %v3733 = vmul.f32 %v3671, %v3305
        %v3734 = vmul.f32 %v3674, %v3310
        %v3735 = vmul.f32 %v3679, %v3315
        %v3736 = vmul.f32 %v3682, %v3320
        %v3737 = vmul.f32 %v3687, %v3325
        %v3738 = vmul.f32 %v3690, %v3330
        %v3739 = vmul.f32 %v3695, %v3335
        %v3740 = vmul.f32 %v3698, %v3340
        %v3741 = vmul.f32 %v3703, %v3345
        %v3742 = vmul.f32 %v3706, %v3350
        %v3743 = vmul.f32 %v3711, %v3355
        %v3744 = vmul.f32 %v3714, %v3360
        %v3745 = vmul.f32 %v3719, %v3365
        %v3746 = vmul.f32 %v3722, %v3370
        %v3747 = vmul.f32 %v3727, %v3375
        %v3748 = vmul.f32 %v3730, %v3380
        %v3749 = vadd.f32 %v3733, %v3734
        %v3750 = vadd.f32 %v3749, %v3735
        %v3751 = vadd.f32 %v3750, %v3736
        %v3752 = vadd.f32 %v3751, %v3737
        %v3753 = vadd.f32 %v3752, %v3738
        %v3754 = vadd.f32 %v3753, %v3739
        %v3755 = vadd.f32 %v3754, %v3740
        %v3756 = vadd.f32 %v3755, %v3741
        %v3757 = vadd.f32 %v3756, %v3742
        %v3758 = vadd.f32 %v3757, %v3743
        %v3759 = vadd.f32 %v3758, %v3744
        %v3760 = vadd.f32 %v3759, %v3745
        %v3761 = vadd.f32 %v3760, %v3746
        %v3762 = vadd.f32 %v3761, %v3747
        %v3763 = vadd.f32 %v3762, %v3748
        %v3764 = vrot.slane %v3763, 4
        %v3765 = vadd.f32 %v3763, %v3764
        %v3766 = vrot.slane %v3765, 2
        %v3767 = vadd.f32 %v3765, %v3766
        %v3768 = vrot.slane %v3767, 1
        %v3769 = vadd.f32 %v3767, %v3768
        %v3770 = vmul.f32 %v3769, %v3421
        %v3771 = vlaneseq
        %v3772 = vshrl.u32 %v3771, 7
        %v3773 = vsub.s32 0, %v3772
        %v3774 = vrot.slane %v3770, %v3773
        %v3775 = vsub.f32 %v3671, %v3774
        %v3776 = vsub.f32 %v3674, %v3774
        %v3777 = vsub.f32 %v3679, %v3774
        %v3778 = vsub.f32 %v3682, %v3774
        %v3779 = vsub.f32 %v3687, %v3774
        %v3780 = vsub.f32 %v3690, %v3774
        %v3781 = vsub.f32 %v3695, %v3774
        %v3782 = vsub.f32 %v3698, %v3774
        %v3783 = vsub.f32 %v3703, %v3774
        %v3784 = vsub.f32 %v3706, %v3774
        %v3785 = vsub.f32 %v3711, %v3774
        %v3786 = vsub.f32 %v3714, %v3774
        %v3787 = vsub.f32 %v3719, %v3774
        %v3788 = vsub.f32 %v3722, %v3774
        %v3789 = vsub.f32 %v3727, %v3774
        %v3790 = vsub.f32 %v3730, %v3774
        %v3791 = vmul.f32 %v3775, %v3305
        %v3792 = vmul.f32 %v3776, %v3310
        %v3793 = vmul.f32 %v3777, %v3315
        %v3794 = vmul.f32 %v3778, %v3320
        %v3795 = vmul.f32 %v3779, %v3325
        %v3796 = vmul.f32 %v3780, %v3330
        %v3797 = vmul.f32 %v3781, %v3335
        %v3798 = vmul.f32 %v3782, %v3340
        %v3799 = vmul.f32 %v3783, %v3345
        %v3800 = vmul.f32 %v3784, %v3350
        %v3801 = vmul.f32 %v3785, %v3355
        %v3802 = vmul.f32 %v3786, %v3360
        %v3803 = vmul.f32 %v3787, %v3365
        %v3804 = vmul.f32 %v3788, %v3370
        %v3805 = vmul.f32 %v3789, %v3375
        %v3806 = vmul.f32 %v3790, %v3380
        %v3807 = vmul.f32 %v3791, %v3791
        %v3808 = vmul.f32 %v3792, %v3792
        %v3809 = vmul.f32 %v3793, %v3793
        %v3810 = vmul.f32 %v3794, %v3794
        %v3811 = vmul.f32 %v3795, %v3795
        %v3812 = vmul.f32 %v3796, %v3796
        %v3813 = vmul.f32 %v3797, %v3797
        %v3814 = vmul.f32 %v3798, %v3798
        %v3815 = vmul.f32 %v3799, %v3799
        %v3816 = vmul.f32 %v3800, %v3800
        %v3817 = vmul.f32 %v3801, %v3801
        %v3818 = vmul.f32 %v3802, %v3802
        %v3819 = vmul.f32 %v3803, %v3803
        %v3820 = vmul.f32 %v3804, %v3804
        %v3821 = vmul.f32 %v3805, %v3805
        %v3822 = vmul.f32 %v3806, %v3806
        %v3823 = vadd.f32 %v3807, %v3808
        %v3824 = vadd.f32 %v3823, %v3809
        %v3825 = vadd.f32 %v3824, %v3810
        %v3826 = vadd.f32 %v3825, %v3811
        %v3827 = vadd.f32 %v3826, %v3812
        %v3828 = vadd.f32 %v3827, %v3813
        %v3829 = vadd.f32 %v3828, %v3814
        %v3830 = vadd.f32 %v3829, %v3815
        %v3831 = vadd.f32 %v3830, %v3816
        %v3832 = vadd.f32 %v3831, %v3817
        %v3833 = vadd.f32 %v3832, %v3818
        %v3834 = vadd.f32 %v3833, %v3819
        %v3835 = vadd.f32 %v3834, %v3820
        %v3836 = vadd.f32 %v3835, %v3821
        %v3837 = vadd.f32 %v3836, %v3822
        %v3838 = vrot.slane %v3837, 4
        %v3839 = vadd.f32 %v3837, %v3838
        %v3840 = vrot.slane %v3839, 2
        %v3841 = vadd.f32 %v3839, %v3840
        %v3842 = vrot.slane %v3841, 1
        %v3843 = vadd.f32 %v3841, %v3842
        %v3844 = vmul.f32 %v3843, %v3421
        %v3845 = vadd.f32 %v3844, 1e-05
        %v3846 = vrsqrt.pop %v3845
        %v3847 = vlaneseq
        %v3848 = vshrl.u32 %v3847, 7
        %v3849 = vsub.s32 0, %v3848
        %v3850 = vrot.slane %v3846, %v3849
        %v3851 = vmul.f32 %v3775, %v3850
        %v3852 = vmul.f32 %v3776, %v3850
        %v3853 = vmul.f32 %v3777, %v3850
        %v3854 = vmul.f32 %v3778, %v3850
        %v3855 = vmul.f32 %v3779, %v3850
        %v3856 = vmul.f32 %v3780, %v3850
        %v3857 = vmul.f32 %v3781, %v3850
        %v3858 = vmul.f32 %v3782, %v3850
        %v3859 = vmul.f32 %v3783, %v3850
        %v3860 = vmul.f32 %v3784, %v3850
        %v3861 = vmul.f32 %v3785, %v3850
        %v3862 = vmul.f32 %v3786, %v3850
        %v3863 = vmul.f32 %v3787, %v3850
        %v3864 = vmul.f32 %v3788, %v3850
        %v3865 = vmul.f32 %v3789, %v3850
        %v3866 = vmul.f32 %v3790, %v3850
        %v3867 = vlaneseq
        %v3868 = vshrl.u32 %v3867, 7
        %v3869 = vsub.s32 5, %v3868
        %v3870 = vrot.slane %v1484, %v3869
        %v3871 = vmul.f32 %v3851, %v3870
        %v3872 = vmul.f32 %v3852, %v3870
        %v3873 = vmul.f32 %v3853, %v3870
        %v3874 = vmul.f32 %v3854, %v3870
        %v3875 = vmul.f32 %v3855, %v3870
        %v3876 = vmul.f32 %v3856, %v3870
        %v3877 = vmul.f32 %v3857, %v3870
        %v3878 = vmul.f32 %v3858, %v3870
        %v3879 = vmul.f32 %v3859, %v3870
        %v3880 = vmul.f32 %v3860, %v3870
        %v3881 = vmul.f32 %v3861, %v3870
        %v3882 = vmul.f32 %v3862, %v3870
        %v3883 = vmul.f32 %v3863, %v3870
        %v3884 = vmul.f32 %v3864, %v3870
        %v3885 = vmul.f32 %v3865, %v3870
        %v3886 = vmul.f32 %v3866, %v3870
        %v3887 = vlaneseq
        %v3888 = vshrl.u32 %v3887, 7
        %v3889 = vsub.s32 6, %v3888
        %v3890 = vrot.slane %v1484, %v3889
        %v3891 = vadd.f32 %v3871, %v3890
        %v3892 = vadd.f32 %v3872, %v3890
        %v3893 = vadd.f32 %v3873, %v3890
        %v3894 = vadd.f32 %v3874, %v3890
        %v3895 = vadd.f32 %v3875, %v3890
        %v3896 = vadd.f32 %v3876, %v3890
        %v3897 = vadd.f32 %v3877, %v3890
        %v3898 = vadd.f32 %v3878, %v3890
        %v3899 = vadd.f32 %v3879, %v3890
        %v3900 = vadd.f32 %v3880, %v3890
        %v3901 = vadd.f32 %v3881, %v3890
        %v3902 = vadd.f32 %v3882, %v3890
        %v3903 = vadd.f32 %v3883, %v3890
        %v3904 = vadd.f32 %v3884, %v3890
        %v3905 = vadd.f32 %v3885, %v3890
        %v3906 = vadd.f32 %v3886, %v3890
        %v3907 = vmax.f32 %v3891, 0.0
        %v3908 = vmax.f32 %v3892, 0.0
        %v3909 = vmax.f32 %v3893, 0.0
        %v3910 = vmax.f32 %v3894, 0.0
        %v3911 = vmax.f32 %v3895, 0.0
        %v3912 = vmax.f32 %v3896, 0.0
        %v3913 = vmax.f32 %v3897, 0.0
        %v3914 = vmax.f32 %v3898, 0.0
        %v3915 = vmax.f32 %v3899, 0.0
        %v3916 = vmax.f32 %v3900, 0.0
        %v3917 = vmax.f32 %v3901, 0.0
        %v3918 = vmax.f32 %v3902, 0.0
        %v3919 = vmax.f32 %v3903, 0.0
        %v3920 = vmax.f32 %v3904, 0.0
        %v3921 = vmax.f32 %v3905, 0.0
        %v3922 = vmax.f32 %v3906, 0.0
        %v3923 = vpack.c.bf16 %v3908, %v3907
        %v3924 = vpack.c.bf16 %v3910, %v3909
        %v3925 = vpack.c.bf16 %v3912, %v3911
        %v3926 = vpack.c.bf16 %v3914, %v3913
        %v3927 = vpack.c.bf16 %v3916, %v3915
        %v3928 = vpack.c.bf16 %v3918, %v3917
        %v3929 = vpack.c.bf16 %v3920, %v3919
        %v3930 = vpack.c.bf16 %v3922, %v3921
        %v3947 = vunpack.c.l.b16 %v1551
        %v3948 = vunpack.c.l.b16 %v1552
        %v3949 = vunpack.c.l.b16 %v1553
        %v3950 = vunpack.c.l.b16 %v1554
        %v3951 = vunpack.c.l.b16 %v1555
        %v3952 = vunpack.c.l.b16 %v1556
        %v3953 = vunpack.c.l.b16 %v1557
        %v3954 = vunpack.c.l.b16 %v1558
        %v3955 = vunpack.c.l.b16 %v1559
        %v3956 = vunpack.c.l.b16 %v1560
        %v3957 = vunpack.c.l.b16 %v1561
        %v3958 = vunpack.c.l.b16 %v1562
        %v3959 = vunpack.c.l.b16 %v1563
        %v3960 = vunpack.c.l.b16 %v1564
        %v3961 = vunpack.c.l.b16 %v1565
        %v3962 = vunpack.c.l.b16 %v1566
        %v3963 = vpack.c.b16 %v3948, %v3947
        %v3964 = vpack.c.b16 %v3950, %v3949
        %v3965 = vpack.c.b16 %v3952, %v3951
        %v3966 = vpack.c.b16 %v3954, %v3953
        %v3967 = vpack.c.b16 %v3956, %v3955
        %v3968 = vpack.c.b16 %v3958, %v3957
        %v3969 = vpack.c.b16 %v3960, %v3959
        %v3970 = vpack.c.b16 %v3962, %v3961
        %3979 = vmatprep.subr.bf16.mxu0 0
        %3980 = vmatpush1.bf16.msra.mxu0 %v3963
        %3981 = vmatprep.subr.bf16.mxu0 0
        %3982 = vmatpush1.bf16.msra.mxu0 %v3964
        %3983 = vmatprep.subr.bf16.mxu0 0
        %3984 = vmatpush1.bf16.msra.mxu0 %v3965
        %3985 = vmatprep.subr.bf16.mxu0 0
        %3986 = vmatpush1.bf16.msra.mxu0 %v3966
        %3987 = vmatprep.subr.bf16.mxu0 0
        %3988 = vmatpush1.bf16.msra.mxu0 %v3967
        %3989 = vmatprep.subr.bf16.mxu0 0
        %3990 = vmatpush1.bf16.msra.mxu0 %v3968
        %3991 = vmatprep.subr.bf16.mxu0 0
        %3992 = vmatpush1.bf16.msra.mxu0 %v3969
        %3993 = vmatprep.subr.bf16.mxu0 0
        %3994 = vmatpush1.bf16.msra.mxu0 %v3970
        %3995 = vmatprep.subr.bf16.mxu0 0
        %3996 = vmatpush1.bf16.msra.mxu0 0
        %3997 = vmatprep.subr.bf16.mxu0 0
        %3998 = vmatpush1.bf16.msra.mxu0 0
        %3999 = vmatprep.subr.bf16.mxu0 0
        %4000 = vmatpush1.bf16.msra.mxu0 0
        %4001 = vmatprep.subr.bf16.mxu0 0
        %4002 = vmatpush1.bf16.msra.mxu0 0
        %4003 = vmatprep.subr.bf16.mxu0 0
        %4004 = vmatpush1.bf16.msra.mxu0 0
        %4005 = vmatprep.subr.bf16.mxu0 0
        %4006 = vmatpush1.bf16.msra.mxu0 0
        %4007 = vmatprep.subr.bf16.mxu0 0
        %4008 = vmatpush1.bf16.msra.mxu0 0
        %4009 = vmatprep.subr.bf16.mxu0 0
        %4010 = vmatpush1.bf16.msra.mxu0 0
        %4011 = vmatprep.mubr.bf16.mxu0 0
        %4012 = vmatmul.mubr.bf16.gmra.mrb[0].mxu0 %v3923
        %v4013 = vpop.f32.mrb[0].mxu0
        %v4014 = vadd.f32 0.0, %v4013
        %v4015 = vpop.f32.mrb[0].mxu0
        %v4016 = vpop.f32.mrb[0].mxu0
        %v4017 = vadd.f32 0.0, %v4016
        %v4018 = vpop.f32.mrb[0].mxu0
        %4019 = vmatprep.mubr.bf16.mxu0 0
        %4020 = vmatmul.mubr.bf16.gmra.mrb[0].mxu0 %v3924
        %v4021 = vpop.f32.mrb[0].mxu0
        %v4022 = vadd.f32 0.0, %v4021
        %v4023 = vpop.f32.mrb[0].mxu0
        %v4024 = vpop.f32.mrb[0].mxu0
        %v4025 = vadd.f32 0.0, %v4024
        %v4026 = vpop.f32.mrb[0].mxu0
        %4027 = vmatprep.mubr.bf16.mxu0 0
        %4028 = vmatmul.mubr.bf16.gmra.mrb[0].mxu0 %v3925
        %v4029 = vpop.f32.mrb[0].mxu0
        %v4030 = vadd.f32 0.0, %v4029
        %v4031 = vpop.f32.mrb[0].mxu0
        %v4032 = vpop.f32.mrb[0].mxu0
        %v4033 = vadd.f32 0.0, %v4032
        %v4034 = vpop.f32.mrb[0].mxu0
        %4035 = vmatprep.mubr.bf16.mxu0 0
        %4036 = vmatmul.mubr.bf16.gmra.mrb[0].mxu0 %v3926
        %v4037 = vpop.f32.mrb[0].mxu0
        %v4038 = vadd.f32 0.0, %v4037
        %v4039 = vpop.f32.mrb[0].mxu0
        %v4040 = vpop.f32.mrb[0].mxu0
        %v4041 = vadd.f32 0.0, %v4040
        %v4042 = vpop.f32.mrb[0].mxu0
        %4043 = vmatprep.mubr.bf16.mxu0 0
        %4044 = vmatmul.mubr.bf16.gmra.mrb[0].mxu0 %v3927
        %v4045 = vpop.f32.mrb[0].mxu0
        %v4046 = vadd.f32 0.0, %v4045
        %v4047 = vpop.f32.mrb[0].mxu0
        %v4048 = vpop.f32.mrb[0].mxu0
        %v4049 = vadd.f32 0.0, %v4048
        %v4050 = vpop.f32.mrb[0].mxu0
        %4051 = vmatprep.mubr.bf16.mxu0 0
        %4052 = vmatmul.mubr.bf16.gmra.mrb[0].mxu0 %v3928
        %v4053 = vpop.f32.mrb[0].mxu0
        %v4054 = vadd.f32 0.0, %v4053
        %v4055 = vpop.f32.mrb[0].mxu0
        %v4056 = vpop.f32.mrb[0].mxu0
        %v4057 = vadd.f32 0.0, %v4056
        %v4058 = vpop.f32.mrb[0].mxu0
        %4059 = vmatprep.mubr.bf16.mxu0 0
        %4060 = vmatmul.mubr.bf16.gmra.mrb[0].mxu0 %v3929
        %v4061 = vpop.f32.mrb[0].mxu0
        %v4062 = vadd.f32 0.0, %v4061
        %v4063 = vpop.f32.mrb[0].mxu0
        %v4064 = vpop.f32.mrb[0].mxu0
        %v4065 = vadd.f32 0.0, %v4064
        %v4066 = vpop.f32.mrb[0].mxu0
        %4067 = vmatprep.mubr.bf16.mxu0 0
        %4068 = vmatmul.mubr.bf16.gmra.mrb[0].mxu0 %v3930
        %v4069 = vpop.f32.mrb[0].mxu0
        %v4070 = vadd.f32 0.0, %v4069
        %v4071 = vpop.f32.mrb[0].mxu0
        %v4072 = vpop.f32.mrb[0].mxu0
        %v4073 = vadd.f32 0.0, %v4072
        %v4074 = vpop.f32.mrb[0].mxu0
        %4075 = vdwg.mxu0
        %v4076 = vld [vmem:[#allocation13] sm:$0xf]
        %v4077 = vld [vmem:[#allocation13 + $0x4] sm:$0xf]
        %v4078 = vld [vmem:[#allocation13 + $0x8] sm:$0xf]
        %v4079 = vld [vmem:[#allocation13 + $0xc] sm:$0xf]
        %v4080 = vld [vmem:[#allocation13 + $0x10] sm:$0xf]
        %v4081 = vld [vmem:[#allocation13 + $0x14] sm:$0xf]
        %v4082 = vld [vmem:[#allocation13 + $0x18] sm:$0xf]
        %v4083 = vld [vmem:[#allocation13 + $0x1c] sm:$0xf]
        %v4084 = vld [vmem:[#allocation13 + $0x20] sm:$0xf]
        %v4085 = vld [vmem:[#allocation13 + $0x24] sm:$0xf]
        %v4086 = vld [vmem:[#allocation13 + $0x28] sm:$0xf]
        %v4087 = vld [vmem:[#allocation13 + $0x2c] sm:$0xf]
        %v4088 = vld [vmem:[#allocation13 + $0x30] sm:$0xf]
        %v4089 = vld [vmem:[#allocation13 + $0x34] sm:$0xf]
        %v4090 = vld [vmem:[#allocation13 + $0x38] sm:$0xf]
        %v4091 = vld [vmem:[#allocation13 + $0x3c] sm:$0xf]
        %v4092 = vpack.c.bf16 %v4017, %v4014
        %v4093 = vpack.c.bf16 %v4025, %v4022
        %v4094 = vpack.c.bf16 %v4033, %v4030
        %v4095 = vpack.c.bf16 %v4041, %v4038
        %v4096 = vpack.c.bf16 %v4049, %v4046
        %v4097 = vpack.c.bf16 %v4057, %v4054
        %v4098 = vpack.c.bf16 %v4065, %v4062
        %v4099 = vpack.c.bf16 %v4073, %v4070
        %v4116 = vunpack.c.l.b16 %v4076
        %v4117 = vunpack.c.l.b16 %v4077
        %v4118 = vunpack.c.l.b16 %v4078
        %v4119 = vunpack.c.l.b16 %v4079
        %v4120 = vunpack.c.l.b16 %v4080
        %v4121 = vunpack.c.l.b16 %v4081
        %v4122 = vunpack.c.l.b16 %v4082
        %v4123 = vunpack.c.l.b16 %v4083
        %v4124 = vunpack.c.l.b16 %v4084
        %v4125 = vunpack.c.l.b16 %v4085
        %v4126 = vunpack.c.l.b16 %v4086
        %v4127 = vunpack.c.l.b16 %v4087
        %v4128 = vunpack.c.l.b16 %v4088
        %v4129 = vunpack.c.l.b16 %v4089
        %v4130 = vunpack.c.l.b16 %v4090
        %v4131 = vunpack.c.l.b16 %v4091
        %v4132 = vpack.c.b16 %v4117, %v4116
        %v4133 = vpack.c.b16 %v4119, %v4118
        %v4134 = vpack.c.b16 %v4121, %v4120
        %v4135 = vpack.c.b16 %v4123, %v4122
        %v4136 = vpack.c.b16 %v4125, %v4124
        %v4137 = vpack.c.b16 %v4127, %v4126
        %v4138 = vpack.c.b16 %v4129, %v4128
        %v4139 = vpack.c.b16 %v4131, %v4130
        %4148 = vmatprep.subr.bf16.mxu0 0
        %4149 = vmatpush1.bf16.msra.mxu0 %v4092
        %4150 = vmatprep.subr.bf16.mxu0 0
        %4151 = vmatpush1.bf16.msra.mxu0 %v4093
        %4152 = vmatprep.subr.bf16.mxu0 0
        %4153 = vmatpush1.bf16.msra.mxu0 %v4094
        %4154 = vmatprep.subr.bf16.mxu0 0
        %4155 = vmatpush1.bf16.msra.mxu0 %v4095
        %4156 = vmatprep.subr.bf16.mxu0 0
        %4157 = vmatpush1.bf16.msra.mxu0 %v4096
        %4158 = vmatprep.subr.bf16.mxu0 0
        %4159 = vmatpush1.bf16.msra.mxu0 %v4097
        %4160 = vmatprep.subr.bf16.mxu0 0
        %4161 = vmatpush1.bf16.msra.mxu0 %v4098
        %4162 = vmatprep.subr.bf16.mxu0 0
        %4163 = vmatpush1.bf16.msra.mxu0 %v4099
        %4164 = vmatprep.subr.bf16.mxu0 0
        %4165 = vmatpush1.bf16.msra.mxu0 0
        %4166 = vmatprep.subr.bf16.mxu0 0
        %4167 = vmatpush1.bf16.msra.mxu0 0
        %4168 = vmatprep.subr.bf16.mxu0 0
        %4169 = vmatpush1.bf16.msra.mxu0 0
        %4170 = vmatprep.subr.bf16.mxu0 0
        %4171 = vmatpush1.bf16.msra.mxu0 0
        %4172 = vmatprep.subr.bf16.mxu0 0
        %4173 = vmatpush1.bf16.msra.mxu0 0
        %4174 = vmatprep.subr.bf16.mxu0 0
        %4175 = vmatpush1.bf16.msra.mxu0 0
        %4176 = vmatprep.subr.bf16.mxu0 0
        %4177 = vmatpush1.bf16.msra.mxu0 0
        %4178 = vmatprep.subr.bf16.mxu0 0
        %4179 = vmatpush1.bf16.msra.mxu0 0
        %4180 = vmatprep.mubr.bf16.mxu0 0
        %4181 = vmatmul.mubr.bf16.gmra.mrb[0].mxu0 %v4132
        %v4182 = vpop.f32.mrb[0].mxu0
        %v4183 = vadd.f32 0.0, %v4182
        %v4184 = vpop.f32.mrb[0].mxu0
        %v4185 = vpop.f32.mrb[0].mxu0
        %v4186 = vadd.f32 0.0, %v4185
        %v4187 = vpop.f32.mrb[0].mxu0
        %4188 = vmatprep.mubr.bf16.mxu0 0
        %4189 = vmatmul.mubr.bf16.gmra.mrb[0].mxu0 %v4133
        %v4190 = vpop.f32.mrb[0].mxu0
        %v4191 = vadd.f32 0.0, %v4190
        %v4192 = vpop.f32.mrb[0].mxu0
        %v4193 = vpop.f32.mrb[0].mxu0
        %v4194 = vadd.f32 0.0, %v4193
        %v4195 = vpop.f32.mrb[0].mxu0
        %4196 = vmatprep.mubr.bf16.mxu0 0
        %4197 = vmatmul.mubr.bf16.gmra.mrb[0].mxu0 %v4134
        %v4198 = vpop.f32.mrb[0].mxu0
        %v4199 = vadd.f32 0.0, %v4198
        %v4200 = vpop.f32.mrb[0].mxu0
        %v4201 = vpop.f32.mrb[0].mxu0
        %v4202 = vadd.f32 0.0, %v4201
        %v4203 = vpop.f32.mrb[0].mxu0
        %4204 = vmatprep.mubr.bf16.mxu0 0
        %4205 = vmatmul.mubr.bf16.gmra.mrb[0].mxu0 %v4135
        %v4206 = vpop.f32.mrb[0].mxu0
        %v4207 = vadd.f32 0.0, %v4206
        %v4208 = vpop.f32.mrb[0].mxu0
        %v4209 = vpop.f32.mrb[0].mxu0
        %v4210 = vadd.f32 0.0, %v4209
        %v4211 = vpop.f32.mrb[0].mxu0
        %4212 = vmatprep.mubr.bf16.mxu0 0
        %4213 = vmatmul.mubr.bf16.gmra.mrb[0].mxu0 %v4136
        %v4214 = vpop.f32.mrb[0].mxu0
        %v4215 = vadd.f32 0.0, %v4214
        %v4216 = vpop.f32.mrb[0].mxu0
        %v4217 = vpop.f32.mrb[0].mxu0
        %v4218 = vadd.f32 0.0, %v4217
        %v4219 = vpop.f32.mrb[0].mxu0
        %4220 = vmatprep.mubr.bf16.mxu0 0
        %4221 = vmatmul.mubr.bf16.gmra.mrb[0].mxu0 %v4137
        %v4222 = vpop.f32.mrb[0].mxu0
        %v4223 = vadd.f32 0.0, %v4222
        %v4224 = vpop.f32.mrb[0].mxu0
        %v4225 = vpop.f32.mrb[0].mxu0
        %v4226 = vadd.f32 0.0, %v4225
        %v4227 = vpop.f32.mrb[0].mxu0
        %4228 = vmatprep.mubr.bf16.mxu0 0
        %4229 = vmatmul.mubr.bf16.gmra.mrb[0].mxu0 %v4138
        %v4230 = vpop.f32.mrb[0].mxu0
        %v4231 = vadd.f32 0.0, %v4230
        %v4232 = vpop.f32.mrb[0].mxu0
        %v4233 = vpop.f32.mrb[0].mxu0
        %v4234 = vadd.f32 0.0, %v4233
        %v4235 = vpop.f32.mrb[0].mxu0
        %4236 = vmatprep.mubr.bf16.mxu0 0
        %4237 = vmatmul.mubr.bf16.gmra.mrb[0].mxu0 %v4139
        %v4238 = vpop.f32.mrb[0].mxu0
        %v4239 = vadd.f32 0.0, %v4238
        %v4240 = vpop.f32.mrb[0].mxu0
        %v4241 = vpop.f32.mrb[0].mxu0
        %v4242 = vadd.f32 0.0, %v4241
        %v4243 = vpop.f32.mrb[0].mxu0
        %4244 = vdwg.mxu0
        %4245 = vset.pattern.permute.xlu0 0
        %4246 = vperm.xlu0 %4245, %v1452
        %v4247 = vpop.permute.xlu0 %4246
        %4249 = vset.pattern.permute.xlu0 0
        %4250 = vperm.xlu0 %4249, %v1453
        %v4251 = vpop.permute.xlu0 %4250
        %4253 = vset.pattern.permute.xlu0 0
        %4254 = vperm.xlu0 %4253, %v1454
        %v4255 = vpop.permute.xlu0 %4254
        %4257 = vset.pattern.permute.xlu0 0
        %4258 = vperm.xlu0 %4257, %v1455
        %v4259 = vpop.permute.xlu0 %4258
        %4261 = vset.pattern.permute.xlu0 0
        %4262 = vperm.xlu0 %4261, %v1456
        %v4263 = vpop.permute.xlu0 %4262
        %4265 = vset.pattern.permute.xlu0 0
        %4266 = vperm.xlu0 %4265, %v1457
        %v4267 = vpop.permute.xlu0 %4266
        %4269 = vset.pattern.permute.xlu0 0
        %4270 = vperm.xlu0 %4269, %v1458
        %v4271 = vpop.permute.xlu0 %4270
        %4273 = vset.pattern.permute.xlu0 0
        %4274 = vperm.xlu0 %4273, %v1459
        %v4275 = vpop.permute.xlu0 %4274
        %4277 = vset.pattern.permute.xlu0 0
        %4278 = vperm.xlu0 %4277, %v1460
        %v4279 = vpop.permute.xlu0 %4278
        %4281 = vset.pattern.permute.xlu0 0
        %4282 = vperm.xlu0 %4281, %v1461
        %v4283 = vpop.permute.xlu0 %4282
        %4285 = vset.pattern.permute.xlu0 0
        %4286 = vperm.xlu0 %4285, %v1462
        %v4287 = vpop.permute.xlu0 %4286
        %4289 = vset.pattern.permute.xlu0 0
        %4290 = vperm.xlu0 %4289, %v1463
        %v4291 = vpop.permute.xlu0 %4290
        %4293 = vset.pattern.permute.xlu0 0
        %4294 = vperm.xlu0 %4293, %v1464
        %v4295 = vpop.permute.xlu0 %4294
        %4297 = vset.pattern.permute.xlu0 0
        %4298 = vperm.xlu0 %4297, %v1465
        %v4299 = vpop.permute.xlu0 %4298
        %4301 = vset.pattern.permute.xlu0 0
        %4302 = vperm.xlu0 %4301, %v1466
        %v4303 = vpop.permute.xlu0 %4302
        %4305 = vset.pattern.permute.xlu0 0
        %4306 = vperm.xlu0 %4305, %v1467
        %v4307 = vpop.permute.xlu0 %4306
        %v4309 = vmul.f32 %v4183, %v4247
        %v4310 = vmul.f32 %v4186, %v4251
        %v4311 = vmul.f32 %v4191, %v4255
        %v4312 = vmul.f32 %v4194, %v4259
        %v4313 = vmul.f32 %v4199, %v4263
        %v4314 = vmul.f32 %v4202, %v4267
        %v4315 = vmul.f32 %v4207, %v4271
        %v4316 = vmul.f32 %v4210, %v4275
        %v4317 = vmul.f32 %v4215, %v4279
        %v4318 = vmul.f32 %v4218, %v4283
        %v4319 = vmul.f32 %v4223, %v4287
        %v4320 = vmul.f32 %v4226, %v4291
        %v4321 = vmul.f32 %v4231, %v4295
        %v4322 = vmul.f32 %v4234, %v4299
        %v4323 = vmul.f32 %v4239, %v4303
        %v4324 = vmul.f32 %v4242, %v4307
        %v4325 = vlaneseq
        %v4326 = vshrl.u32 %v4325, 7
        %v4327 = vsub.s32 7, %v4326
        %v4328 = vrot.slane %v1484, %v4327
        %v4329 = vadd.f32 %v4309, %v4328
        %v4330 = vadd.f32 %v4310, %v4328
        %v4331 = vadd.f32 %v4311, %v4328
        %v4332 = vadd.f32 %v4312, %v4328
        %v4333 = vadd.f32 %v4313, %v4328
        %v4334 = vadd.f32 %v4314, %v4328
        %v4335 = vadd.f32 %v4315, %v4328
        %v4336 = vadd.f32 %v4316, %v4328
        %v4337 = vadd.f32 %v4317, %v4328
        %v4338 = vadd.f32 %v4318, %v4328
        %v4339 = vadd.f32 %v4319, %v4328
        %v4340 = vadd.f32 %v4320, %v4328
        %v4341 = vadd.f32 %v4321, %v4328
        %v4342 = vadd.f32 %v4322, %v4328
        %v4343 = vadd.f32 %v4323, %v4328
        %v4344 = vadd.f32 %v4324, %v4328
        %v4345 = vmax.f32 %v4329, 0.0
        %v4346 = vmax.f32 %v4330, 0.0
        %v4347 = vmax.f32 %v4331, 0.0
        %v4348 = vmax.f32 %v4332, 0.0
        %v4349 = vmax.f32 %v4333, 0.0
        %v4350 = vmax.f32 %v4334, 0.0
        %v4351 = vmax.f32 %v4335, 0.0
        %v4352 = vmax.f32 %v4336, 0.0
        %v4353 = vmax.f32 %v4337, 0.0
        %v4354 = vmax.f32 %v4338, 0.0
        %v4355 = vmax.f32 %v4339, 0.0
        %v4356 = vmax.f32 %v4340, 0.0
        %v4357 = vmax.f32 %v4341, 0.0
        %v4358 = vmax.f32 %v4342, 0.0
        %v4359 = vmax.f32 %v4343, 0.0
        %v4360 = vmax.f32 %v4344, 0.0
        %v4361 = vadd.f32 %v2944, %v4345
        %v4362 = vadd.f32 %v2945, %v4346
        %v4363 = vadd.f32 %v2946, %v4347
        %v4364 = vadd.f32 %v2947, %v4348
        %v4365 = vadd.f32 %v2948, %v4349
        %v4366 = vadd.f32 %v2949, %v4350
        %v4367 = vadd.f32 %v2950, %v4351
        %v4368 = vadd.f32 %v2951, %v4352
        %v4369 = vadd.f32 %v2952, %v4353
        %v4370 = vadd.f32 %v2953, %v4354
        %v4371 = vadd.f32 %v2954, %v4355
        %v4372 = vadd.f32 %v2955, %v4356
        %v4373 = vadd.f32 %v2956, %v4357
        %v4374 = vadd.f32 %v2957, %v4358
        %v4375 = vadd.f32 %v2958, %v4359
        %v4376 = vadd.f32 %v2959, %v4360
        %v4377 = vld [vmem:[#allocation15] sm:$0xf]
        %v4378 = vld [vmem:[#allocation15 + $0x4] sm:$0xf]
        %v4379 = vld [vmem:[#allocation15 + $0x8] sm:$0xf]
        %v4380 = vld [vmem:[#allocation15 + $0xc] sm:$0xf]
        %v4381 = vld [vmem:[#allocation15 + $0x10] sm:$0xf]
        %v4382 = vld [vmem:[#allocation15 + $0x14] sm:$0xf]
        %v4383 = vld [vmem:[#allocation15 + $0x18] sm:$0xf]
        %v4384 = vld [vmem:[#allocation15 + $0x1c] sm:$0xf]
        %v4385 = vld [vmem:[#allocation15 + $0x20] sm:$0xf]
        %v4386 = vld [vmem:[#allocation15 + $0x24] sm:$0xf]
        %v4387 = vld [vmem:[#allocation15 + $0x28] sm:$0xf]
        %v4388 = vld [vmem:[#allocation15 + $0x2c] sm:$0xf]
        %v4389 = vld [vmem:[#allocation15 + $0x30] sm:$0xf]
        %v4390 = vld [vmem:[#allocation15 + $0x34] sm:$0xf]
        %v4391 = vld [vmem:[#allocation15 + $0x38] sm:$0xf]
        %v4392 = vld [vmem:[#allocation15 + $0x3c] sm:$0xf]
        %v4393 = vpack.c.bf16 %v4362, %v4361
        %v4394 = vpack.c.bf16 %v4364, %v4363
        %v4395 = vpack.c.bf16 %v4366, %v4365
        %v4396 = vpack.c.bf16 %v4368, %v4367
        %v4397 = vpack.c.bf16 %v4370, %v4369
        %v4398 = vpack.c.bf16 %v4372, %v4371
        %v4399 = vpack.c.bf16 %v4374, %v4373
        %v4400 = vpack.c.bf16 %v4376, %v4375
        %v4417 = vunpack.c.l.b16 %v4377
        %v4418 = vunpack.c.l.b16 %v4378
        %v4419 = vunpack.c.l.b16 %v4379
        %v4420 = vunpack.c.l.b16 %v4380
        %v4421 = vunpack.c.l.b16 %v4381
        %v4422 = vunpack.c.l.b16 %v4382
        %v4423 = vunpack.c.l.b16 %v4383
        %v4424 = vunpack.c.l.b16 %v4384
        %v4425 = vunpack.c.l.b16 %v4385
        %v4426 = vunpack.c.l.b16 %v4386
        %v4427 = vunpack.c.l.b16 %v4387
        %v4428 = vunpack.c.l.b16 %v4388
        %v4429 = vunpack.c.l.b16 %v4389
        %v4430 = vunpack.c.l.b16 %v4390
        %v4431 = vunpack.c.l.b16 %v4391
        %v4432 = vunpack.c.l.b16 %v4392
        %v4433 = vpack.c.b16 %v4418, %v4417
        %v4434 = vpack.c.b16 %v4420, %v4419
        %v4435 = vpack.c.b16 %v4422, %v4421
        %v4436 = vpack.c.b16 %v4424, %v4423
        %v4437 = vpack.c.b16 %v4426, %v4425
        %v4438 = vpack.c.b16 %v4428, %v4427
        %v4439 = vpack.c.b16 %v4430, %v4429
        %v4440 = vpack.c.b16 %v4432, %v4431
        %4449 = vmatprep.subr.bf16.mxu0 0
        %4450 = vmatpush1.bf16.msra.mxu0 %v4393
        %4451 = vmatprep.subr.bf16.mxu0 0
        %4452 = vmatpush1.bf16.msra.mxu0 %v4394
        %4453 = vmatprep.subr.bf16.mxu0 0
        %4454 = vmatpush1.bf16.msra.mxu0 %v4395
        %4455 = vmatprep.subr.bf16.mxu0 0
        %4456 = vmatpush1.bf16.msra.mxu0 %v4396
        %4457 = vmatprep.subr.bf16.mxu0 0
        %4458 = vmatpush1.bf16.msra.mxu0 %v4397
        %4459 = vmatprep.subr.bf16.mxu0 0
        %4460 = vmatpush1.bf16.msra.mxu0 %v4398
        %4461 = vmatprep.subr.bf16.mxu0 0
        %4462 = vmatpush1.bf16.msra.mxu0 %v4399
        %4463 = vmatprep.subr.bf16.mxu0 0
        %4464 = vmatpush1.bf16.msra.mxu0 %v4400
        %4465 = vmatprep.subr.bf16.mxu0 0
        %4466 = vmatpush1.bf16.msra.mxu0 0
        %4467 = vmatprep.subr.bf16.mxu0 0
        %4468 = vmatpush1.bf16.msra.mxu0 0
        %4469 = vmatprep.subr.bf16.mxu0 0
        %4470 = vmatpush1.bf16.msra.mxu0 0
        %4471 = vmatprep.subr.bf16.mxu0 0
        %4472 = vmatpush1.bf16.msra.mxu0 0
        %4473 = vmatprep.subr.bf16.mxu0 0
        %4474 = vmatpush1.bf16.msra.mxu0 0
        %4475 = vmatprep.subr.bf16.mxu0 0
        %4476 = vmatpush1.bf16.msra.mxu0 0
        %4477 = vmatprep.subr.bf16.mxu0 0
        %4478 = vmatpush1.bf16.msra.mxu0 0
        %4479 = vmatprep.subr.bf16.mxu0 0
        %4480 = vmatpush1.bf16.msra.mxu0 0
        %4481 = vmatprep.mubr.bf16.mxu0 0
        %4482 = vmatmul.mubr.bf16.gmra.mrb[0].mxu0 %v4433
        %v4483 = vpop.f32.mrb[0].mxu0
        %v4484 = vadd.f32 0.0, %v4483
        %v4485 = vpop.f32.mrb[0].mxu0
        %v4486 = vpop.f32.mrb[0].mxu0
        %v4487 = vadd.f32 0.0, %v4486
        %v4488 = vpop.f32.mrb[0].mxu0
        %4489 = vmatprep.mubr.bf16.mxu0 0
        %4490 = vmatmul.mubr.bf16.gmra.mrb[0].mxu0 %v4434
        %v4491 = vpop.f32.mrb[0].mxu0
        %v4492 = vadd.f32 0.0, %v4491
        %v4493 = vpop.f32.mrb[0].mxu0
        %v4494 = vpop.f32.mrb[0].mxu0
        %v4495 = vadd.f32 0.0, %v4494
        %v4496 = vpop.f32.mrb[0].mxu0
        %4497 = vmatprep.mubr.bf16.mxu0 0
        %4498 = vmatmul.mubr.bf16.gmra.mrb[0].mxu0 %v4435
        %v4499 = vpop.f32.mrb[0].mxu0
        %v4500 = vadd.f32 0.0, %v4499
        %v4501 = vpop.f32.mrb[0].mxu0
        %v4502 = vpop.f32.mrb[0].mxu0
        %v4503 = vadd.f32 0.0, %v4502
        %v4504 = vpop.f32.mrb[0].mxu0
        %4505 = vmatprep.mubr.bf16.mxu0 0
        %4506 = vmatmul.mubr.bf16.gmra.mrb[0].mxu0 %v4436
        %v4507 = vpop.f32.mrb[0].mxu0
        %v4508 = vadd.f32 0.0, %v4507
        %v4509 = vpop.f32.mrb[0].mxu0
        %v4510 = vpop.f32.mrb[0].mxu0
        %v4511 = vadd.f32 0.0, %v4510
        %v4512 = vpop.f32.mrb[0].mxu0
        %4513 = vmatprep.mubr.bf16.mxu0 0
        %4514 = vmatmul.mubr.bf16.gmra.mrb[0].mxu0 %v4437
        %v4515 = vpop.f32.mrb[0].mxu0
        %v4516 = vadd.f32 0.0, %v4515
        %v4517 = vpop.f32.mrb[0].mxu0
        %v4518 = vpop.f32.mrb[0].mxu0
        %v4519 = vadd.f32 0.0, %v4518
        %v4520 = vpop.f32.mrb[0].mxu0
        %4521 = vmatprep.mubr.bf16.mxu0 0
        %4522 = vmatmul.mubr.bf16.gmra.mrb[0].mxu0 %v4438
        %v4523 = vpop.f32.mrb[0].mxu0
        %v4524 = vadd.f32 0.0, %v4523
        %v4525 = vpop.f32.mrb[0].mxu0
        %v4526 = vpop.f32.mrb[0].mxu0
        %v4527 = vadd.f32 0.0, %v4526
        %v4528 = vpop.f32.mrb[0].mxu0
        %4529 = vmatprep.mubr.bf16.mxu0 0
        %4530 = vmatmul.mubr.bf16.gmra.mrb[0].mxu0 %v4439
        %v4531 = vpop.f32.mrb[0].mxu0
        %v4532 = vadd.f32 0.0, %v4531
        %v4533 = vpop.f32.mrb[0].mxu0
        %v4534 = vpop.f32.mrb[0].mxu0
        %v4535 = vadd.f32 0.0, %v4534
        %v4536 = vpop.f32.mrb[0].mxu0
        %4537 = vmatprep.mubr.bf16.mxu0 0
        %4538 = vmatmul.mubr.bf16.gmra.mrb[0].mxu0 %v4440
        %v4539 = vpop.f32.mrb[0].mxu0
        %v4540 = vadd.f32 0.0, %v4539
        %v4541 = vpop.f32.mrb[0].mxu0
        %v4542 = vpop.f32.mrb[0].mxu0
        %v4543 = vadd.f32 0.0, %v4542
        %v4544 = vpop.f32.mrb[0].mxu0
        %4545 = vdwg.mxu0
        %4546 = vset.pattern.permute.xlu0 0
        %4547 = vperm.xlu0 %4546, %v1468
        %v4548 = vpop.permute.xlu0 %4547
        %4550 = vset.pattern.permute.xlu0 0
        %4551 = vperm.xlu0 %4550, %v1469
        %v4552 = vpop.permute.xlu0 %4551
        %4554 = vset.pattern.permute.xlu0 0
        %4555 = vperm.xlu0 %4554, %v1470
        %v4556 = vpop.permute.xlu0 %4555
        %4558 = vset.pattern.permute.xlu0 0
        %4559 = vperm.xlu0 %4558, %v1471
        %v4560 = vpop.permute.xlu0 %4559
        %4562 = vset.pattern.permute.xlu0 0
        %4563 = vperm.xlu0 %4562, %v1472
        %v4564 = vpop.permute.xlu0 %4563
        %4566 = vset.pattern.permute.xlu0 0
        %4567 = vperm.xlu0 %4566, %v1473
        %v4568 = vpop.permute.xlu0 %4567
        %4570 = vset.pattern.permute.xlu0 0
        %4571 = vperm.xlu0 %4570, %v1474
        %v4572 = vpop.permute.xlu0 %4571
        %4574 = vset.pattern.permute.xlu0 0
        %4575 = vperm.xlu0 %4574, %v1475
        %v4576 = vpop.permute.xlu0 %4575
        %4578 = vset.pattern.permute.xlu0 0
        %4579 = vperm.xlu0 %4578, %v1476
        %v4580 = vpop.permute.xlu0 %4579
        %4582 = vset.pattern.permute.xlu0 0
        %4583 = vperm.xlu0 %4582, %v1477
        %v4584 = vpop.permute.xlu0 %4583
        %4586 = vset.pattern.permute.xlu0 0
        %4587 = vperm.xlu0 %4586, %v1478
        %v4588 = vpop.permute.xlu0 %4587
        %4590 = vset.pattern.permute.xlu0 0
        %4591 = vperm.xlu0 %4590, %v1479
        %v4592 = vpop.permute.xlu0 %4591
        %4594 = vset.pattern.permute.xlu0 0
        %4595 = vperm.xlu0 %4594, %v1480
        %v4596 = vpop.permute.xlu0 %4595
        %4598 = vset.pattern.permute.xlu0 0
        %4599 = vperm.xlu0 %4598, %v1481
        %v4600 = vpop.permute.xlu0 %4599
        %4602 = vset.pattern.permute.xlu0 0
        %4603 = vperm.xlu0 %4602, %v1482
        %v4604 = vpop.permute.xlu0 %4603
        %4606 = vset.pattern.permute.xlu0 0
        %4607 = vperm.xlu0 %4606, %v1483
        %v4608 = vpop.permute.xlu0 %4607
        %v4610 = vmul.f32 %v4484, %v4548
        %v4611 = vmul.f32 %v4487, %v4552
        %v4612 = vmul.f32 %v4492, %v4556
        %v4613 = vmul.f32 %v4495, %v4560
        %v4614 = vmul.f32 %v4500, %v4564
        %v4615 = vmul.f32 %v4503, %v4568
        %v4616 = vmul.f32 %v4508, %v4572
        %v4617 = vmul.f32 %v4511, %v4576
        %v4618 = vmul.f32 %v4516, %v4580
        %v4619 = vmul.f32 %v4519, %v4584
        %v4620 = vmul.f32 %v4524, %v4588
        %v4621 = vmul.f32 %v4527, %v4592
        %v4622 = vmul.f32 %v4532, %v4596
        %v4623 = vmul.f32 %v4535, %v4600
        %v4624 = vmul.f32 %v4540, %v4604
        %v4625 = vmul.f32 %v4543, %v4608
        %v4626 = vpack.c.bf16 %v4611, %v4610
        %v4627 = vpack.c.bf16 %v4613, %v4612
        %v4628 = vpack.c.bf16 %v4615, %v4614
        %v4629 = vpack.c.bf16 %v4617, %v4616
        %v4630 = vpack.c.bf16 %v4619, %v4618
        %v4631 = vpack.c.bf16 %v4621, %v4620
        %v4632 = vpack.c.bf16 %v4623, %v4622
        %v4633 = vpack.c.bf16 %v4625, %v4624
        %v4634 = vlaneseq
        %v4635 = vshrl.u32 %v4634, 7
        %v4636 = vsub.s32 0, %v4635
        %v4637 = vrot.slane %v1485, %v4636
        %v4654 = vunpack.c.l.b16 %v1567
        %v4655 = vunpack.c.l.b16 %v1568
        %v4656 = vunpack.c.l.b16 %v1569
        %v4657 = vunpack.c.l.b16 %v1570
        %v4658 = vunpack.c.l.b16 %v1571
        %v4659 = vunpack.c.l.b16 %v1572
        %v4660 = vunpack.c.l.b16 %v1573
        %v4661 = vunpack.c.l.b16 %v1574
        %v4662 = vunpack.c.l.b16 %v1575
        %v4663 = vunpack.c.l.b16 %v1576
        %v4664 = vunpack.c.l.b16 %v1577
        %v4665 = vunpack.c.l.b16 %v1578
        %v4666 = vunpack.c.l.b16 %v1579
        %v4667 = vunpack.c.l.b16 %v1580
        %v4668 = vunpack.c.l.b16 %v1581
        %v4669 = vunpack.c.l.b16 %v1582
        %v4670 = vpack.c.b16 %v4655, %v4654
        %v4671 = vpack.c.b16 %v4657, %v4656
        %v4672 = vpack.c.b16 %v4659, %v4658
        %v4673 = vpack.c.b16 %v4661, %v4660
        %v4674 = vpack.c.b16 %v4663, %v4662
        %v4675 = vpack.c.b16 %v4665, %v4664
        %v4676 = vpack.c.b16 %v4667, %v4666
        %v4677 = vpack.c.b16 %v4669, %v4668
        %4686 = vmatprep.subr.bf16.mxu0 0
        %4687 = vmatpush1.bf16.msra.mxu0 %v4670
        %4688 = vmatprep.subr.bf16.mxu0 0
        %4689 = vmatpush1.bf16.msra.mxu0 %v4671
        %4690 = vmatprep.subr.bf16.mxu0 0
        %4691 = vmatpush1.bf16.msra.mxu0 %v4672
        %4692 = vmatprep.subr.bf16.mxu0 0
        %4693 = vmatpush1.bf16.msra.mxu0 %v4673
        %4694 = vmatprep.subr.bf16.mxu0 0
        %4695 = vmatpush1.bf16.msra.mxu0 %v4674
        %4696 = vmatprep.subr.bf16.mxu0 0
        %4697 = vmatpush1.bf16.msra.mxu0 %v4675
        %4698 = vmatprep.subr.bf16.mxu0 0
        %4699 = vmatpush1.bf16.msra.mxu0 %v4676
        %4700 = vmatprep.subr.bf16.mxu0 0
        %4701 = vmatpush1.bf16.msra.mxu0 %v4677
        %4702 = vmatprep.subr.bf16.mxu0 0
        %4703 = vmatpush1.bf16.msra.mxu0 0
        %4704 = vmatprep.subr.bf16.mxu0 0
        %4705 = vmatpush1.bf16.msra.mxu0 0
        %4706 = vmatprep.subr.bf16.mxu0 0
        %4707 = vmatpush1.bf16.msra.mxu0 0
        %4708 = vmatprep.subr.bf16.mxu0 0
        %4709 = vmatpush1.bf16.msra.mxu0 0
        %4710 = vmatprep.subr.bf16.mxu0 0
        %4711 = vmatpush1.bf16.msra.mxu0 0
        %4712 = vmatprep.subr.bf16.mxu0 0
        %4713 = vmatpush1.bf16.msra.mxu0 0
        %4714 = vmatprep.subr.bf16.mxu0 0
        %4715 = vmatpush1.bf16.msra.mxu0 0
        %4716 = vmatprep.subr.bf16.mxu0 0
        %4717 = vmatpush1.bf16.msra.mxu0 0
        %4718 = vmatprep.mubr.bf16.mxu0 0
        %4719 = vmatmul.mubr.bf16.gmra.mrb[0].mxu0 %v4626
        %v4720 = vpop.f32.mrb[0].mxu0
        %v4721 = vadd.f32 %v4637, %v4720
        %v4722 = vpop.f32.mrb[0].mxu0
        %v4723 = vpop.f32.mrb[0].mxu0
        %v4724 = vadd.f32 %v4637, %v4723
        %v4725 = vpop.f32.mrb[0].mxu0
        %4726 = vmatprep.mubr.bf16.mxu0 0
        %4727 = vmatmul.mubr.bf16.gmra.mrb[0].mxu0 %v4627
        %v4728 = vpop.f32.mrb[0].mxu0
        %v4729 = vadd.f32 %v4637, %v4728
        %v4730 = vpop.f32.mrb[0].mxu0
        %v4731 = vpop.f32.mrb[0].mxu0
        %v4732 = vadd.f32 %v4637, %v4731
        %v4733 = vpop.f32.mrb[0].mxu0
        %4734 = vmatprep.mubr.bf16.mxu0 0
        %4735 = vmatmul.mubr.bf16.gmra.mrb[0].mxu0 %v4628
        %v4736 = vpop.f32.mrb[0].mxu0
        %v4737 = vadd.f32 %v4637, %v4736
        %v4738 = vpop.f32.mrb[0].mxu0
        %v4739 = vpop.f32.mrb[0].mxu0
        %v4740 = vadd.f32 %v4637, %v4739
        %v4741 = vpop.f32.mrb[0].mxu0
        %4742 = vmatprep.mubr.bf16.mxu0 0
        %4743 = vmatmul.mubr.bf16.gmra.mrb[0].mxu0 %v4629
        %v4744 = vpop.f32.mrb[0].mxu0
        %v4745 = vadd.f32 %v4637, %v4744
        %v4746 = vpop.f32.mrb[0].mxu0
        %v4747 = vpop.f32.mrb[0].mxu0
        %v4748 = vadd.f32 %v4637, %v4747
        %v4749 = vpop.f32.mrb[0].mxu0
        %4750 = vmatprep.mubr.bf16.mxu0 0
        %4751 = vmatmul.mubr.bf16.gmra.mrb[0].mxu0 %v4630
        %v4752 = vpop.f32.mrb[0].mxu0
        %v4753 = vadd.f32 %v4637, %v4752
        %v4754 = vpop.f32.mrb[0].mxu0
        %v4755 = vpop.f32.mrb[0].mxu0
        %v4756 = vadd.f32 %v4637, %v4755
        %v4757 = vpop.f32.mrb[0].mxu0
        %4758 = vmatprep.mubr.bf16.mxu0 0
        %4759 = vmatmul.mubr.bf16.gmra.mrb[0].mxu0 %v4631
        %v4760 = vpop.f32.mrb[0].mxu0
        %v4761 = vadd.f32 %v4637, %v4760
        %v4762 = vpop.f32.mrb[0].mxu0
        %v4763 = vpop.f32.mrb[0].mxu0
        %v4764 = vadd.f32 %v4637, %v4763
        %v4765 = vpop.f32.mrb[0].mxu0
        %4766 = vmatprep.mubr.bf16.mxu0 0
        %4767 = vmatmul.mubr.bf16.gmra.mrb[0].mxu0 %v4632
        %v4768 = vpop.f32.mrb[0].mxu0
        %v4769 = vadd.f32 %v4637, %v4768
        %v4770 = vpop.f32.mrb[0].mxu0
        %v4771 = vpop.f32.mrb[0].mxu0
        %v4772 = vadd.f32 %v4637, %v4771
        %v4773 = vpop.f32.mrb[0].mxu0
        %4774 = vmatprep.mubr.bf16.mxu0 0
        %4775 = vmatmul.mubr.bf16.gmra.mrb[0].mxu0 %v4633
        %v4776 = vpop.f32.mrb[0].mxu0
        %v4777 = vadd.f32 %v4637, %v4776
        %v4778 = vpop.f32.mrb[0].mxu0
        %v4779 = vpop.f32.mrb[0].mxu0
        %v4780 = vadd.f32 %v4637, %v4779
        %v4781 = vpop.f32.mrb[0].mxu0
        %4782 = vdwg.mxu0
        %v4783 = vmax.f32 %v4721, 0.0
        %v4784 = vmax.f32 %v4724, 0.0
        %v4785 = vmax.f32 %v4729, 0.0
        %v4786 = vmax.f32 %v4732, 0.0
        %v4787 = vmax.f32 %v4737, 0.0
        %v4788 = vmax.f32 %v4740, 0.0
        %v4789 = vmax.f32 %v4745, 0.0
        %v4790 = vmax.f32 %v4748, 0.0
        %v4791 = vmax.f32 %v4753, 0.0
        %v4792 = vmax.f32 %v4756, 0.0
        %v4793 = vmax.f32 %v4761, 0.0
        %v4794 = vmax.f32 %v4764, 0.0
        %v4795 = vmax.f32 %v4769, 0.0
        %v4796 = vmax.f32 %v4772, 0.0
        %v4797 = vmax.f32 %v4777, 0.0
        %v4798 = vmax.f32 %v4780, 0.0
        %v4799 = vadd.f32 %v3907, %v4783
        %v4800 = vadd.f32 %v3908, %v4784
        %v4801 = vadd.f32 %v3909, %v4785
        %v4802 = vadd.f32 %v3910, %v4786
        %v4803 = vadd.f32 %v3911, %v4787
        %v4804 = vadd.f32 %v3912, %v4788
        %v4805 = vadd.f32 %v3913, %v4789
        %v4806 = vadd.f32 %v3914, %v4790
        %v4807 = vadd.f32 %v3915, %v4791
        %v4808 = vadd.f32 %v3916, %v4792
        %v4809 = vadd.f32 %v3917, %v4793
        %v4810 = vadd.f32 %v3918, %v4794
        %v4811 = vadd.f32 %v3919, %v4795
        %v4812 = vadd.f32 %v3920, %v4796
        %v4813 = vadd.f32 %v3921, %v4797
        %v4814 = vadd.f32 %v3922, %v4798
        %4815 = vst [vmem:[#allocation2] sm:$0xff] %v4361
        %4816 = vst [vmem:[#allocation2 + $0x8] sm:$0xff] %v4362
        %4817 = vst [vmem:[#allocation2 + $0x10] sm:$0xff] %v4363
        %4818 = vst [vmem:[#allocation2 + $0x18] sm:$0xff] %v4364
        %4819 = vst [vmem:[#allocation2 + $0x20] sm:$0xff] %v4365
        %4820 = vst [vmem:[#allocation2 + $0x28] sm:$0xff] %v4366
        %4821 = vst [vmem:[#allocation2 + $0x30] sm:$0xff] %v4367
        %4822 = vst [vmem:[#allocation2 + $0x38] sm:$0xff] %v4368
        %4823 = vst [vmem:[#allocation2 + $0x40] sm:$0xff] %v4369
        %4824 = vst [vmem:[#allocation2 + $0x48] sm:$0xff] %v4370
        %4825 = vst [vmem:[#allocation2 + $0x50] sm:$0xff] %v4371
        %4826 = vst [vmem:[#allocation2 + $0x58] sm:$0xff] %v4372
        %4827 = vst [vmem:[#allocation2 + $0x60] sm:$0xff] %v4373
        %4828 = vst [vmem:[#allocation2 + $0x68] sm:$0xff] %v4374
        %4829 = vst [vmem:[#allocation2 + $0x70] sm:$0xff] %v4375
        %4830 = vst [vmem:[#allocation2 + $0x78] sm:$0xff] %v4376
        %4831 = vst [vmem:[#allocation3] sm:$0xff] %v4799
        %4832 = vst [vmem:[#allocation3 + $0x8] sm:$0xff] %v4800
        %4833 = vst [vmem:[#allocation3 + $0x10] sm:$0xff] %v4801
        %4834 = vst [vmem:[#allocation3 + $0x18] sm:$0xff] %v4802
        %4835 = vst [vmem:[#allocation3 + $0x20] sm:$0xff] %v4803
        %4836 = vst [vmem:[#allocation3 + $0x28] sm:$0xff] %v4804
        %4837 = vst [vmem:[#allocation3 + $0x30] sm:$0xff] %v4805
        %4838 = vst [vmem:[#allocation3 + $0x38] sm:$0xff] %v4806
        %4839 = vst [vmem:[#allocation3 + $0x40] sm:$0xff] %v4807
        %4840 = vst [vmem:[#allocation3 + $0x48] sm:$0xff] %v4808
        %4841 = vst [vmem:[#allocation3 + $0x50] sm:$0xff] %v4809
        %4842 = vst [vmem:[#allocation3 + $0x58] sm:$0xff] %v4810
        %4843 = vst [vmem:[#allocation3 + $0x60] sm:$0xff] %v4811
        %4844 = vst [vmem:[#allocation3 + $0x68] sm:$0xff] %v4812
        %4845 = vst [vmem:[#allocation3 + $0x70] sm:$0xff] %v4813
        %4846 = vst [vmem:[#allocation3 + $0x78] sm:$0xff] %v4814
        %p4847 = scmp.eq.s32.totalorder %s40, 1
        // Predicated region
        $region157: #{tpu_custom_call.1} parent=95 // pred_check
          %p4848 = pneg %p4847
        $region158: #{tpu_custom_call.1} parent=95 // pred_check_branch
          %4850 = sbr.rel (%p4848) target = $region160
        $region159: #{tpu_custom_call.1} parent=95 // pred_region
          %v4851 = vld [vmem:[#allocation2] sm:$0xff]
          %v4852 = vld [vmem:[#allocation2 + $0x8] sm:$0xff]
          %v4853 = vld [vmem:[#allocation2 + $0x10] sm:$0xff]
          %v4854 = vld [vmem:[#allocation2 + $0x18] sm:$0xff]
          %v4855 = vld [vmem:[#allocation2 + $0x20] sm:$0xff]
          %v4856 = vld [vmem:[#allocation2 + $0x28] sm:$0xff]
          %v4857 = vld [vmem:[#allocation2 + $0x30] sm:$0xff]
          %v4858 = vld [vmem:[#allocation2 + $0x38] sm:$0xff]
          %v4859 = vld [vmem:[#allocation2 + $0x40] sm:$0xff]
          %v4860 = vld [vmem:[#allocation2 + $0x48] sm:$0xff]
          %v4861 = vld [vmem:[#allocation2 + $0x50] sm:$0xff]
          %v4862 = vld [vmem:[#allocation2 + $0x58] sm:$0xff]
          %v4863 = vld [vmem:[#allocation2 + $0x60] sm:$0xff]
          %v4864 = vld [vmem:[#allocation2 + $0x68] sm:$0xff]
          %v4865 = vld [vmem:[#allocation2 + $0x70] sm:$0xff]
          %v4866 = vld [vmem:[#allocation2 + $0x78] sm:$0xff]
          %v4867 = vpack.c.bf16 %v4852, %v4851
          %v4868 = vpack.c.bf16 %v4854, %v4853
          %v4869 = vpack.c.bf16 %v4856, %v4855
          %v4870 = vpack.c.bf16 %v4858, %v4857
          %v4871 = vpack.c.bf16 %v4860, %v4859
          %v4872 = vpack.c.bf16 %v4862, %v4861
          %v4873 = vpack.c.bf16 %v4864, %v4863
          %v4874 = vpack.c.bf16 %v4866, %v4865
          %v4883 = vunpack.c.l.b16 %v4867
          %v4884 = vunpack.c.h.b16 %v4867
          %v4885 = vunpack.c.l.b16 %v4868
          %v4886 = vunpack.c.h.b16 %v4868
          %v4887 = vunpack.c.l.b16 %v4869
          %v4888 = vunpack.c.h.b16 %v4869
          %v4889 = vunpack.c.l.b16 %v4870
          %v4890 = vunpack.c.h.b16 %v4870
          %v4891 = vunpack.c.l.b16 %v4871
          %v4892 = vunpack.c.h.b16 %v4871
          %v4893 = vunpack.c.l.b16 %v4872
          %v4894 = vunpack.c.h.b16 %v4872
          %v4895 = vunpack.c.l.b16 %v4873
          %v4896 = vunpack.c.h.b16 %v4873
          %v4897 = vunpack.c.l.b16 %v4874
          %v4898 = vunpack.c.h.b16 %v4874
          %v4899 = vpack.c.b16 %v4883, %v4883
          %v4900 = vpack.c.b16 %v4884, %v4884
          %v4901 = vpack.c.b16 %v4885, %v4885
          %v4902 = vpack.c.b16 %v4886, %v4886
          %v4903 = vpack.c.b16 %v4887, %v4887
          %v4904 = vpack.c.b16 %v4888, %v4888
          %v4905 = vpack.c.b16 %v4889, %v4889
          %v4906 = vpack.c.b16 %v4890, %v4890
          %v4907 = vpack.c.b16 %v4891, %v4891
          %v4908 = vpack.c.b16 %v4892, %v4892
          %v4909 = vpack.c.b16 %v4893, %v4893
          %v4910 = vpack.c.b16 %v4894, %v4894
          %v4911 = vpack.c.b16 %v4895, %v4895
          %v4912 = vpack.c.b16 %v4896, %v4896
          %v4913 = vpack.c.b16 %v4897, %v4897
          %v4914 = vpack.c.b16 %v4898, %v4898
          %4931 = vst [vmem:[#allocation25] sm:$0xf] %v4899
          %4932 = vst [vmem:[#allocation25 + $0x4] sm:$0xf] %v4900
          %4933 = vst [vmem:[#allocation25 + $0x8] sm:$0xf] %v4901
          %4934 = vst [vmem:[#allocation25 + $0xc] sm:$0xf] %v4902
          %4935 = vst [vmem:[#allocation25 + $0x10] sm:$0xf] %v4903
          %4936 = vst [vmem:[#allocation25 + $0x14] sm:$0xf] %v4904
          %4937 = vst [vmem:[#allocation25 + $0x18] sm:$0xf] %v4905
          %4938 = vst [vmem:[#allocation25 + $0x1c] sm:$0xf] %v4906
          %4939 = vst [vmem:[#allocation25 + $0x20] sm:$0xf] %v4907
          %4940 = vst [vmem:[#allocation25 + $0x24] sm:$0xf] %v4908
          %4941 = vst [vmem:[#allocation25 + $0x28] sm:$0xf] %v4909
          %4942 = vst [vmem:[#allocation25 + $0x2c] sm:$0xf] %v4910
          %4943 = vst [vmem:[#allocation25 + $0x30] sm:$0xf] %v4911
          %4944 = vst [vmem:[#allocation25 + $0x34] sm:$0xf] %v4912
          %4945 = vst [vmem:[#allocation25 + $0x38] sm:$0xf] %v4913
          %4946 = vst [vmem:[#allocation25 + $0x3c] sm:$0xf] %v4914
          %v4947 = vld [vmem:[#allocation3] sm:$0xff]
          %v4948 = vld [vmem:[#allocation3 + $0x8] sm:$0xff]
          %v4949 = vld [vmem:[#allocation3 + $0x10] sm:$0xff]
          %v4950 = vld [vmem:[#allocation3 + $0x18] sm:$0xff]
          %v4951 = vld [vmem:[#allocation3 + $0x20] sm:$0xff]
          %v4952 = vld [vmem:[#allocation3 + $0x28] sm:$0xff]
          %v4953 = vld [vmem:[#allocation3 + $0x30] sm:$0xff]
          %v4954 = vld [vmem:[#allocation3 + $0x38] sm:$0xff]
          %v4955 = vld [vmem:[#allocation3 + $0x40] sm:$0xff]
          %v4956 = vld [vmem:[#allocation3 + $0x48] sm:$0xff]
          %v4957 = vld [vmem:[#allocation3 + $0x50] sm:$0xff]
          %v4958 = vld [vmem:[#allocation3 + $0x58] sm:$0xff]
          %v4959 = vld [vmem:[#allocation3 + $0x60] sm:$0xff]
          %v4960 = vld [vmem:[#allocation3 + $0x68] sm:$0xff]
          %v4961 = vld [vmem:[#allocation3 + $0x70] sm:$0xff]
          %v4962 = vld [vmem:[#allocation3 + $0x78] sm:$0xff]
          %v4963 = vpack.c.bf16 %v4948, %v4947
          %v4964 = vpack.c.bf16 %v4950, %v4949
          %v4965 = vpack.c.bf16 %v4952, %v4951
          %v4966 = vpack.c.bf16 %v4954, %v4953
          %v4967 = vpack.c.bf16 %v4956, %v4955
          %v4968 = vpack.c.bf16 %v4958, %v4957
          %v4969 = vpack.c.bf16 %v4960, %v4959
          %v4970 = vpack.c.bf16 %v4962, %v4961
          %v4979 = vunpack.c.l.b16 %v4963
          %v4980 = vunpack.c.h.b16 %v4963
          %v4981 = vunpack.c.l.b16 %v4964
          %v4982 = vunpack.c.h.b16 %v4964
          %v4983 = vunpack.c.l.b16 %v4965
          %v4984 = vunpack.c.h.b16 %v4965
          %v4985 = vunpack.c.l.b16 %v4966
          %v4986 = vunpack.c.h.b16 %v4966
          %v4987 = vunpack.c.l.b16 %v4967
          %v4988 = vunpack.c.h.b16 %v4967
          %v4989 = vunpack.c.l.b16 %v4968
          %v4990 = vunpack.c.h.b16 %v4968
          %v4991 = vunpack.c.l.b16 %v4969
          %v4992 = vunpack.c.h.b16 %v4969
          %v4993 = vunpack.c.l.b16 %v4970
          %v4994 = vunpack.c.h.b16 %v4970
          %v4995 = vpack.c.b16 %v4979, %v4979
          %v4996 = vpack.c.b16 %v4980, %v4980
          %v4997 = vpack.c.b16 %v4981, %v4981
          %v4998 = vpack.c.b16 %v4982, %v4982
          %v4999 = vpack.c.b16 %v4983, %v4983
          %v5000 = vpack.c.b16 %v4984, %v4984
          %v5001 = vpack.c.b16 %v4985, %v4985
          %v5002 = vpack.c.b16 %v4986, %v4986
          %v5003 = vpack.c.b16 %v4987, %v4987
          %v5004 = vpack.c.b16 %v4988, %v4988
          %v5005 = vpack.c.b16 %v4989, %v4989
          %v5006 = vpack.c.b16 %v4990, %v4990
          %v5007 = vpack.c.b16 %v4991, %v4991
          %v5008 = vpack.c.b16 %v4992, %v4992
          %v5009 = vpack.c.b16 %v4993, %v4993
          %v5010 = vpack.c.b16 %v4994, %v4994
          %5027 = vst [vmem:[#allocation26] sm:$0xf] %v4995
          %5028 = vst [vmem:[#allocation26 + $0x4] sm:$0xf] %v4996
          %5029 = vst [vmem:[#allocation26 + $0x8] sm:$0xf] %v4997
          %5030 = vst [vmem:[#allocation26 + $0xc] sm:$0xf] %v4998
          %5031 = vst [vmem:[#allocation26 + $0x10] sm:$0xf] %v4999
          %5032 = vst [vmem:[#allocation26 + $0x14] sm:$0xf] %v5000
          %5033 = vst [vmem:[#allocation26 + $0x18] sm:$0xf] %v5001
          %5034 = vst [vmem:[#allocation26 + $0x1c] sm:$0xf] %v5002
          %5035 = vst [vmem:[#allocation26 + $0x20] sm:$0xf] %v5003
          %5036 = vst [vmem:[#allocation26 + $0x24] sm:$0xf] %v5004
          %5037 = vst [vmem:[#allocation26 + $0x28] sm:$0xf] %v5005
          %5038 = vst [vmem:[#allocation26 + $0x2c] sm:$0xf] %v5006
          %5039 = vst [vmem:[#allocation26 + $0x30] sm:$0xf] %v5007
          %5040 = vst [vmem:[#allocation26 + $0x34] sm:$0xf] %v5008
          %5041 = vst [vmem:[#allocation26 + $0x38] sm:$0xf] %v5009
          %5042 = vst [vmem:[#allocation26 + $0x3c] sm:$0xf] %v5010
        $region160: #{tpu_custom_call.1} parent=95 // pred_fallthru
          _
        // Predicated region
        $region161: #{tpu_custom_call.1} parent=95 // pred_check
          %p5043 = pneg %p482
        $region162: #{tpu_custom_call.1} parent=95 // pred_check_branch
          %5045 = sbr.rel (%p5043) target = $region164
        $region163: #{tpu_custom_call.1} parent=95 // pred_region
          %s5047 = ssub.s32 1024, 1024
          %5048 = vsyncadd [#allocation6], %s5047
          %s5049 = sshll.u32 [#allocation25], 4
          %s5050 = int_to_ptr.vmem [resolvable:$true] %s5049
          %5055 = dma.vmem_to_hbm [thread:$0]  %s5050, 1024, %s19, [#allocation6], 64, 64, 4
        $region164: #{tpu_custom_call.1} parent=95 // pred_fallthru
          _
        // Predicated region
        $region165: #{tpu_custom_call.1} parent=95 // pred_check
          %p5056 = pneg %p503
        $region166: #{tpu_custom_call.1} parent=95 // pred_check_branch
          %5058 = sbr.rel (%p5056) target = $region168
        $region167: #{tpu_custom_call.1} parent=95 // pred_region
          %s5060 = ssub.s32 1024, 1024
          %5061 = vsyncadd [#allocation27], %s5060
          %s5062 = sshll.u32 [#allocation26], 4
          %s5063 = int_to_ptr.vmem [resolvable:$true] %s5062
          %5068 = dma.vmem_to_hbm [thread:$0]  %s5063, 1024, %s20, [#allocation27], 64, 64, 4
        $region168: #{tpu_custom_call.1} parent=95 // pred_fallthru
          _
        // Predicated region
        $region169: #{tpu_custom_call.1} parent=95 // pred_check
          %p5069 = pneg %p482
        $region170: #{tpu_custom_call.1} parent=95 // pred_check_branch
          %5071 = sbr.rel (%p5069) target = $region172
        $region171: #{tpu_custom_call.1} parent=95 // pred_region
          %5072 = dma.done [#allocation6], 1024
        $region172: #{tpu_custom_call.1} parent=95 // pred_fallthru
          _
        // Predicated region
        $region173: #{tpu_custom_call.1} parent=95 // pred_check
          %p5073 = pneg %p503
        $region174: #{tpu_custom_call.1} parent=95 // pred_check_branch
          %5075 = sbr.rel (%p5073) target = $region176
        $region175: #{tpu_custom_call.1} parent=95 // pred_region
          %5076 = dma.done [#allocation27], 1024
        $region176: #{tpu_custom_call.1} parent=95 // pred_fallthru
          _
      $region96: #{tpu_custom_call.1} parent=5 // pred_fallthru
        _
      %p5077 = scmp.le.s32.totalorder 2, %s35
      // Predicated region
      $region177: #{tpu_custom_call.1} parent=5 // pred_check
        %p5078 = pneg %p5077
      $region178: #{tpu_custom_call.1} parent=5 // pred_check_branch
        %5080 = sbr.rel (%p5078) target = $region180
      $region179: #{tpu_custom_call.1} parent=5 // pred_region
        %s5081 = ssub.s32 %s35, 2
      $region180: #{tpu_custom_call.1} parent=5 // pred_fallthru
        _
    $region6: #{tpu_custom_call.1} parent=1 // loop_footer
      %s39 = sadd.s32 1, %s35
    $region7: #{tpu_custom_call.1} parent=1 // loop_footer_branch
      %34 = sbr.rel target = $region3
    $region8: #{tpu_custom_call.1} parent=1 // loop_exit
      _
    %5082 = vsyncpa [#allocation5], 1
    %s5083 = scalar_lea.sflag [#allocation5], 1
    %5084 = vsyncpa %s5083, 1
    %5085 = vsyncpa [#allocation8], 1
    %5086 = vsyncpa [#allocation11], 1
    %5087 = vsyncpa [#allocation14], 1
    %5088 = vsyncpa [#allocation17], 1
    %5089 = vsyncpa [#allocation20], 1
    %5090 = vsyncpa [#allocation6], 1
    %s5091 = scalar_lea.sflag [#allocation6], 1
    %5092 = vsyncpa %s5091, 1
    %5093 = vsyncpa [#allocation27], 1

</llo_original>
